<compile_context>
chip_gen: v7x
topology: tpu7x:2x2x1
jax: 0.10.0
libtpu: 0.0.40
codegen_flags: <defaults>
</compile_context>

<pallas_src>
import functools
import math

import jax
import jax.numpy as jnp
from jax import lax
from jax.experimental import pallas as pl
from jax.experimental.pallas import tpu as pltpu


# ----------------------------- in-kernel math helpers -----------------------------

def _erf(x):
    # Numerical-Recipes erfc approximation, |err| < 1.2e-7 -> float32-exact GELU.
    a = jnp.abs(x)
    t = 1.0 / (1.0 + 0.5 * a)
    poly = -1.26551223 + t * (1.00002368 + t * (0.37409196 + t * (0.09678418 + t * (
        -0.18628806 + t * (0.27886807 + t * (-1.13520398 + t * (1.48851587 + t * (
            -0.82215223 + t * 0.17087277))))))))
    erfc_a = t * jnp.exp(-a * a + poly)
    return jnp.where(x >= 0.0, 1.0 - erfc_a, erfc_a - 1.0)


def _gelu(x):
    # exact (erf-based) GELU, matching torch F.gelu / nn.GELU defaults
    return 0.5 * x * (1.0 + _erf(x * (1.0 / math.sqrt(2.0))))


def _sigmoid(x):
    return 0.5 * (jnp.tanh(0.5 * x) + 1.0)


# --------------------------------- tiling helpers ----------------------------------

def _pick_tile(dim, target, unit, prefer_split=False):
    """Largest divisor of `dim` that is <= target and is either a multiple of
    `unit` (sublane/lane alignment) or the full dim; optionally prefer a tile
    that gives >= 2 blocks (megacore sharding)."""
    divs = [d for d in range(1, dim + 1) if dim % d == 0]
    ok = [d for d in divs if d <= target and (d % unit == 0 or d == dim)]
    if not ok:
        return dim
    if prefer_split:
        split = [d for d in ok if dim // d >= 2 and d % unit == 0]
        if split:
            return max(split)
    return max(ok)


def _batch_block(n):
    """Largest divisor of n giving >= 2 blocks (for 2-TensorCore chips), else n."""
    for d in range(n // 2, 0, -1):
        if n % d == 0:
            return d
    return n


# ------------------------------ tiled fused linear ---------------------------------

def _linear_kernel(x_ref, w_ref, b_ref, o_ref, acc_ref, *, apply_gelu):
    @pl.when(pl.program_id(2) == 0)
    def _():
        acc_ref[...] = jnp.zeros_like(acc_ref)

    acc_ref[...] += jnp.dot(x_ref[...], w_ref[...],
                            preferred_element_type=jnp.float32)

    @pl.when(pl.program_id(2) == pl.num_programs(2) - 1)
    def _():
        acc = acc_ref[...] + b_ref[...]
        if apply_gelu:
            acc = _gelu(acc)
        o_ref[...] = acc.astype(o_ref.dtype)


def pallas_linear(x, w, b=None, apply_gelu=False,
                  tm_target=256, tn_target=256, tk_target=512):
    """o = gelu?(x @ w + b); x:[M,K], w:[K,N], b:[N] or None.  Tiled + pipelined."""
    M, K = x.shape
    K2, N = w.shape
    assert K == K2
    if b is None:
        b = jnp.zeros((N,), jnp.float32)
    b2 = jnp.asarray(b, jnp.float32).reshape(1, N)

    tm = _pick_tile(M, tm_target, 8, prefer_split=True)
    tn = _pick_tile(N, tn_target, 128)
    tk = _pick_tile(K, tk_target, 128)
    grid = (M // tm, N // tn, K // tk)

    return pl.pallas_call(
        functools.partial(_linear_kernel, apply_gelu=apply_gelu),
        out_shape=jax.ShapeDtypeStruct((M, N), jnp.float32),
        grid=grid,
        in_specs=[
            pl.BlockSpec((tm, tk), lambda i, j, k: (i, k)),
            pl.BlockSpec((tk, tn), lambda i, j, k: (k, j)),
            pl.BlockSpec((1, tn), lambda i, j, k: (0, j)),
        ],
        out_specs=pl.BlockSpec((tm, tn), lambda i, j, k: (i, j)),
        scratch_shapes=[pltpu.VMEM((tm, tn), jnp.float32)],
        compiler_params=pltpu.CompilerParams(
            dimension_semantics=("parallel", "parallel", "arbitrary")),
    )(x.astype(jnp.float32), w.astype(jnp.float32), b2)


# ------------- spectral layer stack + folded (isht -> out_proj -> pool) -------------

def _spectral_stack_kernel(coef_ref, wr_ref, bh_ref, bt_ref, lw_ref, lb_ref,
                           s2gh_ref, s2gt_ref, wout_ref, bout_ref, o_ref, s_ref):
    layer = pl.program_id(1)
    modes, bb, H = s_ref.shape

    @pl.when(layer == 0)
    def _():
        s_ref[...] = coef_ref[0]                              # [modes, bb, H]

    wr = wr_ref[0]                                            # [modes, H, H]  wr[m,i,j]
    lin_w = lw_ref[0]                                         # [H, H]   (out, in)
    lin_b = lb_ref[0]                                         # [1, H]

    s = s_ref[...]                                            # [modes, bb, H]
    # spectral channel mixing on the MXU (batched over modes):
    #   y[m, b, j] = sum_i s[m, b, i] * wr[m, i, j]
    y = lax.dot_general(s, wr, (((2,), (1,)), ((0,), (0,))),
                        preferred_element_type=jnp.float32)
    y = y + bh_ref[0]                                         # + bias[:, :modes]  ([modes,1,H])
    # per-coefficient Linear(hidden, hidden) + GELU as one flat matmul
    z = lax.dot_general(y.reshape(modes * bb, H), lin_w,
                        (((1,), (1,)), ((), ())),
                        preferred_element_type=jnp.float32) + lin_b
    s_new = _gelu(z).reshape(modes, bb, H)
    s_ref[...] = s_new

    # Last layer: folded epilogue = mean-pool( output_proj( isht(coeffs) ) ).
    @pl.when(layer == pl.num_programs(1) - 1)
    def _():
        # head (k < modes) contribution of mean_S(isht(coeffs))
        mh = jnp.sum(s_new * s2gh_ref[...], axis=0)           # [bb, H]
        # tail (k >= modes) columns are batch-independent: gelu(lin_w@bias_tail + lin_b)
        tail = _gelu(lax.dot_general(bt_ref[0], lin_w, (((1,), (1,)), ((), ())),
                                     preferred_element_type=jnp.float32) + lin_b)  # [Kc-m, H]
        mt = jnp.dot(s2gt_ref[...], tail,
                     preferred_element_type=jnp.float32)      # [1, H]
        m_tot = mh + mt                                       # [bb, H]
        pooled = lax.dot_general(m_tot, wout_ref[...], (((1,), (1,)), ((), ())),
                                 preferred_element_type=jnp.float32) + bout_ref[...]
        o_ref[0] = pooled.astype(o_ref.dtype)


def spectral_stack_pool(coeffs, wr_stack, bias_head, bias_tail_t, lin_w_stack,
                        lin_b_stack, s2g_head, s2g_tail, w_out, b_out):
    """coeffs: [nb, modes, bb, H]  ->  pooled SFNO output [nb, bb, H]."""
    nb, modes, bb, H = coeffs.shape
    L = wr_stack.shape[0]
    Kt = bias_tail_t.shape[1]                                 # Kc - modes
    return pl.pallas_call(
        _spectral_stack_kernel,
        out_shape=jax.ShapeDtypeStruct((nb, bb, H), jnp.float32),
        grid=(nb, L),
        in_specs=[
            pl.BlockSpec((1, modes, bb, H), lambda i, l: (i, 0, 0, 0)),
            pl.BlockSpec((1, modes, H, H), lambda i, l: (l, 0, 0, 0)),
            pl.BlockSpec((1, modes, 1, H), lambda i, l: (l, 0, 0, 0)),
            pl.BlockSpec((1, Kt, H), lambda i, l: (l, 0, 0)),
            pl.BlockSpec((1, H, H), lambda i, l: (l, 0, 0)),
            pl.BlockSpec((1, 1, H), lambda i, l: (l, 0, 0)),
            pl.BlockSpec((modes, 1, 1), lambda i, l: (0, 0, 0)),
            pl.BlockSpec((1, Kt), lambda i, l: (0, 0)),
            pl.BlockSpec((H, H), lambda i, l: (0, 0)),
            pl.BlockSpec((1, H), lambda i, l: (0, 0)),
        ],
        out_specs=pl.BlockSpec((1, bb, H), lambda i, l: (i, 0, 0)),
        scratch_shapes=[pltpu.VMEM((modes, bb, H), jnp.float32)],
        compiler_params=pltpu.CompilerParams(
            dimension_semantics=("parallel", "arbitrary")),
    )(coeffs, wr_stack, bias_head, bias_tail_t, lin_w_stack, lin_b_stack,
      s2g_head, s2g_tail, w_out, b_out)


# -------------------------- fused LSTM recurrence + head ---------------------------

def _lstm_head_kernel(seq_ref, wih_ref, whh_ref, b_ref, w1_ref, b1_ref,
                      w2_ref, b2_ref, o_ref):
    T = seq_ref.shape[1]
    bb = seq_ref.shape[2]
    H = seq_ref.shape[3]
    wih = wih_ref[...]                                        # [H, 4H]
    whh = whh_ref[...]                                        # [H, 4H]
    bias = b_ref[...]                                         # [1, 4H]

    def step(t, carry):
        h, c = carry
        xt = seq_ref[0, t]                                    # [bb, H]
        g = (jnp.dot(xt, wih, preferred_element_type=jnp.float32)
             + jnp.dot(h, whh, preferred_element_type=jnp.float32) + bias)
        i_g = _sigmoid(g[:, 0 * H:1 * H])
        f_g = _sigmoid(g[:, 1 * H:2 * H])
        g_g = jnp.tanh(g[:, 2 * H:3 * H])
        o_g = _sigmoid(g[:, 3 * H:4 * H])
        c = f_g * c + i_g * g_g
        h = o_g * jnp.tanh(c)
        return h, c

    h0 = jnp.zeros((bb, H), jnp.float32)
    c0 = jnp.zeros((bb, H), jnp.float32)
    h, _ = lax.fori_loop(0, T, step, (h0, c0), unroll=True)
    # forecast head: Linear(H, 2H) -> GELU -> Linear(2H, F*Cout)
    hmid = _gelu(jnp.dot(h, w1_ref[...], preferred_element_type=jnp.float32)
                 + b1_ref[...])
    out = jnp.dot(hmid, w2_ref[...], preferred_element_type=jnp.float32) + b2_ref[...]
    o_ref[0] = out.astype(o_ref.dtype)


def lstm_head(pooled_seq, lstm_p, head_p):
    """pooled_seq: [nb, T, bb, H] -> forecast logits [nb, bb, F*Cout]."""
    nb, T, bb, H = pooled_seq.shape
    nf = head_p['w2'].shape[1]
    return pl.pallas_call(
        _lstm_head_kernel,
        out_shape=jax.ShapeDtypeStruct((nb, bb, nf), jnp.float32),
        grid=(nb,),
        in_specs=[
            pl.BlockSpec((1, T, bb, H), lambda i: (i, 0, 0, 0)),
            pl.BlockSpec((H, 4 * H), lambda i: (0, 0)),
            pl.BlockSpec((H, 4 * H), lambda i: (0, 0)),
            pl.BlockSpec((1, 4 * H), lambda i: (0, 0)),
            pl.BlockSpec((H, 2 * H), lambda i: (0, 0)),
            pl.BlockSpec((1, 2 * H), lambda i: (0, 0)),
            pl.BlockSpec((2 * H, nf), lambda i: (0, 0)),
            pl.BlockSpec((1, nf), lambda i: (0, 0)),
        ],
        out_specs=pl.BlockSpec((1, bb, nf), lambda i: (i, 0, 0)),
        compiler_params=pltpu.CompilerParams(dimension_semantics=("parallel",)),
    )(pooled_seq, lstm_p['wih'], lstm_p['whh'], lstm_p['b'],
      head_p['w1'], head_p['b1'], head_p['w2'], head_p['b2'])


# -------------------------------- model forward ------------------------------------

def temporal_sfno_forward(params, x, *, forecast_steps, out_channels):
    """x: [B, history_steps, in_channels, nlat, nlon] -> [B, F, out_channels, nlat, nlon]."""
    B, T, Cin, nlat, nlon = x.shape
    sfno = params['sfno']
    H = sfno['w_in'].shape[1]
    modes = sfno['wr_stack'].shape[1]
    S = nlat * nlon
    assert H == nlon, "reference expand() requires hidden_dim == nlon"

    # ---- time embedding; reproduce the reference's (buggy) expand: the embedding
    #      axis lands on the longitude axis, broadcast over channels & latitude.
    tvals = (jnp.arange(T, dtype=jnp.float32) / T)[:, None]                    # [T,1]
    emb = tvals * params['time_emb_w'][None, :, 0] + params['time_emb_b'][None, :]  # [T,H]
    time_emb = jnp.broadcast_to(emb[None, :, None, None, :], (B, T, H, nlat, nlon))
    x_aug = jnp.concatenate([x.astype(jnp.float32), time_emb], axis=2)         # [B,T,Cin+H,lat,lon]
    Caug = Cin + H

    # ---- SFNO input projection over the channel axis, all timesteps at once
    xr = x_aug.transpose(0, 1, 3, 4, 2).reshape(B * T * S, Caug)
    hgrid = pallas_linear(xr, sfno['w_in'], sfno['b_in'])                      # [B*T*S, H]

    # ---- "RealSHT": grid -> spherical coefficients.  The spectral layers only
    #      ever read the first `modes` coefficients, so only that slab of the
    #      basis is applied (the discarded tail never affects the output).
    hrows = (hgrid.reshape(B, T, nlat, nlon, H)
                  .transpose(0, 1, 4, 2, 3).reshape(B * T * H, S))
    coeffs = pallas_linear(hrows, sfno['g2s_head_t'])                          # [B*T*H, modes]

    # ---- fused spectral layer stack with folded isht+output_proj+avg_pool tail
    TB = B * T
    bb = _batch_block(TB)
    nb = TB // bb
    coeffs4 = coeffs.reshape(nb, bb, H, modes).transpose(0, 3, 1, 2)           # [nb,modes,bb,H]
    pooled = spectral_stack_pool(
        coeffs4, sfno['wr_stack'], sfno['bias_head'], sfno['bias_tail_t'],
        sfno['lin_w_stack'], sfno['lin_b_stack'], sfno['s2g_head'],
        sfno['s2g_tail'], sfno['w_out'], sfno['b_out'])                        # [nb,bb,H]
    pooled = pooled.reshape(B, T, H)

    # ---- fused single-layer batch_first LSTM (h0=c0=0) + forecast head
    bl = _batch_block(B)
    nbl = B // bl
    seq = pooled.reshape(nbl, bl, T, H).transpose(0, 2, 1, 3)                  # [nbl,T,bl,H]
    flat = lstm_head(seq, params['lstm'], params['head']).reshape(B, -1)       # [B, F*Cout]

    forecast = flat.reshape(B, forecast_steps, out_channels)
    return jnp.broadcast_to(forecast[:, :, :, None, None],
                            (B, forecast_steps, out_channels, nlat, nlon))


# ------------------------------- parameter setup ------------------------------------

def init_params(key, *, in_channels, hidden_dim, out_channels, lmax, nlat, nlon,
                num_layers, forecast_steps):
    H = hidden_dim
    Kc = (lmax + 1) ** 2
    modes = lmax + 1
    assert Kc > modes and num_layers >= 1
    S = nlat * nlon
    Caug = in_channels + H
    nf = out_channels * forecast_steps
    keys = iter(jax.random.split(key, 64))

    def nrm(shape, scale):
        return (scale * jax.random.normal(next(keys), shape)).astype(jnp.float32)

    # spectral layers (torch layouts), then rearranged into kernel-ready stacks
    xav = math.sqrt(2.0 / (H + H))                                  # xavier_normal_
    wr = nrm((num_layers, H, H, modes), xav)                        # weights_real
    wi = nrm((num_layers, H, H, modes), xav)                        # allocated, unused (TODO)
    bias = jnp.zeros((num_layers, H, Kc), jnp.float32)              # nn.init.zeros_
    lin_w = nrm((num_layers, H, H), 1.0 / math.sqrt(H))
    lin_b = nrm((num_layers, H), 1.0 / math.sqrt(H))

    wr_stack = jnp.transpose(wr, (0, 3, 1, 2))                      # [L,modes,H,H] (m,i,j)
    bias_head = jnp.transpose(bias[:, :, :modes], (0, 2, 1))[:, :, None, :]   # [L,modes,1,H]
    bias_tail_t = jnp.transpose(bias[:, :, modes:], (0, 2, 1))      # [L,Kc-m,H]
    lin_b_stack = lin_b[:, None, :]                                 # [L,1,H]

    # fixed "SHT" / inverse basis (deterministic, non-learned).  Only the first
    # `modes` rows of g2s and the spatial mean of s2g are needed downstream.
    g2s = nrm((Kc, S), 1.0 / math.sqrt(S))
    s2g = nrm((S, Kc), 1.0 / math.sqrt(Kc))
    s2g_mean = jnp.mean(s2g, axis=0)                                # [Kc]

    std_lstm = 1.0 / math.sqrt(H)
    w_ih = nrm((4 * H, H), std_lstm)
    w_hh = nrm((4 * H, H), std_lstm)
    b_ih = nrm((4 * H,), std_lstm)
    b_hh = nrm((4 * H,), std_lstm)

    params = {
        'time_emb_w': nrm((H, 1), 1.0),
        'time_emb_b': nrm((H,), 0.5),
        'sfno': {
            'w_in': nrm((Caug, H), 1.0 / math.sqrt(Caug)),
            'b_in': nrm((H,), 1.0 / math.sqrt(Caug)),
            'g2s_head_t': jnp.asarray(g2s[:modes, :].T),            # [S, modes]
            's2g_head': s2g_mean[:modes].reshape(modes, 1, 1),
            's2g_tail': s2g_mean[modes:].reshape(1, Kc - modes),
            'wr_stack': wr_stack,
            'wi_stack': wi,                                         # unused (see TODO)
            'bias_head': bias_head,
            'bias_tail_t': bias_tail_t,
            'lin_w_stack': lin_w,
            'lin_b_stack': lin_b_stack,
            'w_out': nrm((H, H), 1.0 / math.sqrt(H)),               # sfno out_channels == hidden
            'b_out': nrm((H,), 1.0 / math.sqrt(H)).reshape(1, H),
        },
        'lstm': {
            'wih': w_ih.T,                                          # [H, 4H] gates i,f,g,o
            'whh': w_hh.T,                                          # [H, 4H]
            'b': (b_ih + b_hh).reshape(1, 4 * H),
        },
        'head': {
            'w1': nrm((2 * H, H), 1.0 / math.sqrt(H)).T,            # [H, 2H]
            'b1': nrm((2 * H,), 1.0 / math.sqrt(H)).reshape(1, 2 * H),
            'w2': nrm((nf, 2 * H), 1.0 / math.sqrt(2 * H)).T,       # [2H, nf]
            'b2': nrm((nf,), 1.0 / math.sqrt(2 * H)).reshape(1, nf),
        },
    }
    return params


# -------------------------------------- main ----------------------------------------

if __name__ == "__main__":
    B = 2
    history_steps = 3
    in_channels = 4
    hidden_dim = 8          # must equal nlon (reference expand() semantics)
    nlat, nlon = 8, 8
    lmax = 3                # num_coeffs = 16, modes = 4
    num_layers = 2
    out_channels = 3
    forecast_steps = 2

    params = init_params(jax.random.PRNGKey(42), in_channels=in_channels,
                         hidden_dim=hidden_dim, out_channels=out_channels,
                         lmax=lmax, nlat=nlat, nlon=nlon, num_layers=num_layers,
                         forecast_steps=forecast_steps)

    x = jax.random.normal(jax.random.PRNGKey(0),
                          (B, history_steps, in_channels, nlat, nlon), jnp.float32)

    fwd = jax.jit(functools.partial(temporal_sfno_forward,
                                    forecast_steps=forecast_steps,
                                    out_channels=out_channels))
    y = fwd(params, x)
    y = jax.block_until_ready(y)

    assert y.shape == (B, forecast_steps, out_channels, nlat, nlon), y.shape
    assert bool(jnp.all(jnp.isfinite(y)))
    print("KERNEL_OK")
</pallas_src>

<mosaic_0001>
module attributes {stable_mosaic.version = 11 : i64} {
  func.func @_linear_kernel(%arg0: i32, %arg1: i32, %arg2: i32, %arg3: memref<192x12xf32, #tpu.memory_space<vmem>>, %arg4: memref<12x8xf32, #tpu.memory_space<vmem>>, %arg5: memref<1x8xf32, #tpu.memory_space<vmem>>, %arg6: memref<192x8xf32, #tpu.memory_space<vmem>>, %arg7: memref<192x8xf32, #tpu.memory_space<vmem>>) attributes {dimension_semantics = [#tpu.dimension_semantics<parallel>, #tpu.dimension_semantics<parallel>, #tpu.dimension_semantics<arbitrary>], iteration_bounds = array<i64: 2, 1, 1>, scalar_prefetch = 0 : i64, scratch_operands = 1 : i64, tpu.core_type = #tpu.core_type<tc>, window_params = [{transform_indices = @transform_0, window_bounds = array<i64: 192, 12>}, {transform_indices = @transform_1, window_bounds = array<i64: 12, 8>}, {transform_indices = @transform_2, window_bounds = array<i64: 1, 8>}, {transform_indices = @transform_3, window_bounds = array<i64: 192, 8>}]} {
    %c0_i32 = arith.constant 0 : i32
    %0 = arith.cmpi eq, %arg2, %c0_i32 : i32
    %1 = arith.extui %0 : i1 to i32
    %c0_i32_0 = arith.constant 0 : i32
    %2 = arith.cmpi ne, %1, %c0_i32_0 : i32
    scf.if %2 {
      %cst_10 = arith.constant 0.000000e+00 : f32
      %12 = vector.broadcast %cst_10 : f32 to vector<192x8xf32>
      %c0_11 = arith.constant 0 : index
      %c0_12 = arith.constant 0 : index
      %13 = vector.load %arg7[%c0_11, %c0_12] : memref<192x8xf32, #tpu.memory_space<vmem>>, vector<192x8xf32>
      tpu.vector_store %arg7[%c0_11, %c0_12], %12 {strides = array<i32>} : memref<192x8xf32, #tpu.memory_space<vmem>>, vector<192x8xf32>,
    } else {
    }
    %c0 = arith.constant 0 : index
    %c0_1 = arith.constant 0 : index
    %3 = vector.load %arg7[%c0, %c0_1] : memref<192x8xf32, #tpu.memory_space<vmem>>, vector<192x8xf32>
    %c0_2 = arith.constant 0 : index
    %c0_3 = arith.constant 0 : index
    %4 = vector.load %arg3[%c0_2, %c0_3] : memref<192x12xf32, #tpu.memory_space<vmem>>, vector<192x12xf32>
    %c0_4 = arith.constant 0 : index
    %c0_5 = arith.constant 0 : index
    %5 = vector.load %arg4[%c0_4, %c0_5] : memref<12x8xf32, #tpu.memory_space<vmem>>, vector<12x8xf32>
    %cst = arith.constant dense<0.000000e+00> : vector<192x8xf32>
    %6 = tpu.matmul %4, %5, %cst {dimension_numbers = #tpu.dot_dimension_numbers<[1], [0], [0], [1], [0, 0, 1, 1], [], []>} : vector<192x12xf32>, vector<12x8xf32>, vector<192x8xf32> -> vector<192x8xf32>
    %7 = arith.addf %3, %6 : vector<192x8xf32>
    %c0_6 = arith.constant 0 : index
    %c0_7 = arith.constant 0 : index
    %8 = vector.load %arg7[%c0_6, %c0_7] : memref<192x8xf32, #tpu.memory_space<vmem>>, vector<192x8xf32>
    tpu.vector_store %arg7[%c0_6, %c0_7], %7 {strides = array<i32>} : memref<192x8xf32, #tpu.memory_space<vmem>>, vector<192x8xf32>,
    %c0_i32_8 = arith.constant 0 : i32
    %9 = arith.cmpi eq, %arg2, %c0_i32_8 : i32
    %10 = arith.extui %9 : i1 to i32
    %c0_i32_9 = arith.constant 0 : i32
    %11 = arith.cmpi ne, %10, %c0_i32_9 : i32
    scf.if %11 {
      %c0_10 = arith.constant 0 : index
      %c0_11 = arith.constant 0 : index
      %12 = vector.load %arg7[%c0_10, %c0_11] : memref<192x8xf32, #tpu.memory_space<vmem>>, vector<192x8xf32>
      %c0_12 = arith.constant 0 : index
      %c0_13 = arith.constant 0 : index
      %13 = vector.load %arg5[%c0_12, %c0_13] : memref<1x8xf32, #tpu.memory_space<vmem>>, vector<1x8xf32>
      %14 = vector.broadcast %13 : vector<1x8xf32> to vector<192x8xf32>
      %15 = arith.addf %12, %14 : vector<192x8xf32>
      %c0_14 = arith.constant 0 : index
      %c0_15 = arith.constant 0 : index
      %16 = vector.load %arg6[%c0_14, %c0_15] : memref<192x8xf32, #tpu.memory_space<vmem>>, vector<192x8xf32>
      tpu.vector_store %arg6[%c0_14, %c0_15], %15 {strides = array<i32>} : memref<192x8xf32, #tpu.memory_space<vmem>>, vector<192x8xf32>,
    } else {
    }
    return
  }
  func.func @transform_0(%arg0: i32, %arg1: i32, %arg2: i32) -> (i32, i32) {
    %c0_i32 = arith.constant 0 : i32
    return %arg0, %arg2 : i32, i32
  }
  func.func @transform_1(%arg0: i32, %arg1: i32, %arg2: i32) -> (i32, i32) {
    %c0_i32 = arith.constant 0 : i32
    return %arg2, %arg1 : i32, i32
  }
  func.func @transform_2(%arg0: i32, %arg1: i32, %arg2: i32) -> (i32, i32) {
    %c0_i32 = arith.constant 0 : i32
    %c0_i32_0 = arith.constant 0 : i32
    return %c0_i32, %arg1 : i32, i32
  }
  func.func @transform_3(%arg0: i32, %arg1: i32, %arg2: i32) -> (i32, i32) {
    %c0_i32 = arith.constant 0 : i32
    return %arg0, %arg1 : i32, i32
  }
}

module attributes {stable_mosaic.version = 11 : i64} {
  func.func @_linear_kernel(%arg0: i32, %arg1: i32, %arg2: i32, %arg3: memref<24x64xf32, #tpu.memory_space<vmem>>, %arg4: memref<64x4xf32, #tpu.memory_space<vmem>>, %arg5: memref<1x4xf32, #tpu.memory_space<vmem>>, %arg6: memref<24x4xf32, #tpu.memory_space<vmem>>, %arg7: memref<24x4xf32, #tpu.memory_space<vmem>>) attributes {dimension_semantics = [#tpu.dimension_semantics<parallel>, #tpu.dimension_semantics<parallel>, #tpu.dimension_semantics<arbitrary>], iteration_bounds = array<i64: 2, 1, 1>, scalar_prefetch = 0 : i64, scratch_operands = 1 : i64, tpu.core_type = #tpu.core_type<tc>, window_params = [{transform_indices = @transform_0, window_bounds = array<i64: 24, 64>}, {transform_indices = @transform_1, window_bounds = array<i64: 64, 4>}, {transform_indices = @transform_2, window_bounds = array<i64: 1, 4>}, {transform_indices = @transform_3, window_bounds = array<i64: 24, 4>}]} {
    %c0_i32 = arith.constant 0 : i32
    %0 = arith.cmpi eq, %arg2, %c0_i32 : i32
    %1 = arith.extui %0 : i1 to i32
    %c0_i32_0 = arith.constant 0 : i32
    %2 = arith.cmpi ne, %1, %c0_i32_0 : i32
    scf.if %2 {
      %cst_10 = arith.constant 0.000000e+00 : f32
      %12 = vector.broadcast %cst_10 : f32 to vector<24x4xf32>
      %c0_11 = arith.constant 0 : index
      %c0_12 = arith.constant 0 : index
      %13 = vector.load %arg7[%c0_11, %c0_12] : memref<24x4xf32, #tpu.memory_space<vmem>>, vector<24x4xf32>
      tpu.vector_store %arg7[%c0_11, %c0_12], %12 {strides = array<i32>} : memref<24x4xf32, #tpu.memory_space<vmem>>, vector<24x4xf32>,
    } else {
    }
    %c0 = arith.constant 0 : index
    %c0_1 = arith.constant 0 : index
    %3 = vector.load %arg7[%c0, %c0_1] : memref<24x4xf32, #tpu.memory_space<vmem>>, vector<24x4xf32>
    %c0_2 = arith.constant 0 : index
    %c0_3 = arith.constant 0 : index
    %4 = vector.load %arg3[%c0_2, %c0_3] : memref<24x64xf32, #tpu.memory_space<vmem>>, vector<24x64xf32>
    %c0_4 = arith.constant 0 : index
    %c0_5 = arith.constant 0 : index
    %5 = vector.load %arg4[%c0_4, %c0_5] : memref<64x4xf32, #tpu.memory_space<vmem>>, vector<64x4xf32>
    %cst = arith.constant dense<0.000000e+00> : vector<24x4xf32>
    %6 = tpu.matmul %4, %5, %cst {dimension_numbers = #tpu.dot_dimension_numbers<[1], [0], [0], [1], [0, 0, 1, 1], [], []>} : vector<24x64xf32>, vector<64x4xf32>, vector<24x4xf32> -> vector<24x4xf32>
    %7 = arith.addf %3, %6 : vector<24x4xf32>
    %c0_6 = arith.constant 0 : index
    %c0_7 = arith.constant 0 : index
    %8 = vector.load %arg7[%c0_6, %c0_7] : memref<24x4xf32, #tpu.memory_space<vmem>>, vector<24x4xf32>
    tpu.vector_store %arg7[%c0_6, %c0_7], %7 {strides = array<i32>} : memref<24x4xf32, #tpu.memory_space<vmem>>, vector<24x4xf32>,
    %c0_i32_8 = arith.constant 0 : i32
    %9 = arith.cmpi eq, %arg2, %c0_i32_8 : i32
    %10 = arith.extui %9 : i1 to i32
    %c0_i32_9 = arith.constant 0 : i32
    %11 = arith.cmpi ne, %10, %c0_i32_9 : i32
    scf.if %11 {
      %c0_10 = arith.constant 0 : index
      %c0_11 = arith.constant 0 : index
      %12 = vector.load %arg7[%c0_10, %c0_11] : memref<24x4xf32, #tpu.memory_space<vmem>>, vector<24x4xf32>
      %c0_12 = arith.constant 0 : index
      %c0_13 = arith.constant 0 : index
      %13 = vector.load %arg5[%c0_12, %c0_13] : memref<1x4xf32, #tpu.memory_space<vmem>>, vector<1x4xf32>
      %14 = vector.broadcast %13 : vector<1x4xf32> to vector<24x4xf32>
      %15 = arith.addf %12, %14 : vector<24x4xf32>
      %c0_14 = arith.constant 0 : index
      %c0_15 = arith.constant 0 : index
      %16 = vector.load %arg6[%c0_14, %c0_15] : memref<24x4xf32, #tpu.memory_space<vmem>>, vector<24x4xf32>
      tpu.vector_store %arg6[%c0_14, %c0_15], %15 {strides = array<i32>} : memref<24x4xf32, #tpu.memory_space<vmem>>, vector<24x4xf32>,
    } else {
    }
    return
  }
  func.func @transform_0(%arg0: i32, %arg1: i32, %arg2: i32) -> (i32, i32) {
    %c0_i32 = arith.constant 0 : i32
    return %arg0, %arg2 : i32, i32
  }
  func.func @transform_1(%arg0: i32, %arg1: i32, %arg2: i32) -> (i32, i32) {
    %c0_i32 = arith.constant 0 : i32
    return %arg2, %arg1 : i32, i32
  }
  func.func @transform_2(%arg0: i32, %arg1: i32, %arg2: i32) -> (i32, i32) {
    %c0_i32 = arith.constant 0 : i32
    %c0_i32_0 = arith.constant 0 : i32
    return %c0_i32, %arg1 : i32, i32
  }
  func.func @transform_3(%arg0: i32, %arg1: i32, %arg2: i32) -> (i32, i32) {
    %c0_i32 = arith.constant 0 : i32
    return %arg0, %arg1 : i32, i32
  }
}

module attributes {stable_mosaic.version = 11 : i64} {
  func.func @_spectral_stack_kernel(%arg0: i32, %arg1: i32, %arg2: memref<1x4x3x8xf32, #tpu.memory_space<vmem>>, %arg3: memref<1x4x8x8xf32, #tpu.memory_space<vmem>>, %arg4: memref<1x4x1x8xf32, #tpu.memory_space<vmem>>, %arg5: memref<1x12x8xf32, #tpu.memory_space<vmem>>, %arg6: memref<1x8x8xf32, #tpu.memory_space<vmem>>, %arg7: memref<1x1x8xf32, #tpu.memory_space<vmem>>, %arg8: memref<4x1x1xf32, #tpu.memory_space<vmem>>, %arg9: memref<1x12xf32, #tpu.memory_space<vmem>>, %arg10: memref<8x8xf32, #tpu.memory_space<vmem>>, %arg11: memref<1x8xf32, #tpu.memory_space<vmem>>, %arg12: memref<1x3x8xf32, #tpu.memory_space<vmem>>, %arg13: memref<4x3x8xf32, #tpu.memory_space<vmem>>) attributes {dimension_semantics = [#tpu.dimension_semantics<parallel>, #tpu.dimension_semantics<arbitrary>], iteration_bounds = array<i64: 2, 2>, scalar_prefetch = 0 : i64, scratch_operands = 1 : i64, tpu.core_type = #tpu.core_type<tc>, window_params = [{transform_indices = @transform_0, window_bounds = array<i64: 1, 4, 3, 8>}, {transform_indices = @transform_1, window_bounds = array<i64: 1, 4, 8, 8>}, {transform_indices = @transform_2, window_bounds = array<i64: 1, 4, 1, 8>}, {transform_indices = @transform_3, window_bounds = array<i64: 1, 12, 8>}, {transform_indices = @transform_4, window_bounds = array<i64: 1, 8, 8>}, {transform_indices = @transform_5, window_bounds = array<i64: 1, 1, 8>}, {pipeline_mode = #tpu.pipeline_mode<synchronous>, transform_indices = @transform_6, window_bounds = array<i64: 4, 1, 1>}, {pipeline_mode = #tpu.pipeline_mode<synchronous>, transform_indices = @transform_7, window_bounds = array<i64: 1, 12>}, {pipeline_mode = #tpu.pipeline_mode<synchronous>, transform_indices = @transform_8, window_bounds = array<i64: 8, 8>}, {pipeline_mode = #tpu.pipeline_mode<synchronous>, transform_indices = @transform_9, window_bounds = array<i64: 1, 8>}, {transform_indices = @transform_10, window_bounds = array<i64: 1, 3, 8>}]} {
    %c0_i32 = arith.constant 0 : i32
    %0 = arith.cmpi eq, %arg1, %c0_i32 : i32
    %1 = arith.extui %0 : i1 to i32
    %c0_i32_0 = arith.constant 0 : i32
    %2 = arith.cmpi ne, %1, %c0_i32_0 : i32
    scf.if %2 {
      %c0_42 = arith.constant 0 : index
      %c0_43 = arith.constant 0 : index
      %c0_44 = arith.constant 0 : index
      %c0_45 = arith.constant 0 : index
      %79 = vector.load %arg2[%c0_42, %c0_43, %c0_44, %c0_45] : memref<1x4x3x8xf32, #tpu.memory_space<vmem>>, vector<1x4x3x8xf32>
      %80 = vector.shape_cast %79 : vector<1x4x3x8xf32> to vector<4x3x8xf32>
      %c0_46 = arith.constant 0 : index
      %c0_47 = arith.constant 0 : index
      %c0_48 = arith.constant 0 : index
      %81 = vector.load %arg13[%c0_46, %c0_47, %c0_48] : memref<4x3x8xf32, #tpu.memory_space<vmem>>, vector<4x3x8xf32>
      tpu.vector_store %arg13[%c0_46, %c0_47, %c0_48], %80 {strides = array<i32>} : memref<4x3x8xf32, #tpu.memory_space<vmem>>, vector<4x3x8xf32>,
    } else {
    }
    %c0 = arith.constant 0 : index
    %c0_1 = arith.constant 0 : index
    %c0_2 = arith.constant 0 : index
    %c0_3 = arith.constant 0 : index
    %3 = vector.load %arg3[%c0, %c0_1, %c0_2, %c0_3] : memref<1x4x8x8xf32, #tpu.memory_space<vmem>>, vector<1x4x8x8xf32>
    %4 = vector.shape_cast %3 : vector<1x4x8x8xf32> to vector<4x8x8xf32>
    %c0_4 = arith.constant 0 : index
    %c0_5 = arith.constant 0 : index
    %c0_6 = arith.constant 0 : index
    %5 = vector.load %arg6[%c0_4, %c0_5, %c0_6] : memref<1x8x8xf32, #tpu.memory_space<vmem>>, vector<1x8x8xf32>
    %6 = vector.shape_cast %5 : vector<1x8x8xf32> to vector<8x8xf32>
    %c0_7 = arith.constant 0 : index
    %c0_8 = arith.constant 0 : index
    %c0_9 = arith.constant 0 : index
    %7 = vector.load %arg7[%c0_7, %c0_8, %c0_9] : memref<1x1x8xf32, #tpu.memory_space<vmem>>, vector<1x1x8xf32>
    %8 = vector.shape_cast %7 : vector<1x1x8xf32> to vector<1x8xf32>
    %c0_10 = arith.constant 0 : index
    %c0_11 = arith.constant 0 : index
    %c0_12 = arith.constant 0 : index
    %9 = vector.load %arg13[%c0_10, %c0_11, %c0_12] : memref<4x3x8xf32, #tpu.memory_space<vmem>>, vector<4x3x8xf32>
    %cst = arith.constant dense<0.000000e+00> : vector<4x3x8xf32>
    %10 = tpu.matmul %9, %4, %cst {dimension_numbers = #tpu.dot_dimension_numbers<[2], [1], [1], [2], [0, 0, 0, 1, 1, 2], [0], [0]>} : vector<4x3x8xf32>, vector<4x8x8xf32>, vector<4x3x8xf32> -> vector<4x3x8xf32>
    %c0_13 = arith.constant 0 : index
    %c0_14 = arith.constant 0 : index
    %c0_15 = arith.constant 0 : index
    %c0_16 = arith.constant 0 : index
    %11 = vector.load %arg4[%c0_13, %c0_14, %c0_15, %c0_16] : memref<1x4x1x8xf32, #tpu.memory_space<vmem>>, vector<1x4x1x8xf32>
    %12 = vector.shape_cast %11 : vector<1x4x1x8xf32> to vector<4x1x8xf32>
    %13 = vector.broadcast %12 : vector<4x1x8xf32> to vector<4x3x8xf32>
    %14 = arith.addf %10, %13 : vector<4x3x8xf32>
    %15 = vector.shape_cast %14 : vector<4x3x8xf32> to vector<12x8xf32>
    %cst_17 = arith.constant dense<0.000000e+00> : vector<12x8xf32>
    %16 = tpu.matmul %15, %6, %cst_17 {dimension_numbers = #tpu.dot_dimension_numbers<[1], [1], [0], [0], [0, 0, 1, 0], [], []>} : vector<12x8xf32>, vector<8x8xf32>, vector<12x8xf32> -> vector<12x8xf32>
    %17 = vector.broadcast %8 : vector<1x8xf32> to vector<12x8xf32>
    %18 = arith.addf %16, %17 : vector<12x8xf32>
    %cst_18 = arith.constant 5.000000e-01 : f32
    %19 = vector.broadcast %cst_18 : f32 to vector<12x8xf32>
    %20 = arith.mulf %19, %18 : vector<12x8xf32>
    %cst_19 = arith.constant 0.707106769 : f32
    %21 = vector.broadcast %cst_19 : f32 to vector<12x8xf32>
    %22 = arith.mulf %18, %21 : vector<12x8xf32>
    %23 = math.absf %22 : vector<12x8xf32>
    %cst_20 = arith.constant 5.000000e-01 : f32
    %24 = vector.broadcast %cst_20 : f32 to vector<12x8xf32>
    %25 = arith.mulf %24, %23 : vector<12x8xf32>
    %cst_21 = arith.constant 1.000000e+00 : f32
    %26 = vector.broadcast %cst_21 : f32 to vector<12x8xf32>
    %27 = arith.addf %26, %25 : vector<12x8xf32>
    %cst_22 = arith.constant 1.000000e+00 : f32
    %28 = vector.broadcast %cst_22 : f32 to vector<12x8xf32>
    %29 = arith.divf %28, %27 : vector<12x8xf32>
    %cst_23 = arith.constant 0.170872763 : f32
    %30 = vector.broadcast %cst_23 : f32 to vector<12x8xf32>
    %31 = arith.mulf %29, %30 : vector<12x8xf32>
    %cst_24 = arith.constant -0.822152256 : f32
    %32 = vector.broadcast %cst_24 : f32 to vector<12x8xf32>
    %33 = arith.addf %32, %31 : vector<12x8xf32>
    %34 = arith.mulf %29, %33 : vector<12x8xf32>
    %cst_25 = arith.constant 1.48851585 : f32
    %35 = vector.broadcast %cst_25 : f32 to vector<12x8xf32>
    %36 = arith.addf %35, %34 : vector<12x8xf32>
    %37 = arith.mulf %29, %36 : vector<12x8xf32>
    %cst_26 = arith.constant -1.13520396 : f32
    %38 = vector.broadcast %cst_26 : f32 to vector<12x8xf32>
    %39 = arith.addf %38, %37 : vector<12x8xf32>
    %40 = arith.mulf %29, %39 : vector<12x8xf32>
    %cst_27 = arith.constant 0.278868079 : f32
    %41 = vector.broadcast %cst_27 : f32 to vector<12x8xf32>
    %42 = arith.addf %41, %40 : vector<12x8xf32>
    %43 = arith.mulf %29, %42 : vector<12x8xf32>
    %cst_28 = arith.constant -0.186288059 : f32
    %44 = vector.broadcast %cst_28 : f32 to vector<12x8xf32>
    %45 = arith.addf %44, %43 : vector<12x8xf32>
    %46 = arith.mulf %29, %45 : vector<12x8xf32>
    %cst_29 = arith.constant 0.0967841818 : f32
    %47 = vector.broadcast %cst_29 : f32 to vector<12x8xf32>
    %48 = arith.addf %47, %46 : vector<12x8xf32>
    %49 = arith.mulf %29, %48 : vector<12x8xf32>
    %cst_30 = arith.constant 0.374091953 : f32
    %50 = vector.broadcast %cst_30 : f32 to vector<12x8xf32>
    %51 = arith.addf %50, %49 : vector<12x8xf32>
    %52 = arith.mulf %29, %51 : vector<12x8xf32>
    %cst_31 = arith.constant 1.00002372 : f32
    %53 = vector.broadcast %cst_31 : f32 to vector<12x8xf32>
    %54 = arith.addf %53, %52 : vector<12x8xf32>
    %55 = arith.mulf %29, %54 : vector<12x8xf32>
    %cst_32 = arith.constant -1.26551223 : f32
    %56 = vector.broadcast %cst_32 : f32 to vector<12x8xf32>
    %57 = arith.addf %56, %55 : vector<12x8xf32>
    %cst_33 = arith.constant 0.000000e+00 : f32
    %58 = vector.broadcast %cst_33 : f32 to vector<12x8xf32>
    %59 = arith.subf %58, %23 : vector<12x8xf32>
    %60 = arith.mulf %59, %23 : vector<12x8xf32>
    %61 = arith.addf %60, %57 : vector<12x8xf32>
    %62 = math.exp %61 : vector<12x8xf32>
    %63 = arith.mulf %29, %62 : vector<12x8xf32>
    %cst_34 = arith.constant 0.000000e+00 : f32
    %64 = vector.broadcast %cst_34 : f32 to vector<12x8xf32>
    %65 = arith.cmpf oge, %22, %64 : vector<12x8xf32>
    %cst_35 = arith.constant 1.000000e+00 : f32
    %66 = vector.broadcast %cst_35 : f32 to vector<12x8xf32>
    %67 = arith.subf %66, %63 : vector<12x8xf32>
    %cst_36 = arith.constant 1.000000e+00 : f32
    %68 = vector.broadcast %cst_36 : f32 to vector<12x8xf32>
    %69 = arith.subf %63, %68 : vector<12x8xf32>
    %70 = arith.select %65, %67, %69 : vector<12x8xi1>, vector<12x8xf32>
    %cst_37 = arith.constant 1.000000e+00 : f32
    %71 = vector.broadcast %cst_37 : f32 to vector<12x8xf32>
    %72 = arith.addf %71, %70 : vector<12x8xf32>
    %73 = arith.mulf %20, %72 : vector<12x8xf32>
    %74 = vector.shape_cast %73 : vector<12x8xf32> to vector<4x3x8xf32>
    %c0_38 = arith.constant 0 : index
    %c0_39 = arith.constant 0 : index
    %c0_40 = arith.constant 0 : index
    %75 = vector.load %arg13[%c0_38, %c0_39, %c0_40] : memref<4x3x8xf32, #tpu.memory_space<vmem>>, vector<4x3x8xf32>
    tpu.vector_store %arg13[%c0_38, %c0_39, %c0_40], %74 {strides = array<i32>} : memref<4x3x8xf32, #tpu.memory_space<vmem>>, vector<4x3x8xf32>,
    %c1_i32 = arith.constant 1 : i32
    %76 = arith.cmpi eq, %arg1, %c1_i32 : i32
    %77 = arith.extui %76 : i1 to i32
    %c0_i32_41 = arith.constant 0 : i32
    %78 = arith.cmpi ne, %77, %c0_i32_41 : i32
    scf.if %78 {
      %c0_42 = arith.constant 0 : index
      %c0_43 = arith.constant 0 : index
      %c0_44 = arith.constant 0 : index
      %79 = vector.load %arg8[%c0_42, %c0_43, %c0_44] : memref<4x1x1xf32, #tpu.memory_space<vmem>>, vector<4x1x1xf32>
      %80 = vector.broadcast %79 : vector<4x1x1xf32> to vector<4x3x8xf32>
      %81 = arith.mulf %74, %80 : vector<4x3x8xf32>
      %cst_45 = arith.constant dense<0.000000e+00> : vector<3x8xf32>
      %82 = vector.multi_reduction <add>, %81, %cst_45 [0] : vector<4x3x8xf32> to vector<3x8xf32>
      %c0_46 = arith.constant 0 : index
      %c0_47 = arith.constant 0 : index
      %c0_48 = arith.constant 0 : index
      %83 = vector.load %arg5[%c0_46, %c0_47, %c0_48] : memref<1x12x8xf32, #tpu.memory_space<vmem>>, vector<1x12x8xf32>
      %84 = vector.shape_cast %83 : vector<1x12x8xf32> to vector<12x8xf32>
      %cst_49 = arith.constant dense<0.000000e+00> : vector<12x8xf32>
      %85 = tpu.matmul %84, %6, %cst_49 {dimension_numbers = #tpu.dot_dimension_numbers<[1], [1], [0], [0], [0, 0, 1, 0], [], []>} : vector<12x8xf32>, vector<8x8xf32>, vector<12x8xf32> -> vector<12x8xf32>
      %86 = vector.broadcast %8 : vector<1x8xf32> to vector<12x8xf32>
      %87 = arith.addf %85, %86 : vector<12x8xf32>
      %cst_50 = arith.constant 5.000000e-01 : f32
      %88 = vector.broadcast %cst_50 : f32 to vector<12x8xf32>
      %89 = arith.mulf %88, %87 : vector<12x8xf32>
      %cst_51 = arith.constant 0.707106769 : f32
      %90 = vector.broadcast %cst_51 : f32 to vector<12x8xf32>
      %91 = arith.mulf %87, %90 : vector<12x8xf32>
      %92 = math.absf %91 : vector<12x8xf32>
      %cst_52 = arith.constant 5.000000e-01 : f32
      %93 = vector.broadcast %cst_52 : f32 to vector<12x8xf32>
      %94 = arith.mulf %93, %92 : vector<12x8xf32>
      %cst_53 = arith.constant 1.000000e+00 : f32
      %95 = vector.broadcast %cst_53 : f32 to vector<12x8xf32>
      %96 = arith.addf %95, %94 : vector<12x8xf32>
      %cst_54 = arith.constant 1.000000e+00 : f32
      %97 = vector.broadcast %cst_54 : f32 to vector<12x8xf32>
      %98 = arith.divf %97, %96 : vector<12x8xf32>
      %cst_55 = arith.constant 0.170872763 : f32
      %99 = vector.broadcast %cst_55 : f32 to vector<12x8xf32>
      %100 = arith.mulf %98, %99 : vector<12x8xf32>
      %cst_56 = arith.constant -0.822152256 : f32
      %101 = vector.broadcast %cst_56 : f32 to vector<12x8xf32>
      %102 = arith.addf %101, %100 : vector<12x8xf32>
      %103 = arith.mulf %98, %102 : vector<12x8xf32>
      %cst_57 = arith.constant 1.48851585 : f32
      %104 = vector.broadcast %cst_57 : f32 to vector<12x8xf32>
      %105 = arith.addf %104, %103 : vector<12x8xf32>
      %106 = arith.mulf %98, %105 : vector<12x8xf32>
      %cst_58 = arith.constant -1.13520396 : f32
      %107 = vector.broadcast %cst_58 : f32 to vector<12x8xf32>
      %108 = arith.addf %107, %106 : vector<12x8xf32>
      %109 = arith.mulf %98, %108 : vector<12x8xf32>
      %cst_59 = arith.constant 0.278868079 : f32
      %110 = vector.broadcast %cst_59 : f32 to vector<12x8xf32>
      %111 = arith.addf %110, %109 : vector<12x8xf32>
      %112 = arith.mulf %98, %111 : vector<12x8xf32>
      %cst_60 = arith.constant -0.186288059 : f32
      %113 = vector.broadcast %cst_60 : f32 to vector<12x8xf32>
      %114 = arith.addf %113, %112 : vector<12x8xf32>
      %115 = arith.mulf %98, %114 : vector<12x8xf32>
      %cst_61 = arith.constant 0.0967841818 : f32
      %116 = vector.broadcast %cst_61 : f32 to vector<12x8xf32>
      %117 = arith.addf %116, %115 : vector<12x8xf32>
      %118 = arith.mulf %98, %117 : vector<12x8xf32>
      %cst_62 = arith.constant 0.374091953 : f32
      %119 = vector.broadcast %cst_62 : f32 to vector<12x8xf32>
      %120 = arith.addf %119, %118 : vector<12x8xf32>
      %121 = arith.mulf %98, %120 : vector<12x8xf32>
      %cst_63 = arith.constant 1.00002372 : f32
      %122 = vector.broadcast %cst_63 : f32 to vector<12x8xf32>
      %123 = arith.addf %122, %121 : vector<12x8xf32>
      %124 = arith.mulf %98, %123 : vector<12x8xf32>
      %cst_64 = arith.constant -1.26551223 : f32
      %125 = vector.broadcast %cst_64 : f32 to vector<12x8xf32>
      %126 = arith.addf %125, %124 : vector<12x8xf32>
      %cst_65 = arith.constant 0.000000e+00 : f32
      %127 = vector.broadcast %cst_65 : f32 to vector<12x8xf32>
      %128 = arith.subf %127, %92 : vector<12x8xf32>
      %129 = arith.mulf %128, %92 : vector<12x8xf32>
      %130 = arith.addf %129, %126 : vector<12x8xf32>
      %131 = math.exp %130 : vector<12x8xf32>
      %132 = arith.mulf %98, %131 : vector<12x8xf32>
      %cst_66 = arith.constant 0.000000e+00 : f32
      %133 = vector.broadcast %cst_66 : f32 to vector<12x8xf32>
      %134 = arith.cmpf oge, %91, %133 : vector<12x8xf32>
      %cst_67 = arith.constant 1.000000e+00 : f32
      %135 = vector.broadcast %cst_67 : f32 to vector<12x8xf32>
      %136 = arith.subf %135, %132 : vector<12x8xf32>
      %cst_68 = arith.constant 1.000000e+00 : f32
      %137 = vector.broadcast %cst_68 : f32 to vector<12x8xf32>
      %138 = arith.subf %132, %137 : vector<12x8xf32>
      %139 = arith.select %134, %136, %138 : vector<12x8xi1>, vector<12x8xf32>
      %cst_69 = arith.constant 1.000000e+00 : f32
      %140 = vector.broadcast %cst_69 : f32 to vector<12x8xf32>
      %141 = arith.addf %140, %139 : vector<12x8xf32>
      %142 = arith.mulf %89, %141 : vector<12x8xf32>
      %c0_70 = arith.constant 0 : index
      %c0_71 = arith.constant 0 : index
      %143 = vector.load %arg9[%c0_70, %c0_71] : memref<1x12xf32, #tpu.memory_space<vmem>>, vector<1x12xf32>
      %cst_72 = arith.constant dense<0.000000e+00> : vector<1x8xf32>
      %144 = tpu.matmul %143, %142, %cst_72 {dimension_numbers = #tpu.dot_dimension_numbers<[1], [0], [0], [1], [0, 0, 1, 1], [], []>} : vector<1x12xf32>, vector<12x8xf32>, vector<1x8xf32> -> vector<1x8xf32>
      %145 = vector.broadcast %144 : vector<1x8xf32> to vector<3x8xf32>
      %146 = arith.addf %82, %145 : vector<3x8xf32>
      %c0_73 = arith.constant 0 : index
      %c0_74 = arith.constant 0 : index
      %147 = vector.load %arg10[%c0_73, %c0_74] : memref<8x8xf32, #tpu.memory_space<vmem>>, vector<8x8xf32>
      %cst_75 = arith.constant dense<0.000000e+00> : vector<3x8xf32>
      %148 = tpu.matmul %146, %147, %cst_75 {dimension_numbers = #tpu.dot_dimension_numbers<[1], [1], [0], [0], [0, 0, 1, 0], [], []>} : vector<3x8xf32>, vector<8x8xf32>, vector<3x8xf32> -> vector<3x8xf32>
      %c0_76 = arith.constant 0 : index
      %c0_77 = arith.constant 0 : index
      %149 = vector.load %arg11[%c0_76, %c0_77] : memref<1x8xf32, #tpu.memory_space<vmem>>, vector<1x8xf32>
      %150 = vector.broadcast %149 : vector<1x8xf32> to vector<3x8xf32>
      %151 = arith.addf %148, %150 : vector<3x8xf32>
      %c0_78 = arith.constant 0 : index
      %c0_79 = arith.constant 0 : index
      %c0_80 = arith.constant 0 : index
      %152 = vector.load %arg12[%c0_78, %c0_79, %c0_80] : memref<1x3x8xf32, #tpu.memory_space<vmem>>, vector<1x3x8xf32>
      %153 = vector.shape_cast %152 : vector<1x3x8xf32> to vector<3x8xf32>
      %154 = vector.shape_cast %151 : vector<3x8xf32> to vector<1x3x8xf32>
      tpu.vector_store %arg12[%c0_78, %c0_79, %c0_80], %154 {strides = array<i32>} : memref<1x3x8xf32, #tpu.memory_space<vmem>>, vector<1x3x8xf32>,
    } else {
    }
    return
  }
  func.func @transform_0(%arg0: i32, %arg1: i32) -> (i32, i32, i32, i32) {
    %c0_i32 = arith.constant 0 : i32
    %c0_i32_0 = arith.constant 0 : i32
    %c0_i32_1 = arith.constant 0 : i32
    %c0_i32_2 = arith.constant 0 : i32
    return %arg0, %c0_i32, %c0_i32_0, %c0_i32_1 : i32, i32, i32, i32
  }
  func.func @transform_1(%arg0: i32, %arg1: i32) -> (i32, i32, i32, i32) {
    %c0_i32 = arith.constant 0 : i32
    %c0_i32_0 = arith.constant 0 : i32
    %c0_i32_1 = arith.constant 0 : i32
    %c0_i32_2 = arith.constant 0 : i32
    return %arg1, %c0_i32, %c0_i32_0, %c0_i32_1 : i32, i32, i32, i32
  }
  func.func @transform_2(%arg0: i32, %arg1: i32) -> (i32, i32, i32, i32) {
    %c0_i32 = arith.constant 0 : i32
    %c0_i32_0 = arith.constant 0 : i32
    %c0_i32_1 = arith.constant 0 : i32
    %c0_i32_2 = arith.constant 0 : i32
    return %arg1, %c0_i32, %c0_i32_0, %c0_i32_1 : i32, i32, i32, i32
  }
  func.func @transform_3(%arg0: i32, %arg1: i32) -> (i32, i32, i32) {
    %c0_i32 = arith.constant 0 : i32
    %c0_i32_0 = arith.constant 0 : i32
    %c0_i32_1 = arith.constant 0 : i32
    return %arg1, %c0_i32, %c0_i32_0 : i32, i32, i32
  }
  func.func @transform_4(%arg0: i32, %arg1: i32) -> (i32, i32, i32) {
    %c0_i32 = arith.constant 0 : i32
    %c0_i32_0 = arith.constant 0 : i32
    %c0_i32_1 = arith.constant 0 : i32
    return %arg1, %c0_i32, %c0_i32_0 : i32, i32, i32
  }
  func.func @transform_5(%arg0: i32, %arg1: i32) -> (i32, i32, i32) {
    %c0_i32 = arith.constant 0 : i32
    %c0_i32_0 = arith.constant 0 : i32
    %c0_i32_1 = arith.constant 0 : i32
    return %arg1, %c0_i32, %c0_i32_0 : i32, i32, i32
  }
  func.func @transform_6(%arg0: i32, %arg1: i32) -> (i32, i32, i32) {
    %c0_i32 = arith.constant 0 : i32
    %c0_i32_0 = arith.constant 0 : i32
    %c0_i32_1 = arith.constant 0 : i32
    %c0_i32_2 = arith.constant 0 : i32
    return %c0_i32, %c0_i32_0, %c0_i32_1 : i32, i32, i32
  }
  func.func @transform_7(%arg0: i32, %arg1: i32) -> (i32, i32) {
    %c0_i32 = arith.constant 0 : i32
    %c0_i32_0 = arith.constant 0 : i32
    %c0_i32_1 = arith.constant 0 : i32
    return %c0_i32, %c0_i32_0 : i32, i32
  }
  func.func @transform_8(%arg0: i32, %arg1: i32) -> (i32, i32) {
    %c0_i32 = arith.constant 0 : i32
    %c0_i32_0 = arith.constant 0 : i32
    %c0_i32_1 = arith.constant 0 : i32
    return %c0_i32, %c0_i32_0 : i32, i32
  }
  func.func @transform_9(%arg0: i32, %arg1: i32) -> (i32, i32) {
    %c0_i32 = arith.constant 0 : i32
    %c0_i32_0 = arith.constant 0 : i32
    %c0_i32_1 = arith.constant 0 : i32
    return %c0_i32, %c0_i32_0 : i32, i32
  }
  func.func @transform_10(%arg0: i32, %arg1: i32) -> (i32, i32, i32) {
    %c0_i32 = arith.constant 0 : i32
    %c0_i32_0 = arith.constant 0 : i32
    %c0_i32_1 = arith.constant 0 : i32
    return %arg0, %c0_i32, %c0_i32_0 : i32, i32, i32
  }
}

module attributes {stable_mosaic.version = 11 : i64} {
  func.func @_lstm_head_kernel(%arg0: i32, %arg1: memref<1x3x1x8xf32, #tpu.memory_space<vmem>>, %arg2: memref<8x32xf32, #tpu.memory_space<vmem>>, %arg3: memref<8x32xf32, #tpu.memory_space<vmem>>, %arg4: memref<1x32xf32, #tpu.memory_space<vmem>>, %arg5: memref<8x16xf32, #tpu.memory_space<vmem>>, %arg6: memref<1x16xf32, #tpu.memory_space<vmem>>, %arg7: memref<16x6xf32, #tpu.memory_space<vmem>>, %arg8: memref<1x6xf32, #tpu.memory_space<vmem>>, %arg9: memref<1x1x6xf32, #tpu.memory_space<vmem>>) attributes {dimension_semantics = [#tpu.dimension_semantics<parallel>], iteration_bounds = array<i64: 2>, scalar_prefetch = 0 : i64, scratch_operands = 0 : i64, tpu.core_type = #tpu.core_type<tc>, window_params = [{transform_indices = @transform_0, window_bounds = array<i64: 1, 3, 1, 8>}, {pipeline_mode = #tpu.pipeline_mode<synchronous>, transform_indices = @transform_1, window_bounds = array<i64: 8, 32>}, {pipeline_mode = #tpu.pipeline_mode<synchronous>, transform_indices = @transform_2, window_bounds = array<i64: 8, 32>}, {pipeline_mode = #tpu.pipeline_mode<synchronous>, transform_indices = @transform_3, window_bounds = array<i64: 1, 32>}, {pipeline_mode = #tpu.pipeline_mode<synchronous>, transform_indices = @transform_4, window_bounds = array<i64: 8, 16>}, {pipeline_mode = #tpu.pipeline_mode<synchronous>, transform_indices = @transform_5, window_bounds = array<i64: 1, 16>}, {pipeline_mode = #tpu.pipeline_mode<synchronous>, transform_indices = @transform_6, window_bounds = array<i64: 16, 6>}, {pipeline_mode = #tpu.pipeline_mode<synchronous>, transform_indices = @transform_7, window_bounds = array<i64: 1, 6>}, {transform_indices = @transform_8, window_bounds = array<i64: 1, 1, 6>}]} {
    %c0 = arith.constant 0 : index
    %c0_0 = arith.constant 0 : index
    %0 = vector.load %arg2[%c0, %c0_0] : memref<8x32xf32, #tpu.memory_space<vmem>>, vector<8x32xf32>
    %c0_1 = arith.constant 0 : index
    %c0_2 = arith.constant 0 : index
    %1 = vector.load %arg3[%c0_1, %c0_2] : memref<8x32xf32, #tpu.memory_space<vmem>>, vector<8x32xf32>
    %c0_3 = arith.constant 0 : index
    %c0_4 = arith.constant 0 : index
    %2 = vector.load %arg4[%c0_3, %c0_4] : memref<1x32xf32, #tpu.memory_space<vmem>>, vector<1x32xf32>
    %cst = arith.constant 0.000000e+00 : f32
    %3 = vector.broadcast %cst : f32 to vector<1x8xf32>
    %cst_5 = arith.constant 0.000000e+00 : f32
    %4 = vector.broadcast %cst_5 : f32 to vector<1x8xf32>
    %c0_i32 = arith.constant 0 : i32
    %c0_6 = arith.constant 0 : index
    %5 = arith.index_cast %c0_i32 : i32 to index
    %c0_7 = arith.constant 0 : index
    %c0_8 = arith.constant 0 : index
    %6 = vector.load %arg1[%c0_6, %5, %c0_7, %c0_8] : memref<1x3x1x8xf32, #tpu.memory_space<vmem>>, vector<1x1x1x8xf32>
    %7 = vector.shape_cast %6 : vector<1x1x1x8xf32> to vector<1x8xf32>
    %cst_9 = arith.constant dense<0.000000e+00> : vector<1x32xf32>
    %8 = tpu.matmul %7, %0, %cst_9 {dimension_numbers = #tpu.dot_dimension_numbers<[1], [0], [0], [1], [0, 0, 1, 1], [], []>} : vector<1x8xf32>, vector<8x32xf32>, vector<1x32xf32> -> vector<1x32xf32>
    %cst_10 = arith.constant dense<0.000000e+00> : vector<1x32xf32>
    %9 = tpu.matmul %3, %1, %cst_10 {dimension_numbers = #tpu.dot_dimension_numbers<[1], [0], [0], [1], [0, 0, 1, 1], [], []>} : vector<1x8xf32>, vector<8x32xf32>, vector<1x32xf32> -> vector<1x32xf32>
    %10 = arith.addf %8, %9 : vector<1x32xf32>
    %11 = arith.addf %10, %2 : vector<1x32xf32>
    %12 = vector.extract_strided_slice %11 {offsets = [0, 0], sizes = [1, 8], strides = [1, 1]} : vector<1x32xf32> to vector<1x8xf32>
    %cst_11 = arith.constant 5.000000e-01 : f32
    %13 = vector.broadcast %cst_11 : f32 to vector<1x8xf32>
    %14 = arith.mulf %13, %12 : vector<1x8xf32>
    %15 = math.tanh %14 : vector<1x8xf32>
    %cst_12 = arith.constant 1.000000e+00 : f32
    %16 = vector.broadcast %cst_12 : f32 to vector<1x8xf32>
    %17 = arith.addf %15, %16 : vector<1x8xf32>
    %cst_13 = arith.constant 5.000000e-01 : f32
    %18 = vector.broadcast %cst_13 : f32 to vector<1x8xf32>
    %19 = arith.mulf %18, %17 : vector<1x8xf32>
    %20 = vector.extract_strided_slice %11 {offsets = [0, 8], sizes = [1, 8], strides = [1, 1]} : vector<1x32xf32> to vector<1x8xf32>
    %cst_14 = arith.constant 5.000000e-01 : f32
    %21 = vector.broadcast %cst_14 : f32 to vector<1x8xf32>
    %22 = arith.mulf %21, %20 : vector<1x8xf32>
    %23 = math.tanh %22 : vector<1x8xf32>
    %cst_15 = arith.constant 1.000000e+00 : f32
    %24 = vector.broadcast %cst_15 : f32 to vector<1x8xf32>
    %25 = arith.addf %23, %24 : vector<1x8xf32>
    %cst_16 = arith.constant 5.000000e-01 : f32
    %26 = vector.broadcast %cst_16 : f32 to vector<1x8xf32>
    %27 = arith.mulf %26, %25 : vector<1x8xf32>
    %28 = vector.extract_strided_slice %11 {offsets = [0, 16], sizes = [1, 8], strides = [1, 1]} : vector<1x32xf32> to vector<1x8xf32>
    %29 = math.tanh %28 : vector<1x8xf32>
    %30 = vector.extract_strided_slice %11 {offsets = [0, 24], sizes = [1, 8], strides = [1, 1]} : vector<1x32xf32> to vector<1x8xf32>
    %cst_17 = arith.constant 5.000000e-01 : f32
    %31 = vector.broadcast %cst_17 : f32 to vector<1x8xf32>
    %32 = arith.mulf %31, %30 : vector<1x8xf32>
    %33 = math.tanh %32 : vector<1x8xf32>
    %cst_18 = arith.constant 1.000000e+00 : f32
    %34 = vector.broadcast %cst_18 : f32 to vector<1x8xf32>
    %35 = arith.addf %33, %34 : vector<1x8xf32>
    %cst_19 = arith.constant 5.000000e-01 : f32
    %36 = vector.broadcast %cst_19 : f32 to vector<1x8xf32>
    %37 = arith.mulf %36, %35 : vector<1x8xf32>
    %38 = arith.mulf %27, %4 : vector<1x8xf32>
    %39 = arith.mulf %19, %29 : vector<1x8xf32>
    %40 = arith.addf %38, %39 : vector<1x8xf32>
    %41 = math.tanh %40 : vector<1x8xf32>
    %42 = arith.mulf %37, %41 : vector<1x8xf32>
    %c1_i32 = arith.constant 1 : i32
    %c0_20 = arith.constant 0 : index
    %43 = arith.index_cast %c1_i32 : i32 to index
    %c0_21 = arith.constant 0 : index
    %c0_22 = arith.constant 0 : index
    %44 = vector.load %arg1[%c0_20, %43, %c0_21, %c0_22] : memref<1x3x1x8xf32, #tpu.memory_space<vmem>>, vector<1x1x1x8xf32>
    %45 = vector.shape_cast %44 : vector<1x1x1x8xf32> to vector<1x8xf32>
    %cst_23 = arith.constant dense<0.000000e+00> : vector<1x32xf32>
    %46 = tpu.matmul %45, %0, %cst_23 {dimension_numbers = #tpu.dot_dimension_numbers<[1], [0], [0], [1], [0, 0, 1, 1], [], []>} : vector<1x8xf32>, vector<8x32xf32>, vector<1x32xf32> -> vector<1x32xf32>
    %cst_24 = arith.constant dense<0.000000e+00> : vector<1x32xf32>
    %47 = tpu.matmul %42, %1, %cst_24 {dimension_numbers = #tpu.dot_dimension_numbers<[1], [0], [0], [1], [0, 0, 1, 1], [], []>} : vector<1x8xf32>, vector<8x32xf32>, vector<1x32xf32> -> vector<1x32xf32>
    %48 = arith.addf %46, %47 : vector<1x32xf32>
    %49 = arith.addf %48, %2 : vector<1x32xf32>
    %50 = vector.extract_strided_slice %49 {offsets = [0, 0], sizes = [1, 8], strides = [1, 1]} : vector<1x32xf32> to vector<1x8xf32>
    %cst_25 = arith.constant 5.000000e-01 : f32
    %51 = vector.broadcast %cst_25 : f32 to vector<1x8xf32>
    %52 = arith.mulf %51, %50 : vector<1x8xf32>
    %53 = math.tanh %52 : vector<1x8xf32>
    %cst_26 = arith.constant 1.000000e+00 : f32
    %54 = vector.broadcast %cst_26 : f32 to vector<1x8xf32>
    %55 = arith.addf %53, %54 : vector<1x8xf32>
    %cst_27 = arith.constant 5.000000e-01 : f32
    %56 = vector.broadcast %cst_27 : f32 to vector<1x8xf32>
    %57 = arith.mulf %56, %55 : vector<1x8xf32>
    %58 = vector.extract_strided_slice %49 {offsets = [0, 8], sizes = [1, 8], strides = [1, 1]} : vector<1x32xf32> to vector<1x8xf32>
    %cst_28 = arith.constant 5.000000e-01 : f32
    %59 = vector.broadcast %cst_28 : f32 to vector<1x8xf32>
    %60 = arith.mulf %59, %58 : vector<1x8xf32>
    %61 = math.tanh %60 : vector<1x8xf32>
    %cst_29 = arith.constant 1.000000e+00 : f32
    %62 = vector.broadcast %cst_29 : f32 to vector<1x8xf32>
    %63 = arith.addf %61, %62 : vector<1x8xf32>
    %cst_30 = arith.constant 5.000000e-01 : f32
    %64 = vector.broadcast %cst_30 : f32 to vector<1x8xf32>
    %65 = arith.mulf %64, %63 : vector<1x8xf32>
    %66 = vector.extract_strided_slice %49 {offsets = [0, 16], sizes = [1, 8], strides = [1, 1]} : vector<1x32xf32> to vector<1x8xf32>
    %67 = math.tanh %66 : vector<1x8xf32>
    %68 = vector.extract_strided_slice %49 {offsets = [0, 24], sizes = [1, 8], strides = [1, 1]} : vector<1x32xf32> to vector<1x8xf32>
    %cst_31 = arith.constant 5.000000e-01 : f32
    %69 = vector.broadcast %cst_31 : f32 to vector<1x8xf32>
    %70 = arith.mulf %69, %68 : vector<1x8xf32>
    %71 = math.tanh %70 : vector<1x8xf32>
    %cst_32 = arith.constant 1.000000e+00 : f32
    %72 = vector.broadcast %cst_32 : f32 to vector<1x8xf32>
    %73 = arith.addf %71, %72 : vector<1x8xf32>
    %cst_33 = arith.constant 5.000000e-01 : f32
    %74 = vector.broadcast %cst_33 : f32 to vector<1x8xf32>
    %75 = arith.mulf %74, %73 : vector<1x8xf32>
    %76 = arith.mulf %65, %40 : vector<1x8xf32>
    %77 = arith.mulf %57, %67 : vector<1x8xf32>
    %78 = arith.addf %76, %77 : vector<1x8xf32>
    %79 = math.tanh %78 : vector<1x8xf32>
    %80 = arith.mulf %75, %79 : vector<1x8xf32>
    %c2_i32 = arith.constant 2 : i32
    %c0_34 = arith.constant 0 : index
    %81 = arith.index_cast %c2_i32 : i32 to index
    %c0_35 = arith.constant 0 : index
    %c0_36 = arith.constant 0 : index
    %82 = vector.load %arg1[%c0_34, %81, %c0_35, %c0_36] : memref<1x3x1x8xf32, #tpu.memory_space<vmem>>, vector<1x1x1x8xf32>
    %83 = vector.shape_cast %82 : vector<1x1x1x8xf32> to vector<1x8xf32>
    %cst_37 = arith.constant dense<0.000000e+00> : vector<1x32xf32>
    %84 = tpu.matmul %83, %0, %cst_37 {dimension_numbers = #tpu.dot_dimension_numbers<[1], [0], [0], [1], [0, 0, 1, 1], [], []>} : vector<1x8xf32>, vector<8x32xf32>, vector<1x32xf32> -> vector<1x32xf32>
    %cst_38 = arith.constant dense<0.000000e+00> : vector<1x32xf32>
    %85 = tpu.matmul %80, %1, %cst_38 {dimension_numbers = #tpu.dot_dimension_numbers<[1], [0], [0], [1], [0, 0, 1, 1], [], []>} : vector<1x8xf32>, vector<8x32xf32>, vector<1x32xf32> -> vector<1x32xf32>
    %86 = arith.addf %84, %85 : vector<1x32xf32>
    %87 = arith.addf %86, %2 : vector<1x32xf32>
    %88 = vector.extract_strided_slice %87 {offsets = [0, 0], sizes = [1, 8], strides = [1, 1]} : vector<1x32xf32> to vector<1x8xf32>
    %cst_39 = arith.constant 5.000000e-01 : f32
    %89 = vector.broadcast %cst_39 : f32 to vector<1x8xf32>
    %90 = arith.mulf %89, %88 : vector<1x8xf32>
    %91 = math.tanh %90 : vector<1x8xf32>
    %cst_40 = arith.constant 1.000000e+00 : f32
    %92 = vector.broadcast %cst_40 : f32 to vector<1x8xf32>
    %93 = arith.addf %91, %92 : vector<1x8xf32>
    %cst_41 = arith.constant 5.000000e-01 : f32
    %94 = vector.broadcast %cst_41 : f32 to vector<1x8xf32>
    %95 = arith.mulf %94, %93 : vector<1x8xf32>
    %96 = vector.extract_strided_slice %87 {offsets = [0, 8], sizes = [1, 8], strides = [1, 1]} : vector<1x32xf32> to vector<1x8xf32>
    %cst_42 = arith.constant 5.000000e-01 : f32
    %97 = vector.broadcast %cst_42 : f32 to vector<1x8xf32>
    %98 = arith.mulf %97, %96 : vector<1x8xf32>
    %99 = math.tanh %98 : vector<1x8xf32>
    %cst_43 = arith.constant 1.000000e+00 : f32
    %100 = vector.broadcast %cst_43 : f32 to vector<1x8xf32>
    %101 = arith.addf %99, %100 : vector<1x8xf32>
    %cst_44 = arith.constant 5.000000e-01 : f32
    %102 = vector.broadcast %cst_44 : f32 to vector<1x8xf32>
    %103 = arith.mulf %102, %101 : vector<1x8xf32>
    %104 = vector.extract_strided_slice %87 {offsets = [0, 16], sizes = [1, 8], strides = [1, 1]} : vector<1x32xf32> to vector<1x8xf32>
    %105 = math.tanh %104 : vector<1x8xf32>
    %106 = vector.extract_strided_slice %87 {offsets = [0, 24], sizes = [1, 8], strides = [1, 1]} : vector<1x32xf32> to vector<1x8xf32>
    %cst_45 = arith.constant 5.000000e-01 : f32
    %107 = vector.broadcast %cst_45 : f32 to vector<1x8xf32>
    %108 = arith.mulf %107, %106 : vector<1x8xf32>
    %109 = math.tanh %108 : vector<1x8xf32>
    %cst_46 = arith.constant 1.000000e+00 : f32
    %110 = vector.broadcast %cst_46 : f32 to vector<1x8xf32>
    %111 = arith.addf %109, %110 : vector<1x8xf32>
    %cst_47 = arith.constant 5.000000e-01 : f32
    %112 = vector.broadcast %cst_47 : f32 to vector<1x8xf32>
    %113 = arith.mulf %112, %111 : vector<1x8xf32>
    %114 = arith.mulf %103, %78 : vector<1x8xf32>
    %115 = arith.mulf %95, %105 : vector<1x8xf32>
    %116 = arith.addf %114, %115 : vector<1x8xf32>
    %117 = math.tanh %116 : vector<1x8xf32>
    %118 = arith.mulf %113, %117 : vector<1x8xf32>
    %c3_i32 = arith.constant 3 : i32
    %c0_48 = arith.constant 0 : index
    %c0_49 = arith.constant 0 : index
    %119 = vector.load %arg5[%c0_48, %c0_49] : memref<8x16xf32, #tpu.memory_space<vmem>>, vector<8x16xf32>
    %cst_50 = arith.constant dense<0.000000e+00> : vector<1x16xf32>
    %120 = tpu.matmul %118, %119, %cst_50 {dimension_numbers = #tpu.dot_dimension_numbers<[1], [0], [0], [1], [0, 0, 1, 1], [], []>} : vector<1x8xf32>, vector<8x16xf32>, vector<1x16xf32> -> vector<1x16xf32>
    %c0_51 = arith.constant 0 : index
    %c0_52 = arith.constant 0 : index
    %121 = vector.load %arg6[%c0_51, %c0_52] : memref<1x16xf32, #tpu.memory_space<vmem>>, vector<1x16xf32>
    %122 = arith.addf %120, %121 : vector<1x16xf32>
    %cst_53 = arith.constant 5.000000e-01 : f32
    %123 = vector.broadcast %cst_53 : f32 to vector<1x16xf32>
    %124 = arith.mulf %123, %122 : vector<1x16xf32>
    %cst_54 = arith.constant 0.707106769 : f32
    %125 = vector.broadcast %cst_54 : f32 to vector<1x16xf32>
    %126 = arith.mulf %122, %125 : vector<1x16xf32>
    %127 = math.absf %126 : vector<1x16xf32>
    %cst_55 = arith.constant 5.000000e-01 : f32
    %128 = vector.broadcast %cst_55 : f32 to vector<1x16xf32>
    %129 = arith.mulf %128, %127 : vector<1x16xf32>
    %cst_56 = arith.constant 1.000000e+00 : f32
    %130 = vector.broadcast %cst_56 : f32 to vector<1x16xf32>
    %131 = arith.addf %130, %129 : vector<1x16xf32>
    %cst_57 = arith.constant 1.000000e+00 : f32
    %132 = vector.broadcast %cst_57 : f32 to vector<1x16xf32>
    %133 = arith.divf %132, %131 : vector<1x16xf32>
    %cst_58 = arith.constant 0.170872763 : f32
    %134 = vector.broadcast %cst_58 : f32 to vector<1x16xf32>
    %135 = arith.mulf %133, %134 : vector<1x16xf32>
    %cst_59 = arith.constant -0.822152256 : f32
    %136 = vector.broadcast %cst_59 : f32 to vector<1x16xf32>
    %137 = arith.addf %136, %135 : vector<1x16xf32>
    %138 = arith.mulf %133, %137 : vector<1x16xf32>
    %cst_60 = arith.constant 1.48851585 : f32
    %139 = vector.broadcast %cst_60 : f32 to vector<1x16xf32>
    %140 = arith.addf %139, %138 : vector<1x16xf32>
    %141 = arith.mulf %133, %140 : vector<1x16xf32>
    %cst_61 = arith.constant -1.13520396 : f32
    %142 = vector.broadcast %cst_61 : f32 to vector<1x16xf32>
    %143 = arith.addf %142, %141 : vector<1x16xf32>
    %144 = arith.mulf %133, %143 : vector<1x16xf32>
    %cst_62 = arith.constant 0.278868079 : f32
    %145 = vector.broadcast %cst_62 : f32 to vector<1x16xf32>
    %146 = arith.addf %145, %144 : vector<1x16xf32>
    %147 = arith.mulf %133, %146 : vector<1x16xf32>
    %cst_63 = arith.constant -0.186288059 : f32
    %148 = vector.broadcast %cst_63 : f32 to vector<1x16xf32>
    %149 = arith.addf %148, %147 : vector<1x16xf32>
    %150 = arith.mulf %133, %149 : vector<1x16xf32>
    %cst_64 = arith.constant 0.0967841818 : f32
    %151 = vector.broadcast %cst_64 : f32 to vector<1x16xf32>
    %152 = arith.addf %151, %150 : vector<1x16xf32>
    %153 = arith.mulf %133, %152 : vector<1x16xf32>
    %cst_65 = arith.constant 0.374091953 : f32
    %154 = vector.broadcast %cst_65 : f32 to vector<1x16xf32>
    %155 = arith.addf %154, %153 : vector<1x16xf32>
    %156 = arith.mulf %133, %155 : vector<1x16xf32>
    %cst_66 = arith.constant 1.00002372 : f32
    %157 = vector.broadcast %cst_66 : f32 to vector<1x16xf32>
    %158 = arith.addf %157, %156 : vector<1x16xf32>
    %159 = arith.mulf %133, %158 : vector<1x16xf32>
    %cst_67 = arith.constant -1.26551223 : f32
    %160 = vector.broadcast %cst_67 : f32 to vector<1x16xf32>
    %161 = arith.addf %160, %159 : vector<1x16xf32>
    %cst_68 = arith.constant 0.000000e+00 : f32
    %162 = vector.broadcast %cst_68 : f32 to vector<1x16xf32>
    %163 = arith.subf %162, %127 : vector<1x16xf32>
    %164 = arith.mulf %163, %127 : vector<1x16xf32>
    %165 = arith.addf %164, %161 : vector<1x16xf32>
    %166 = math.exp %165 : vector<1x16xf32>
    %167 = arith.mulf %133, %166 : vector<1x16xf32>
    %cst_69 = arith.constant 0.000000e+00 : f32
    %168 = vector.broadcast %cst_69 : f32 to vector<1x16xf32>
    %169 = arith.cmpf oge, %126, %168 : vector<1x16xf32>
    %cst_70 = arith.constant 1.000000e+00 : f32
    %170 = vector.broadcast %cst_70 : f32 to vector<1x16xf32>
    %171 = arith.subf %170, %167 : vector<1x16xf32>
    %cst_71 = arith.constant 1.000000e+00 : f32
    %172 = vector.broadcast %cst_71 : f32 to vector<1x16xf32>
    %173 = arith.subf %167, %172 : vector<1x16xf32>
    %174 = arith.select %169, %171, %173 : vector<1x16xi1>, vector<1x16xf32>
    %cst_72 = arith.constant 1.000000e+00 : f32
    %175 = vector.broadcast %cst_72 : f32 to vector<1x16xf32>
    %176 = arith.addf %175, %174 : vector<1x16xf32>
    %177 = arith.mulf %124, %176 : vector<1x16xf32>
    %c0_73 = arith.constant 0 : index
    %c0_74 = arith.constant 0 : index
    %178 = vector.load %arg7[%c0_73, %c0_74] : memref<16x6xf32, #tpu.memory_space<vmem>>, vector<16x6xf32>
    %cst_75 = arith.constant dense<0.000000e+00> : vector<1x6xf32>
    %179 = tpu.matmul %177, %178, %cst_75 {dimension_numbers = #tpu.dot_dimension_numbers<[1], [0], [0], [1], [0, 0, 1, 1], [], []>} : vector<1x16xf32>, vector<16x6xf32>, vector<1x6xf32> -> vector<1x6xf32>
    %c0_76 = arith.constant 0 : index
    %c0_77 = arith.constant 0 : index
    %180 = vector.load %arg8[%c0_76, %c0_77] : memref<1x6xf32, #tpu.memory_space<vmem>>, vector<1x6xf32>
    %181 = arith.addf %179, %180 : vector<1x6xf32>
    %c0_78 = arith.constant 0 : index
    %c0_79 = arith.constant 0 : index
    %c0_80 = arith.constant 0 : index
    %182 = vector.load %arg9[%c0_78, %c0_79, %c0_80] : memref<1x1x6xf32, #tpu.memory_space<vmem>>, vector<1x1x6xf32>
    %183 = vector.shape_cast %182 : vector<1x1x6xf32> to vector<1x6xf32>
    %184 = vector.shape_cast %181 : vector<1x6xf32> to vector<1x1x6xf32>
    tpu.vector_store %arg9[%c0_78, %c0_79, %c0_80], %184 {strides = array<i32>} : memref<1x1x6xf32, #tpu.memory_space<vmem>>, vector<1x1x6xf32>,
    return
  }
  func.func @transform_0(%arg0: i32) -> (i32, i32, i32, i32) {
    %c0_i32 = arith.constant 0 : i32
    %c0_i32_0 = arith.constant 0 : i32
    %c0_i32_1 = arith.constant 0 : i32
    %c0_i32_2 = arith.constant 0 : i32
    return %arg0, %c0_i32, %c0_i32_0, %c0_i32_1 : i32, i32, i32, i32
  }
  func.func @transform_1(%arg0: i32) -> (i32, i32) {
    %c0_i32 = arith.constant 0 : i32
    %c0_i32_0 = arith.constant 0 : i32
    %c0_i32_1 = arith.constant 0 : i32
    return %c0_i32, %c0_i32_0 : i32, i32
  }
  func.func @transform_2(%arg0: i32) -> (i32, i32) {
    %c0_i32 = arith.constant 0 : i32
    %c0_i32_0 = arith.constant 0 : i32
    %c0_i32_1 = arith.constant 0 : i32
    return %c0_i32, %c0_i32_0 : i32, i32
  }
  func.func @transform_3(%arg0: i32) -> (i32, i32) {
    %c0_i32 = arith.constant 0 : i32
    %c0_i32_0 = arith.constant 0 : i32
    %c0_i32_1 = arith.constant 0 : i32
    return %c0_i32, %c0_i32_0 : i32, i32
  }
  func.func @transform_4(%arg0: i32) -> (i32, i32) {
    %c0_i32 = arith.constant 0 : i32
    %c0_i32_0 = arith.constant 0 : i32
    %c0_i32_1 = arith.constant 0 : i32
    return %c0_i32, %c0_i32_0 : i32, i32
  }
  func.func @transform_5(%arg0: i32) -> (i32, i32) {
    %c0_i32 = arith.constant 0 : i32
    %c0_i32_0 = arith.constant 0 : i32
    %c0_i32_1 = arith.constant 0 : i32
    return %c0_i32, %c0_i32_0 : i32, i32
  }
  func.func @transform_6(%arg0: i32) -> (i32, i32) {
    %c0_i32 = arith.constant 0 : i32
    %c0_i32_0 = arith.constant 0 : i32
    %c0_i32_1 = arith.constant 0 : i32
    return %c0_i32, %c0_i32_0 : i32, i32
  }
  func.func @transform_7(%arg0: i32) -> (i32, i32) {
    %c0_i32 = arith.constant 0 : i32
    %c0_i32_0 = arith.constant 0 : i32
    %c0_i32_1 = arith.constant 0 : i32
    return %c0_i32, %c0_i32_0 : i32, i32
  }
  func.func @transform_8(%arg0: i32) -> (i32, i32, i32) {
    %c0_i32 = arith.constant 0 : i32
    %c0_i32_0 = arith.constant 0 : i32
    %c0_i32_1 = arith.constant 0 : i32
    return %arg0, %c0_i32, %c0_i32_0 : i32, i32, i32
  }
}

</mosaic_0001>

<llo_original>
// kernel: temporal_sfno_forward.4
$region0: #{temporal_sfno_forward.4}
  #allocation0 [shape = 'u32[]', space=smem, size = 0x4, offset = 0x4, fixed_abs, tag = 'smem constant byte address 0x4 - core index']
  #allocation1 [shape = 'u32[144,128]{1,0:T(1,128)}', space=vmem, size = 0x12000, scoped, tag = 'internal scratch']
  #allocation2 [shape = 'f32[192,8]{1,0:T(8,128)}', space=vmem, size = 0x18000, scoped, tag = 'scratch operand']
  %s0 = inlined_call_operand.vmem [shape: f32[384,12], index: 0, kind: input, shape index: {}]
  %s1 = inlined_call_operand.vmem [shape: f32[12,8], index: 1, kind: input, shape index: {}]
  %s2 = inlined_call_operand.vmem [shape: f32[1,8], index: 2, kind: input, shape index: {}]
  %s3 = inlined_call_operand.vmem [shape: f32[384,8], index: 3, kind: output, shape index: {}]
  %s4 = sld [smem:[#allocation0]]
  $region53: #{temporal_sfno_forward.4} parent=0
    _
  %s6 = ssub.s32 1, %s4
  %s7 = scalar_select 0, %s6, %s4
  loop: start=0, step=1, limit=4
  $region2: #{temporal_sfno_forward.4} parent=0 // loop_pre_header
    _
  $region3: #{temporal_sfno_forward.4} parent=0 // loop_header
    %s9 = sphi 0, %s13
    %p10 = scmp.ge.s32.totalorder %s9, 4
    %s16 = sphi 0, %s35
    %s17 = sphi 0, %s31
    %s18 = sphi 0, %s27
    %s19 = sphi 0, %s16
    %s20 = sphi 0, %s17
    %s21 = sphi 0, %s18
    %s22 = sphi 0, %s19
    %s23 = sphi 0, %s20
    %s24 = sphi 0, %s21
    %s40 = sphi 0, %s42
    %s43 = sphi 0, %s40
    %s44 = sphi 0, %s43
    %s60 = sphi 0, %s44
    %s68 = sphi 0, %s70
    %s71 = sphi 0, %s68
    %s72 = sphi 0, %s71
    %s88 = sphi 0, %s72
    %s94 = sphi 0, %s96
    %s97 = sphi 0, %s94
    %s98 = sphi 0, %s97
    %s114 = sphi 0, %s98
    %s122 = sphi 0, %s124
    %s125 = sphi 0, %s122
    %s126 = sphi 0, %s125
    %s142 = sphi 0, %s126
  $region4: #{temporal_sfno_forward.4} parent=0 // loop_header_branch
    %12 = sbr.rel (%p10) target = $region8
  $region5: #{temporal_sfno_forward.4} parent=0 // loop_body
    %s14 = ssub.s32 %s9, 1
    %s15 = ssub.s32 %s9, 2
    %s25 = sadd.s32 1, %s18
    %p26 = scmp.ge.s32.totalorder %s25, 1
    %s27 = scalar_select %p26, 0, %s25
    %s28 = sadd.s32 1, %s17
    %s29 = scalar_select %p26, %s28, %s17
    %p30 = scmp.ge.s32.totalorder %s29, 1
    %s31 = scalar_select %p30, 0, %s29
    %s32 = sadd.s32 1, %s16
    %s33 = scalar_select %p30, %s32, %s16
    %p34 = scmp.ge.s32.totalorder %s33, 2
    %s35 = scalar_select %p34, 0, %s33
    %s36 = ssub.s32 %s16, %s35
    %s37 = ssub.s32 %s18, %s27
    %s38 = sor.u32 %s36, %s37
    %p39 = scmp.eq.s32.totalorder %s38, 0
    %s41 = sadd.s32 %s40, 1
    %s42 = scalar_select %p39, %s40, %s41
    %p45 = pneg %p39
    %p46 = scmp.eq.s32.totalorder %s9, 1
    %p47 = por %p45, %p46
    %p48 = scmp.ne.s32.totalorder %s40, %s43
    %p49 = scmp.eq.s32.totalorder %s9, 0
    %p50 = por %p48, %p49
    %p51 = scmp.ne.s32.totalorder %s40, %s43
    %p52 = scmp.eq.s32.totalorder %s14, 1
    %p53 = por %p51, %p52
    %p54 = scmp.ne.s32.totalorder %s43, %s44
    %p55 = scmp.eq.s32.totalorder %s14, 0
    %p56 = por %p54, %p55
    %p57 = scmp.ne.s32.totalorder %s43, %s44
    %p58 = scmp.eq.s32.totalorder %s15, 1
    %p59 = por %p57, %p58
    %p61 = scmp.ne.s32.totalorder %s44, %s60
    %p62 = scmp.eq.s32.totalorder %s15, 0
    %p63 = por %p61, %p62
    %s64 = ssub.s32 %s18, %s27
    %s65 = ssub.s32 %s17, %s31
    %s66 = sor.u32 %s64, %s65
    %p67 = scmp.eq.s32.totalorder %s66, 0
    %s69 = sadd.s32 %s68, 1
    %s70 = scalar_select %p67, %s68, %s69
    %p73 = pneg %p67
    %p74 = scmp.eq.s32.totalorder %s9, 1
    %p75 = por %p73, %p74
    %p76 = scmp.ne.s32.totalorder %s68, %s71
    %p77 = scmp.eq.s32.totalorder %s9, 0
    %p78 = por %p76, %p77
    %p79 = scmp.ne.s32.totalorder %s68, %s71
    %p80 = scmp.eq.s32.totalorder %s14, 1
    %p81 = por %p79, %p80
    %p82 = scmp.ne.s32.totalorder %s71, %s72
    %p83 = scmp.eq.s32.totalorder %s14, 0
    %p84 = por %p82, %p83
    %p85 = scmp.ne.s32.totalorder %s71, %s72
    %p86 = scmp.eq.s32.totalorder %s15, 1
    %p87 = por %p85, %p86
    %p89 = scmp.ne.s32.totalorder %s72, %s88
    %p90 = scmp.eq.s32.totalorder %s15, 0
    %p91 = por %p89, %p90
    %s92 = ssub.s32 %s17, %s31
    %p93 = scmp.eq.s32.totalorder %s92, 0
    %s95 = sadd.s32 %s94, 1
    %s96 = scalar_select %p93, %s94, %s95
    %p99 = pneg %p93
    %p100 = scmp.eq.s32.totalorder %s9, 1
    %p101 = por %p99, %p100
    %p102 = scmp.ne.s32.totalorder %s94, %s97
    %p103 = scmp.eq.s32.totalorder %s9, 0
    %p104 = por %p102, %p103
    %p105 = scmp.ne.s32.totalorder %s94, %s97
    %p106 = scmp.eq.s32.totalorder %s14, 1
    %p107 = por %p105, %p106
    %p108 = scmp.ne.s32.totalorder %s97, %s98
    %p109 = scmp.eq.s32.totalorder %s14, 0
    %p110 = por %p108, %p109
    %p111 = scmp.ne.s32.totalorder %s97, %s98
    %p112 = scmp.eq.s32.totalorder %s15, 1
    %p113 = por %p111, %p112
    %p115 = scmp.ne.s32.totalorder %s98, %s114
    %p116 = scmp.eq.s32.totalorder %s15, 0
    %p117 = por %p115, %p116
    %s118 = ssub.s32 %s16, %s35
    %s119 = ssub.s32 %s17, %s31
    %s120 = sor.u32 %s118, %s119
    %p121 = scmp.eq.s32.totalorder %s120, 0
    %s123 = sadd.s32 %s122, 1
    %s124 = scalar_select %p121, %s122, %s123
    %p127 = pneg %p121
    %p128 = scmp.eq.s32.totalorder %s9, 1
    %p129 = por %p127, %p128
    %p130 = scmp.ne.s32.totalorder %s122, %s125
    %p131 = scmp.eq.s32.totalorder %s9, 0
    %p132 = por %p130, %p131
    %p133 = scmp.ne.s32.totalorder %s122, %s125
    %p134 = scmp.eq.s32.totalorder %s14, 1
    %p135 = por %p133, %p134
    %p136 = scmp.ne.s32.totalorder %s125, %s126
    %p137 = scmp.eq.s32.totalorder %s14, 0
    %p138 = por %p136, %p137
    %p139 = scmp.ne.s32.totalorder %s125, %s126
    %p140 = scmp.eq.s32.totalorder %s15, 1
    %p141 = por %p139, %p140
    %p143 = scmp.ne.s32.totalorder %s126, %s142
    %p144 = scmp.eq.s32.totalorder %s15, 0
    %p145 = por %p143, %p144
    %p146 = scmp.le.s32.totalorder 1, %s9
    %p147 = scmp.lt.s32.totalorder %s9, 3
    %p148 = pnand %p146, %p147
    %p149 = pneg %p148
    // Predicated region
    $region9: #{temporal_sfno_forward.4} parent=5 // pred_check
      _
    $region10: #{temporal_sfno_forward.4} parent=5 // pred_check_branch
      %151 = sbr.rel (%p148) target = $region12
    $region11: #{temporal_sfno_forward.4} parent=5 // pred_region
      %s152 = ssub.s32 %s9, 1
      // Predicated region
      $region13: #{temporal_sfno_forward.4} parent=11 // pred_check
        %p153 = pneg %p84
      $region14: #{temporal_sfno_forward.4} parent=11 // pred_check_branch
        %155 = sbr.rel (%p153) target = $region16
      $region15: #{temporal_sfno_forward.4} parent=11 // pred_region
        %s156 = smul.u32 2, %s21
        %p157 = scmp.lt.s32.totalorder %s156, 1
        %s158 = scalar_select %p157, %s156, 1
        %p159 = scmp.lt.s32.totalorder %s20, 0
        %s160 = scalar_select %p159, %s20, 0
        %s161 = sadd.s32 %s160, %s158
        %s162 = smul.addr %s161, 8
        %s163 = scalar_lea.vmem %s1, %s162
        %s164 = smul.u32 2, %s21
      $region16: #{temporal_sfno_forward.4} parent=11 // pred_fallthru
        _
      // Predicated region
      $region17: #{temporal_sfno_forward.4} parent=11 // pred_check
        %p165 = pneg %p110
      $region18: #{temporal_sfno_forward.4} parent=11 // pred_check_branch
        %167 = sbr.rel (%p165) target = $region20
      $region19: #{temporal_sfno_forward.4} parent=11 // pred_region
        %p168 = scmp.lt.s32.totalorder %s20, 0
        %s169 = scalar_select %p168, %s20, 0
        %s170 = scalar_lea.vmem %s2, %s169
      $region20: #{temporal_sfno_forward.4} parent=11 // pred_fallthru
        _
    $region12: #{temporal_sfno_forward.4} parent=5 // pred_fallthru
      _
    %p171 = scmp.lt.s32.totalorder %s9, 2
    // Predicated region
    $region21: #{temporal_sfno_forward.4} parent=5 // pred_check
      %p172 = pneg %p171
    $region22: #{temporal_sfno_forward.4} parent=5 // pred_check_branch
      %174 = sbr.rel (%p172) target = $region24
    $region23: #{temporal_sfno_forward.4} parent=5 // pred_region
      // Predicated region
      $region25: #{temporal_sfno_forward.4} parent=23 // pred_check
        %p175 = pneg %p50
      $region26: #{temporal_sfno_forward.4} parent=23 // pred_check_branch
        %177 = sbr.rel (%p175) target = $region28
      $region27: #{temporal_sfno_forward.4} parent=23 // pred_region
        %s178 = smul.u32 24, %s16
        %p179 = scmp.lt.s32.totalorder %s178, 47
        %s180 = scalar_select %p179, %s178, 47
        %p181 = scmp.lt.s32.totalorder %s18, 0
        %s182 = scalar_select %p181, %s18, 0
        %s183 = sadd.s32 %s182, %s180
        %s184 = smul.addr %s183, 8
        %s185 = scalar_lea.vmem %s0, %s184
        %s186 = smul.u32 24, %s16
      $region28: #{temporal_sfno_forward.4} parent=23 // pred_fallthru
        _
    $region24: #{temporal_sfno_forward.4} parent=5 // pred_fallthru
      _
    %p187 = scmp.le.s32.totalorder 1, %s9
    %p188 = scmp.lt.s32.totalorder %s9, 3
    %p189 = pnand %p187, %p188
    %p190 = pneg %p189
    // Predicated region
    $region29: #{temporal_sfno_forward.4} parent=5 // pred_check
      _
    $region30: #{temporal_sfno_forward.4} parent=5 // pred_check_branch
      %192 = sbr.rel (%p189) target = $region32
    $region31: #{temporal_sfno_forward.4} parent=5 // pred_region
      %s193 = ssub.s32 %s9, 1
      %s194 = smul.u32 24, %s19
      %p195 = scmp.lt.s32.totalorder %s194, 47
      %s196 = scalar_select %p195, %s194, 47
      %p197 = scmp.lt.s32.totalorder %s21, 0
      %s198 = scalar_select %p197, %s21, 0
      %s199 = sadd.s32 %s198, %s196
      %s200 = smul.addr %s199, 8
      %s201 = scalar_lea.vmem %s0, %s200
      %p202 = pneg %p56
      %p203 = pneg %p53
      %s204 = smul.u32 2, %s21
      %p205 = scmp.lt.s32.totalorder %s204, 1
      %s206 = scalar_select %p205, %s204, 1
      %p207 = scmp.lt.s32.totalorder %s20, 0
      %s208 = scalar_select %p207, %s20, 0
      %s209 = sadd.s32 %s208, %s206
      %s210 = smul.addr %s209, 8
      %s211 = scalar_lea.vmem %s1, %s210
      %p212 = pneg %p84
      %p213 = pneg %p81
      %p214 = scmp.lt.s32.totalorder %s20, 0
      %s215 = scalar_select %p214, %s20, 0
      %s216 = scalar_lea.vmem %s2, %s215
      %p217 = pneg %p110
      %p218 = pneg %p107
      %p219 = pneg %p138
      %p220 = pneg %p135
      %s221 = smul.u32 24, %s19
      %p222 = scmp.lt.s32.totalorder %s221, 47
      %s223 = scalar_select %p222, %s221, 47
      %p224 = scmp.lt.s32.totalorder %s20, 0
      %s225 = scalar_select %p224, %s20, 0
      %s226 = sadd.s32 %s225, %s223
      %s227 = smul.addr %s226, 8
      %s228 = scalar_lea.vmem %s3, %s227
      %s229 = smul.u32 24, %s19
      %p230 = scmp.lt.s32.totalorder %s229, 47
      %s231 = scalar_select %p230, %s229, 47
      %p232 = scmp.lt.s32.totalorder %s21, 0
      %s233 = scalar_select %p232, %s21, 0
      %s234 = sadd.s32 %s233, %s231
      %s235 = smul.addr %s234, 8
      %s236 = scalar_lea.vmem %s0, %s235
      %s237 = smul.u32 24, %s19
      %s238 = smul.u32 2, %s21
      %p239 = scmp.lt.s32.totalorder %s238, 1
      %s240 = scalar_select %p239, %s238, 1
      %p241 = scmp.lt.s32.totalorder %s20, 0
      %s242 = scalar_select %p241, %s20, 0
      %s243 = sadd.s32 %s242, %s240
      %s244 = smul.addr %s243, 8
      %s245 = scalar_lea.vmem %s1, %s244
      %s246 = smul.u32 2, %s21
      %p247 = scmp.lt.s32.totalorder %s20, 0
      %s248 = scalar_select %p247, %s20, 0
      %s249 = scalar_lea.vmem %s2, %s248
      %s250 = smul.u32 24, %s19
      %p251 = scmp.lt.s32.totalorder %s250, 47
      %s252 = scalar_select %p251, %s250, 47
      %p253 = scmp.lt.s32.totalorder %s20, 0
      %s254 = scalar_select %p253, %s20, 0
      %s255 = sadd.s32 %s254, %s252
      %s256 = smul.addr %s255, 8
      %s257 = scalar_lea.vmem %s3, %s256
      %s258 = smul.u32 24, %s19
      %p259 = scmp.eq.s32.totalorder %s21, 0
      // Predicated region
      $region33: #{temporal_sfno_forward.4} parent=31 // pred_check
        %p260 = pneg %p259
      $region34: #{temporal_sfno_forward.4} parent=31 // pred_check_branch
        %262 = sbr.rel (%p260) target = $region36
      $region35: #{temporal_sfno_forward.4} parent=31 // pred_region
        %vm263 = vcmask 64512
        %264 = vst.msk [vmem:[#allocation2] sm:$0xff] %vm263, 0.0
        %265 = vst.msk [vmem:[#allocation2 + $0x8] sm:$0xff] %vm263, 0.0
        %266 = vst.msk [vmem:[#allocation2 + $0x10] sm:$0xff] %vm263, 0.0
        %267 = vst.msk [vmem:[#allocation2 + $0x18] sm:$0xff] %vm263, 0.0
        %268 = vst.msk [vmem:[#allocation2 + $0x20] sm:$0xff] %vm263, 0.0
        %269 = vst.msk [vmem:[#allocation2 + $0x28] sm:$0xff] %vm263, 0.0
        %270 = vst.msk [vmem:[#allocation2 + $0x30] sm:$0xff] %vm263, 0.0
        %271 = vst.msk [vmem:[#allocation2 + $0x38] sm:$0xff] %vm263, 0.0
        %272 = vst.msk [vmem:[#allocation2 + $0x40] sm:$0xff] %vm263, 0.0
        %273 = vst.msk [vmem:[#allocation2 + $0x48] sm:$0xff] %vm263, 0.0
        %274 = vst.msk [vmem:[#allocation2 + $0x50] sm:$0xff] %vm263, 0.0
        %275 = vst.msk [vmem:[#allocation2 + $0x58] sm:$0xff] %vm263, 0.0
        %276 = vst.msk [vmem:[#allocation2 + $0x60] sm:$0xff] %vm263, 0.0
        %277 = vst.msk [vmem:[#allocation2 + $0x68] sm:$0xff] %vm263, 0.0
        %278 = vst.msk [vmem:[#allocation2 + $0x70] sm:$0xff] %vm263, 0.0
        %279 = vst.msk [vmem:[#allocation2 + $0x78] sm:$0xff] %vm263, 0.0
        %280 = vst.msk [vmem:[#allocation2 + $0x80] sm:$0xff] %vm263, 0.0
        %281 = vst.msk [vmem:[#allocation2 + $0x88] sm:$0xff] %vm263, 0.0
        %282 = vst.msk [vmem:[#allocation2 + $0x90] sm:$0xff] %vm263, 0.0
        %283 = vst.msk [vmem:[#allocation2 + $0x98] sm:$0xff] %vm263, 0.0
        %284 = vst.msk [vmem:[#allocation2 + $0xa0] sm:$0xff] %vm263, 0.0
        %285 = vst.msk [vmem:[#allocation2 + $0xa8] sm:$0xff] %vm263, 0.0
        %286 = vst.msk [vmem:[#allocation2 + $0xb0] sm:$0xff] %vm263, 0.0
        %287 = vst.msk [vmem:[#allocation2 + $0xb8] sm:$0xff] %vm263, 0.0
      $region36: #{temporal_sfno_forward.4} parent=31 // pred_fallthru
        _
      %v288 = vld [vmem:[#allocation2] sm:$0xff]
      %v289 = vld [vmem:[#allocation2 + $0x8] sm:$0xff]
      %v290 = vld [vmem:[#allocation2 + $0x10] sm:$0xff]
      %v291 = vld [vmem:[#allocation2 + $0x18] sm:$0xff]
      %v292 = vld [vmem:[#allocation2 + $0x20] sm:$0xff]
      %v293 = vld [vmem:[#allocation2 + $0x28] sm:$0xff]
      %v294 = vld [vmem:[#allocation2 + $0x30] sm:$0xff]
      %v295 = vld [vmem:[#allocation2 + $0x38] sm:$0xff]
      %v296 = vld [vmem:[#allocation2 + $0x40] sm:$0xff]
      %v297 = vld [vmem:[#allocation2 + $0x48] sm:$0xff]
      %v298 = vld [vmem:[#allocation2 + $0x50] sm:$0xff]
      %v299 = vld [vmem:[#allocation2 + $0x58] sm:$0xff]
      %v300 = vld [vmem:[#allocation2 + $0x60] sm:$0xff]
      %v301 = vld [vmem:[#allocation2 + $0x68] sm:$0xff]
      %v302 = vld [vmem:[#allocation2 + $0x70] sm:$0xff]
      %v303 = vld [vmem:[#allocation2 + $0x78] sm:$0xff]
      %v304 = vld [vmem:[#allocation2 + $0x80] sm:$0xff]
      %v305 = vld [vmem:[#allocation2 + $0x88] sm:$0xff]
      %v306 = vld [vmem:[#allocation2 + $0x90] sm:$0xff]
      %v307 = vld [vmem:[#allocation2 + $0x98] sm:$0xff]
      %v308 = vld [vmem:[#allocation2 + $0xa0] sm:$0xff]
      %v309 = vld [vmem:[#allocation2 + $0xa8] sm:$0xff]
      %v310 = vld [vmem:[#allocation2 + $0xb0] sm:$0xff]
      %v311 = vld [vmem:[#allocation2 + $0xb8] sm:$0xff]
      %v312 = vld [vmem:[%s236] sm:$0xff]
      %v313 = vld [vmem:[%s236 + $0x8] sm:$0xff]
      %v314 = vld [vmem:[%s236 + $0x10] sm:$0xff]
      %v315 = vld [vmem:[%s236 + $0x18] sm:$0xff]
      %v316 = vld [vmem:[%s236 + $0x20] sm:$0xff]
      %v317 = vld [vmem:[%s236 + $0x28] sm:$0xff]
      %v318 = vld [vmem:[%s236 + $0x30] sm:$0xff]
      %v319 = vld [vmem:[%s236 + $0x38] sm:$0xff]
      %v320 = vld [vmem:[%s236 + $0x40] sm:$0xff]
      %v321 = vld [vmem:[%s236 + $0x48] sm:$0xff]
      %v322 = vld [vmem:[%s236 + $0x50] sm:$0xff]
      %v323 = vld [vmem:[%s236 + $0x58] sm:$0xff]
      %v324 = vld [vmem:[%s236 + $0x60] sm:$0xff]
      %v325 = vld [vmem:[%s236 + $0x68] sm:$0xff]
      %v326 = vld [vmem:[%s236 + $0x70] sm:$0xff]
      %v327 = vld [vmem:[%s236 + $0x78] sm:$0xff]
      %v328 = vld [vmem:[%s236 + $0x80] sm:$0xff]
      %v329 = vld [vmem:[%s236 + $0x88] sm:$0xff]
      %v330 = vld [vmem:[%s236 + $0x90] sm:$0xff]
      %v331 = vld [vmem:[%s236 + $0x98] sm:$0xff]
      %v332 = vld [vmem:[%s236 + $0xa0] sm:$0xff]
      %v333 = vld [vmem:[%s236 + $0xa8] sm:$0xff]
      %v334 = vld [vmem:[%s236 + $0xb0] sm:$0xff]
      %v335 = vld [vmem:[%s236 + $0xb8] sm:$0xff]
      %v336 = vld [vmem:[%s245] sm:$0xff]
      %v337 = vld [vmem:[%s245 + $0x8] sm:$0xf]
      %vm338 = vcmask 97280
      %v340 = vsel %vm338, %v312, 0
      %v343 = vsel %vm338, %v313, 0
      %v346 = vsel %vm338, %v314, 0
      %v349 = vsel %vm338, %v315, 0
      %v352 = vsel %vm338, %v316, 0
      %v355 = vsel %vm338, %v317, 0
      %v358 = vsel %vm338, %v318, 0
      %v361 = vsel %vm338, %v319, 0
      %v364 = vsel %vm338, %v320, 0
      %v367 = vsel %vm338, %v321, 0
      %v370 = vsel %vm338, %v322, 0
      %v373 = vsel %vm338, %v323, 0
      %v376 = vsel %vm338, %v324, 0
      %v379 = vsel %vm338, %v325, 0
      %v382 = vsel %vm338, %v326, 0
      %v385 = vsel %vm338, %v327, 0
      %v388 = vsel %vm338, %v328, 0
      %v391 = vsel %vm338, %v329, 0
      %v394 = vsel %vm338, %v330, 0
      %v397 = vsel %vm338, %v331, 0
      %v400 = vsel %vm338, %v332, 0
      %v403 = vsel %vm338, %v333, 0
      %v406 = vsel %vm338, %v334, 0
      %v409 = vsel %vm338, %v335, 0
      %vm411 = vcmask 1043456
      %v413 = vsel %vm411, %v337, 0
      %415 = vmatprep.subr.mxu0 0.0
      %416 = vmatpush1.msra.mxu0 %v336
      %417 = vmatprep.subr.mxu0 0.0
      %418 = vmatpush1.msra.mxu0 %v413
      %419 = vmatprep.subr.mxu0 0.0
      %420 = vmatpush1.msra.mxu0 0.0
      %421 = vmatprep.subr.mxu0 0.0
      %422 = vmatpush1.msra.mxu0 0.0
      %423 = vmatprep.subr.mxu0 0.0
      %424 = vmatpush1.msra.mxu0 0.0
      %425 = vmatprep.subr.mxu0 0.0
      %426 = vmatpush1.msra.mxu0 0.0
      %427 = vmatprep.subr.mxu0 0.0
      %428 = vmatpush1.msra.mxu0 0.0
      %429 = vmatprep.subr.mxu0 0.0
      %430 = vmatpush1.msra.mxu0 0.0
      %431 = vmatprep.subr.mxu0 0.0
      %432 = vmatpush1.msra.mxu0 0.0
      %433 = vmatprep.subr.mxu0 0.0
      %434 = vmatpush1.msra.mxu0 0.0
      %435 = vmatprep.subr.mxu0 0.0
      %436 = vmatpush1.msra.mxu0 0.0
      %437 = vmatprep.subr.mxu0 0.0
      %438 = vmatpush1.msra.mxu0 0.0
      %439 = vmatprep.subr.mxu0 0.0
      %440 = vmatpush1.msra.mxu0 0.0
      %441 = vmatprep.subr.mxu0 0.0
      %442 = vmatpush1.msra.mxu0 0.0
      %443 = vmatprep.subr.mxu0 0.0
      %444 = vmatpush1.msra.mxu0 0.0
      %445 = vmatprep.subr.mxu0 0.0
      %446 = vmatpush1.msra.mxu0 0.0
      %447 = vmatprep.subr.mxu0 0.0
      %448 = vmatpush1.msra.mxu0 0.0
      %449 = vmatprep.subr.mxu0 0.0
      %450 = vmatpush1.msra.mxu0 0.0
      %451 = vmatprep.subr.mxu0 0.0
      %452 = vmatpush1.msra.mxu0 0.0
      %453 = vmatprep.subr.mxu0 0.0
      %454 = vmatpush1.msra.mxu0 0.0
      %455 = vmatprep.subr.mxu0 0.0
      %456 = vmatpush1.msra.mxu0 0.0
      %457 = vmatprep.subr.mxu0 0.0
      %458 = vmatpush1.msra.mxu0 0.0
      %459 = vmatprep.subr.mxu0 0.0
      %460 = vmatpush1.msra.mxu0 0.0
      %461 = vmatprep.subr.mxu0 0.0
      %462 = vmatpush1.msra.mxu0 0.0
      %463 = vmatprep.subr.mxu0 0.0
      %464 = vmatpush1.msra.mxu0 0.0
      %465 = vmatprep.subr.mxu0 0.0
      %466 = vmatpush1.msra.mxu0 0.0
      %467 = vmatprep.subr.mxu0 0.0
      %468 = vmatpush1.msra.mxu0 0.0
      %469 = vmatprep.subr.mxu0 0.0
      %470 = vmatpush1.msra.mxu0 0.0
      %471 = vmatprep.subr.mxu0 0.0
      %472 = vmatpush1.msra.mxu0 0.0
      %473 = vmatprep.subr.mxu0 0.0
      %474 = vmatpush1.msra.mxu0 0.0
      %475 = vmatprep.subr.mxu0 0.0
      %476 = vmatpush1.msra.mxu0 0.0
      %477 = vmatprep.subr.mxu0 0.0
      %478 = vmatpush1.msra.mxu0 0.0
      %479 = vmatprep.mubr.f32.mxu0 0.0
      %480 = vmatmul.mubr.f32.gmra.mrb[0].mxu0 %v340
      %v481 = vpop.f32.mrb[0].mxu0
      %v482 = vadd.f32 0.0, %v481
      %v483 = vpop.f32.mrb[0].mxu0
      %484 = vmatprep.mubr.f32.mxu0 0.0
      %485 = vmatmul.mubr.f32.gmra.mrb[0].mxu0 %v343
      %v486 = vpop.f32.mrb[0].mxu0
      %v487 = vadd.f32 0.0, %v486
      %v488 = vpop.f32.mrb[0].mxu0
      %489 = vmatprep.mubr.f32.mxu0 0.0
      %490 = vmatmul.mubr.f32.gmra.mrb[0].mxu0 %v346
      %v491 = vpop.f32.mrb[0].mxu0
      %v492 = vadd.f32 0.0, %v491
      %v493 = vpop.f32.mrb[0].mxu0
      %494 = vmatprep.mubr.f32.mxu0 0.0
      %495 = vmatmul.mubr.f32.gmra.mrb[0].mxu0 %v349
      %v496 = vpop.f32.mrb[0].mxu0
      %v497 = vadd.f32 0.0, %v496
      %v498 = vpop.f32.mrb[0].mxu0
      %499 = vmatprep.mubr.f32.mxu0 0.0
      %500 = vmatmul.mubr.f32.gmra.mrb[0].mxu0 %v352
      %v501 = vpop.f32.mrb[0].mxu0
      %v502 = vadd.f32 0.0, %v501
      %v503 = vpop.f32.mrb[0].mxu0
      %504 = vmatprep.mubr.f32.mxu0 0.0
      %505 = vmatmul.mubr.f32.gmra.mrb[0].mxu0 %v355
      %v506 = vpop.f32.mrb[0].mxu0
      %v507 = vadd.f32 0.0, %v506
      %v508 = vpop.f32.mrb[0].mxu0
      %509 = vmatprep.mubr.f32.mxu0 0.0
      %510 = vmatmul.mubr.f32.gmra.mrb[0].mxu0 %v358
      %v511 = vpop.f32.mrb[0].mxu0
      %v512 = vadd.f32 0.0, %v511
      %v513 = vpop.f32.mrb[0].mxu0
      %514 = vmatprep.mubr.f32.mxu0 0.0
      %515 = vmatmul.mubr.f32.gmra.mrb[0].mxu0 %v361
      %v516 = vpop.f32.mrb[0].mxu0
      %v517 = vadd.f32 0.0, %v516
      %v518 = vpop.f32.mrb[0].mxu0
      %519 = vmatprep.mubr.f32.mxu0 0.0
      %520 = vmatmul.mubr.f32.gmra.mrb[0].mxu0 %v364
      %v521 = vpop.f32.mrb[0].mxu0
      %v522 = vadd.f32 0.0, %v521
      %v523 = vpop.f32.mrb[0].mxu0
      %524 = vmatprep.mubr.f32.mxu0 0.0
      %525 = vmatmul.mubr.f32.gmra.mrb[0].mxu0 %v367
      %v526 = vpop.f32.mrb[0].mxu0
      %v527 = vadd.f32 0.0, %v526
      %v528 = vpop.f32.mrb[0].mxu0
      %529 = vmatprep.mubr.f32.mxu0 0.0
      %530 = vmatmul.mubr.f32.gmra.mrb[0].mxu0 %v370
      %v531 = vpop.f32.mrb[0].mxu0
      %v532 = vadd.f32 0.0, %v531
      %v533 = vpop.f32.mrb[0].mxu0
      %534 = vmatprep.mubr.f32.mxu0 0.0
      %535 = vmatmul.mubr.f32.gmra.mrb[0].mxu0 %v373
      %v536 = vpop.f32.mrb[0].mxu0
      %v537 = vadd.f32 0.0, %v536
      %v538 = vpop.f32.mrb[0].mxu0
      %539 = vmatprep.mubr.f32.mxu0 0.0
      %540 = vmatmul.mubr.f32.gmra.mrb[0].mxu0 %v376
      %v541 = vpop.f32.mrb[0].mxu0
      %v542 = vadd.f32 0.0, %v541
      %v543 = vpop.f32.mrb[0].mxu0
      %544 = vmatprep.mubr.f32.mxu0 0.0
      %545 = vmatmul.mubr.f32.gmra.mrb[0].mxu0 %v379
      %v546 = vpop.f32.mrb[0].mxu0
      %v547 = vadd.f32 0.0, %v546
      %v548 = vpop.f32.mrb[0].mxu0
      %549 = vmatprep.mubr.f32.mxu0 0.0
      %550 = vmatmul.mubr.f32.gmra.mrb[0].mxu0 %v382
      %v551 = vpop.f32.mrb[0].mxu0
      %v552 = vadd.f32 0.0, %v551
      %v553 = vpop.f32.mrb[0].mxu0
      %554 = vmatprep.mubr.f32.mxu0 0.0
      %555 = vmatmul.mubr.f32.gmra.mrb[0].mxu0 %v385
      %v556 = vpop.f32.mrb[0].mxu0
      %v557 = vadd.f32 0.0, %v556
      %v558 = vpop.f32.mrb[0].mxu0
      %559 = vmatprep.mubr.f32.mxu0 0.0
      %560 = vmatmul.mubr.f32.gmra.mrb[0].mxu0 %v388
      %v561 = vpop.f32.mrb[0].mxu0
      %v562 = vadd.f32 0.0, %v561
      %v563 = vpop.f32.mrb[0].mxu0
      %564 = vmatprep.mubr.f32.mxu0 0.0
      %565 = vmatmul.mubr.f32.gmra.mrb[0].mxu0 %v391
      %v566 = vpop.f32.mrb[0].mxu0
      %v567 = vadd.f32 0.0, %v566
      %v568 = vpop.f32.mrb[0].mxu0
      %569 = vmatprep.mubr.f32.mxu0 0.0
      %570 = vmatmul.mubr.f32.gmra.mrb[0].mxu0 %v394
      %v571 = vpop.f32.mrb[0].mxu0
      %v572 = vadd.f32 0.0, %v571
      %v573 = vpop.f32.mrb[0].mxu0
      %574 = vmatprep.mubr.f32.mxu0 0.0
      %575 = vmatmul.mubr.f32.gmra.mrb[0].mxu0 %v397
      %v576 = vpop.f32.mrb[0].mxu0
      %v577 = vadd.f32 0.0, %v576
      %v578 = vpop.f32.mrb[0].mxu0
      %579 = vmatprep.mubr.f32.mxu0 0.0
      %580 = vmatmul.mubr.f32.gmra.mrb[0].mxu0 %v400
      %v581 = vpop.f32.mrb[0].mxu0
      %v582 = vadd.f32 0.0, %v581
      %v583 = vpop.f32.mrb[0].mxu0
      %584 = vmatprep.mubr.f32.mxu0 0.0
      %585 = vmatmul.mubr.f32.gmra.mrb[0].mxu0 %v403
      %v586 = vpop.f32.mrb[0].mxu0
      %v587 = vadd.f32 0.0, %v586
      %v588 = vpop.f32.mrb[0].mxu0
      %589 = vmatprep.mubr.f32.mxu0 0.0
      %590 = vmatmul.mubr.f32.gmra.mrb[0].mxu0 %v406
      %v591 = vpop.f32.mrb[0].mxu0
      %v592 = vadd.f32 0.0, %v591
      %v593 = vpop.f32.mrb[0].mxu0
      %594 = vmatprep.mubr.f32.mxu0 0.0
      %595 = vmatmul.mubr.f32.gmra.mrb[0].mxu0 %v409
      %v596 = vpop.f32.mrb[0].mxu0
      %v597 = vadd.f32 0.0, %v596
      %v598 = vpop.f32.mrb[0].mxu0
      %599 = vdwg.mxu0
      %v600 = vadd.f32 %v288, %v482
      %v601 = vadd.f32 %v289, %v487
      %v602 = vadd.f32 %v290, %v492
      %v603 = vadd.f32 %v291, %v497
      %v604 = vadd.f32 %v292, %v502
      %v605 = vadd.f32 %v293, %v507
      %v606 = vadd.f32 %v294, %v512
      %v607 = vadd.f32 %v295, %v517
      %v608 = vadd.f32 %v296, %v522
      %v609 = vadd.f32 %v297, %v527
      %v610 = vadd.f32 %v298, %v532
      %v611 = vadd.f32 %v299, %v537
      %v612 = vadd.f32 %v300, %v542
      %v613 = vadd.f32 %v301, %v547
      %v614 = vadd.f32 %v302, %v552
      %v615 = vadd.f32 %v303, %v557
      %v616 = vadd.f32 %v304, %v562
      %v617 = vadd.f32 %v305, %v567
      %v618 = vadd.f32 %v306, %v572
      %v619 = vadd.f32 %v307, %v577
      %v620 = vadd.f32 %v308, %v582
      %v621 = vadd.f32 %v309, %v587
      %v622 = vadd.f32 %v310, %v592
      %v623 = vadd.f32 %v311, %v597
      %vm624 = vcmask 64512
      %625 = vst.msk [vmem:[#allocation2] sm:$0xff] %vm624, %v600
      %626 = vst.msk [vmem:[#allocation2 + $0x8] sm:$0xff] %vm624, %v601
      %627 = vst.msk [vmem:[#allocation2 + $0x10] sm:$0xff] %vm624, %v602
      %628 = vst.msk [vmem:[#allocation2 + $0x18] sm:$0xff] %vm624, %v603
      %629 = vst.msk [vmem:[#allocation2 + $0x20] sm:$0xff] %vm624, %v604
      %630 = vst.msk [vmem:[#allocation2 + $0x28] sm:$0xff] %vm624, %v605
      %631 = vst.msk [vmem:[#allocation2 + $0x30] sm:$0xff] %vm624, %v606
      %632 = vst.msk [vmem:[#allocation2 + $0x38] sm:$0xff] %vm624, %v607
      %633 = vst.msk [vmem:[#allocation2 + $0x40] sm:$0xff] %vm624, %v608
      %634 = vst.msk [vmem:[#allocation2 + $0x48] sm:$0xff] %vm624, %v609
      %635 = vst.msk [vmem:[#allocation2 + $0x50] sm:$0xff] %vm624, %v610
      %636 = vst.msk [vmem:[#allocation2 + $0x58] sm:$0xff] %vm624, %v611
      %637 = vst.msk [vmem:[#allocation2 + $0x60] sm:$0xff] %vm624, %v612
      %638 = vst.msk [vmem:[#allocation2 + $0x68] sm:$0xff] %vm624, %v613
      %639 = vst.msk [vmem:[#allocation2 + $0x70] sm:$0xff] %vm624, %v614
      %640 = vst.msk [vmem:[#allocation2 + $0x78] sm:$0xff] %vm624, %v615
      %641 = vst.msk [vmem:[#allocation2 + $0x80] sm:$0xff] %vm624, %v616
      %642 = vst.msk [vmem:[#allocation2 + $0x88] sm:$0xff] %vm624, %v617
      %643 = vst.msk [vmem:[#allocation2 + $0x90] sm:$0xff] %vm624, %v618
      %644 = vst.msk [vmem:[#allocation2 + $0x98] sm:$0xff] %vm624, %v619
      %645 = vst.msk [vmem:[#allocation2 + $0xa0] sm:$0xff] %vm624, %v620
      %646 = vst.msk [vmem:[#allocation2 + $0xa8] sm:$0xff] %vm624, %v621
      %647 = vst.msk [vmem:[#allocation2 + $0xb0] sm:$0xff] %vm624, %v622
      %648 = vst.msk [vmem:[#allocation2 + $0xb8] sm:$0xff] %vm624, %v623
      // Predicated region
      $region37: #{temporal_sfno_forward.4} parent=31 // pred_check
        %p649 = pneg %p259
      $region38: #{temporal_sfno_forward.4} parent=31 // pred_check_branch
        %651 = sbr.rel (%p649) target = $region40
      $region39: #{temporal_sfno_forward.4} parent=31 // pred_region
        %v652 = vld [vmem:[#allocation2] sm:$0xff]
        %v653 = vld [vmem:[#allocation2 + $0x8] sm:$0xff]
        %v654 = vld [vmem:[#allocation2 + $0x10] sm:$0xff]
        %v655 = vld [vmem:[#allocation2 + $0x18] sm:$0xff]
        %v656 = vld [vmem:[#allocation2 + $0x20] sm:$0xff]
        %v657 = vld [vmem:[#allocation2 + $0x28] sm:$0xff]
        %v658 = vld [vmem:[#allocation2 + $0x30] sm:$0xff]
        %v659 = vld [vmem:[#allocation2 + $0x38] sm:$0xff]
        %v660 = vld [vmem:[#allocation2 + $0x40] sm:$0xff]
        %v661 = vld [vmem:[#allocation2 + $0x48] sm:$0xff]
        %v662 = vld [vmem:[#allocation2 + $0x50] sm:$0xff]
        %v663 = vld [vmem:[#allocation2 + $0x58] sm:$0xff]
        %v664 = vld [vmem:[#allocation2 + $0x60] sm:$0xff]
        %v665 = vld [vmem:[#allocation2 + $0x68] sm:$0xff]
        %v666 = vld [vmem:[#allocation2 + $0x70] sm:$0xff]
        %v667 = vld [vmem:[#allocation2 + $0x78] sm:$0xff]
        %v668 = vld [vmem:[#allocation2 + $0x80] sm:$0xff]
        %v669 = vld [vmem:[#allocation2 + $0x88] sm:$0xff]
        %v670 = vld [vmem:[#allocation2 + $0x90] sm:$0xff]
        %v671 = vld [vmem:[#allocation2 + $0x98] sm:$0xff]
        %v672 = vld [vmem:[#allocation2 + $0xa0] sm:$0xff]
        %v673 = vld [vmem:[#allocation2 + $0xa8] sm:$0xff]
        %v674 = vld [vmem:[#allocation2 + $0xb0] sm:$0xff]
        %v675 = vld [vmem:[#allocation2 + $0xb8] sm:$0xff]
        %v676 = vld [vmem:[%s249] sm:$0x1]
        %v678 = vlaneseq
        %v679 = vshrl.u32 %v678, 7
        %v680 = vsub.s32 0, %v679
        %v681 = vrot.slane %v676, %v680
        %v683 = vadd.f32 %v652, %v681
        %v684 = vadd.f32 %v653, %v681
        %v685 = vadd.f32 %v654, %v681
        %v686 = vadd.f32 %v655, %v681
        %v687 = vadd.f32 %v656, %v681
        %v688 = vadd.f32 %v657, %v681
        %v689 = vadd.f32 %v658, %v681
        %v690 = vadd.f32 %v659, %v681
        %v691 = vadd.f32 %v660, %v681
        %v692 = vadd.f32 %v661, %v681
        %v693 = vadd.f32 %v662, %v681
        %v694 = vadd.f32 %v663, %v681
        %v695 = vadd.f32 %v664, %v681
        %v696 = vadd.f32 %v665, %v681
        %v697 = vadd.f32 %v666, %v681
        %v698 = vadd.f32 %v667, %v681
        %v699 = vadd.f32 %v668, %v681
        %v700 = vadd.f32 %v669, %v681
        %v701 = vadd.f32 %v670, %v681
        %v702 = vadd.f32 %v671, %v681
        %v703 = vadd.f32 %v672, %v681
        %v704 = vadd.f32 %v673, %v681
        %v705 = vadd.f32 %v674, %v681
        %v706 = vadd.f32 %v675, %v681
        %707 = vst.msk [vmem:[%s257] sm:$0xff] %vm624, %v683
        %708 = vst.msk [vmem:[%s257 + $0x8] sm:$0xff] %vm624, %v684
        %709 = vst.msk [vmem:[%s257 + $0x10] sm:$0xff] %vm624, %v685
        %710 = vst.msk [vmem:[%s257 + $0x18] sm:$0xff] %vm624, %v686
        %711 = vst.msk [vmem:[%s257 + $0x20] sm:$0xff] %vm624, %v687
        %712 = vst.msk [vmem:[%s257 + $0x28] sm:$0xff] %vm624, %v688
        %713 = vst.msk [vmem:[%s257 + $0x30] sm:$0xff] %vm624, %v689
        %714 = vst.msk [vmem:[%s257 + $0x38] sm:$0xff] %vm624, %v690
        %715 = vst.msk [vmem:[%s257 + $0x40] sm:$0xff] %vm624, %v691
        %716 = vst.msk [vmem:[%s257 + $0x48] sm:$0xff] %vm624, %v692
        %717 = vst.msk [vmem:[%s257 + $0x50] sm:$0xff] %vm624, %v693
        %718 = vst.msk [vmem:[%s257 + $0x58] sm:$0xff] %vm624, %v694
        %719 = vst.msk [vmem:[%s257 + $0x60] sm:$0xff] %vm624, %v695
        %720 = vst.msk [vmem:[%s257 + $0x68] sm:$0xff] %vm624, %v696
        %721 = vst.msk [vmem:[%s257 + $0x70] sm:$0xff] %vm624, %v697
        %722 = vst.msk [vmem:[%s257 + $0x78] sm:$0xff] %vm624, %v698
        %723 = vst.msk [vmem:[%s257 + $0x80] sm:$0xff] %vm624, %v699
        %724 = vst.msk [vmem:[%s257 + $0x88] sm:$0xff] %vm624, %v700
        %725 = vst.msk [vmem:[%s257 + $0x90] sm:$0xff] %vm624, %v701
        %726 = vst.msk [vmem:[%s257 + $0x98] sm:$0xff] %vm624, %v702
        %727 = vst.msk [vmem:[%s257 + $0xa0] sm:$0xff] %vm624, %v703
        %728 = vst.msk [vmem:[%s257 + $0xa8] sm:$0xff] %vm624, %v704
        %729 = vst.msk [vmem:[%s257 + $0xb0] sm:$0xff] %vm624, %v705
        %730 = vst.msk [vmem:[%s257 + $0xb8] sm:$0xff] %vm624, %v706
      $region40: #{temporal_sfno_forward.4} parent=31 // pred_fallthru
        _
      %s731 = smul.u32 24, %s19
      %p732 = scmp.lt.s32.totalorder %s731, 47
      %s733 = scalar_select %p732, %s731, 47
      %p734 = scmp.lt.s32.totalorder %s20, 0
      %s735 = scalar_select %p734, %s20, 0
      %s736 = sadd.s32 %s735, %s733
      %s737 = smul.addr %s736, 8
      %s738 = scalar_lea.vmem %s3, %s737
      // Predicated region
      $region41: #{temporal_sfno_forward.4} parent=31 // pred_check
        %p739 = pneg %p135
      $region42: #{temporal_sfno_forward.4} parent=31 // pred_check_branch
        %741 = sbr.rel (%p739) target = $region44
      $region43: #{temporal_sfno_forward.4} parent=31 // pred_region
        %s742 = smul.u32 24, %s19
      $region44: #{temporal_sfno_forward.4} parent=31 // pred_fallthru
        _
    $region32: #{temporal_sfno_forward.4} parent=5 // pred_fallthru
      _
    %p743 = scmp.le.s32.totalorder 2, %s9
    // Predicated region
    $region45: #{temporal_sfno_forward.4} parent=5 // pred_check
      %p744 = pneg %p743
    $region46: #{temporal_sfno_forward.4} parent=5 // pred_check_branch
      %746 = sbr.rel (%p744) target = $region48
    $region47: #{temporal_sfno_forward.4} parent=5 // pred_region
      %s747 = ssub.s32 %s9, 2
      // Predicated region
      $region49: #{temporal_sfno_forward.4} parent=47 // pred_check
        %p748 = pneg %p141
      $region50: #{temporal_sfno_forward.4} parent=47 // pred_check_branch
        %750 = sbr.rel (%p748) target = $region52
      $region51: #{temporal_sfno_forward.4} parent=47 // pred_region
        %s751 = smul.u32 24, %s22
        %p752 = scmp.lt.s32.totalorder %s751, 47
        %s753 = scalar_select %p752, %s751, 47
        %p754 = scmp.lt.s32.totalorder %s23, 0
        %s755 = scalar_select %p754, %s23, 0
        %s756 = sadd.s32 %s755, %s753
        %s757 = smul.addr %s756, 8
        %s758 = scalar_lea.vmem %s3, %s757
      $region52: #{temporal_sfno_forward.4} parent=47 // pred_fallthru
        _
    $region48: #{temporal_sfno_forward.4} parent=5 // pred_fallthru
      _
  $region6: #{temporal_sfno_forward.4} parent=0 // loop_footer
    %s13 = sadd.s32 1, %s9
  $region7: #{temporal_sfno_forward.4} parent=0 // loop_footer_branch
    %8 = sbr.rel target = $region3
  $region8: #{temporal_sfno_forward.4} parent=0 // loop_exit
    _

// kernel: temporal_sfno_forward.5
$region0: #{temporal_sfno_forward.5}
  #allocation0 [shape = 'u32[]', space=smem, size = 0x4, offset = 0x4, fixed_abs, tag = 'smem constant byte address 0x4 - core index']
  #allocation1 [shape = 'u32[144,128]{1,0:T(1,128)}', space=vmem, size = 0x12000, scoped, tag = 'internal scratch']
  #allocation2 [shape = 'f32[24,4]{1,0:T(8,128)}', space=vmem, size = 0x3000, scoped, tag = 'scratch operand']
  %s0 = inlined_call_operand.vmem [shape: f32[48,64], index: 0, kind: input, shape index: {}]
  %s1 = inlined_call_operand.vmem [shape: f32[64,4], index: 1, kind: input, shape index: {}]
  %s2 = inlined_call_operand.vmem [shape: f32[1,4], index: 2, kind: input, shape index: {}]
  %s3 = inlined_call_operand.vmem [shape: f32[48,4], index: 3, kind: output, shape index: {}]
  %s4 = sld [smem:[#allocation0]]
  $region53: #{temporal_sfno_forward.5} parent=0
    _
  %s6 = ssub.s32 1, %s4
  %s7 = scalar_select 0, %s6, %s4
  loop: start=0, step=1, limit=4
  $region2: #{temporal_sfno_forward.5} parent=0 // loop_pre_header
    _
  $region3: #{temporal_sfno_forward.5} parent=0 // loop_header
    %s9 = sphi 0, %s13
    %p10 = scmp.ge.s32.totalorder %s9, 4
    %s16 = sphi 0, %s35
    %s17 = sphi 0, %s31
    %s18 = sphi 0, %s27
    %s19 = sphi 0, %s16
    %s20 = sphi 0, %s17
    %s21 = sphi 0, %s18
    %s22 = sphi 0, %s19
    %s23 = sphi 0, %s20
    %s24 = sphi 0, %s21
    %s40 = sphi 0, %s42
    %s43 = sphi 0, %s40
    %s44 = sphi 0, %s43
    %s60 = sphi 0, %s44
    %s68 = sphi 0, %s70
    %s71 = sphi 0, %s68
    %s72 = sphi 0, %s71
    %s88 = sphi 0, %s72
    %s94 = sphi 0, %s96
    %s97 = sphi 0, %s94
    %s98 = sphi 0, %s97
    %s114 = sphi 0, %s98
    %s122 = sphi 0, %s124
    %s125 = sphi 0, %s122
    %s126 = sphi 0, %s125
    %s142 = sphi 0, %s126
  $region4: #{temporal_sfno_forward.5} parent=0 // loop_header_branch
    %12 = sbr.rel (%p10) target = $region8
  $region5: #{temporal_sfno_forward.5} parent=0 // loop_body
    %s14 = ssub.s32 %s9, 1
    %s15 = ssub.s32 %s9, 2
    %s25 = sadd.s32 1, %s18
    %p26 = scmp.ge.s32.totalorder %s25, 1
    %s27 = scalar_select %p26, 0, %s25
    %s28 = sadd.s32 1, %s17
    %s29 = scalar_select %p26, %s28, %s17
    %p30 = scmp.ge.s32.totalorder %s29, 1
    %s31 = scalar_select %p30, 0, %s29
    %s32 = sadd.s32 1, %s16
    %s33 = scalar_select %p30, %s32, %s16
    %p34 = scmp.ge.s32.totalorder %s33, 2
    %s35 = scalar_select %p34, 0, %s33
    %s36 = ssub.s32 %s16, %s35
    %s37 = ssub.s32 %s18, %s27
    %s38 = sor.u32 %s36, %s37
    %p39 = scmp.eq.s32.totalorder %s38, 0
    %s41 = sadd.s32 %s40, 1
    %s42 = scalar_select %p39, %s40, %s41
    %p45 = pneg %p39
    %p46 = scmp.eq.s32.totalorder %s9, 1
    %p47 = por %p45, %p46
    %p48 = scmp.ne.s32.totalorder %s40, %s43
    %p49 = scmp.eq.s32.totalorder %s9, 0
    %p50 = por %p48, %p49
    %p51 = scmp.ne.s32.totalorder %s40, %s43
    %p52 = scmp.eq.s32.totalorder %s14, 1
    %p53 = por %p51, %p52
    %p54 = scmp.ne.s32.totalorder %s43, %s44
    %p55 = scmp.eq.s32.totalorder %s14, 0
    %p56 = por %p54, %p55
    %p57 = scmp.ne.s32.totalorder %s43, %s44
    %p58 = scmp.eq.s32.totalorder %s15, 1
    %p59 = por %p57, %p58
    %p61 = scmp.ne.s32.totalorder %s44, %s60
    %p62 = scmp.eq.s32.totalorder %s15, 0
    %p63 = por %p61, %p62
    %s64 = ssub.s32 %s18, %s27
    %s65 = ssub.s32 %s17, %s31
    %s66 = sor.u32 %s64, %s65
    %p67 = scmp.eq.s32.totalorder %s66, 0
    %s69 = sadd.s32 %s68, 1
    %s70 = scalar_select %p67, %s68, %s69
    %p73 = pneg %p67
    %p74 = scmp.eq.s32.totalorder %s9, 1
    %p75 = por %p73, %p74
    %p76 = scmp.ne.s32.totalorder %s68, %s71
    %p77 = scmp.eq.s32.totalorder %s9, 0
    %p78 = por %p76, %p77
    %p79 = scmp.ne.s32.totalorder %s68, %s71
    %p80 = scmp.eq.s32.totalorder %s14, 1
    %p81 = por %p79, %p80
    %p82 = scmp.ne.s32.totalorder %s71, %s72
    %p83 = scmp.eq.s32.totalorder %s14, 0
    %p84 = por %p82, %p83
    %p85 = scmp.ne.s32.totalorder %s71, %s72
    %p86 = scmp.eq.s32.totalorder %s15, 1
    %p87 = por %p85, %p86
    %p89 = scmp.ne.s32.totalorder %s72, %s88
    %p90 = scmp.eq.s32.totalorder %s15, 0
    %p91 = por %p89, %p90
    %s92 = ssub.s32 %s17, %s31
    %p93 = scmp.eq.s32.totalorder %s92, 0
    %s95 = sadd.s32 %s94, 1
    %s96 = scalar_select %p93, %s94, %s95
    %p99 = pneg %p93
    %p100 = scmp.eq.s32.totalorder %s9, 1
    %p101 = por %p99, %p100
    %p102 = scmp.ne.s32.totalorder %s94, %s97
    %p103 = scmp.eq.s32.totalorder %s9, 0
    %p104 = por %p102, %p103
    %p105 = scmp.ne.s32.totalorder %s94, %s97
    %p106 = scmp.eq.s32.totalorder %s14, 1
    %p107 = por %p105, %p106
    %p108 = scmp.ne.s32.totalorder %s97, %s98
    %p109 = scmp.eq.s32.totalorder %s14, 0
    %p110 = por %p108, %p109
    %p111 = scmp.ne.s32.totalorder %s97, %s98
    %p112 = scmp.eq.s32.totalorder %s15, 1
    %p113 = por %p111, %p112
    %p115 = scmp.ne.s32.totalorder %s98, %s114
    %p116 = scmp.eq.s32.totalorder %s15, 0
    %p117 = por %p115, %p116
    %s118 = ssub.s32 %s16, %s35
    %s119 = ssub.s32 %s17, %s31
    %s120 = sor.u32 %s118, %s119
    %p121 = scmp.eq.s32.totalorder %s120, 0
    %s123 = sadd.s32 %s122, 1
    %s124 = scalar_select %p121, %s122, %s123
    %p127 = pneg %p121
    %p128 = scmp.eq.s32.totalorder %s9, 1
    %p129 = por %p127, %p128
    %p130 = scmp.ne.s32.totalorder %s122, %s125
    %p131 = scmp.eq.s32.totalorder %s9, 0
    %p132 = por %p130, %p131
    %p133 = scmp.ne.s32.totalorder %s122, %s125
    %p134 = scmp.eq.s32.totalorder %s14, 1
    %p135 = por %p133, %p134
    %p136 = scmp.ne.s32.totalorder %s125, %s126
    %p137 = scmp.eq.s32.totalorder %s14, 0
    %p138 = por %p136, %p137
    %p139 = scmp.ne.s32.totalorder %s125, %s126
    %p140 = scmp.eq.s32.totalorder %s15, 1
    %p141 = por %p139, %p140
    %p143 = scmp.ne.s32.totalorder %s126, %s142
    %p144 = scmp.eq.s32.totalorder %s15, 0
    %p145 = por %p143, %p144
    %p146 = scmp.le.s32.totalorder 1, %s9
    %p147 = scmp.lt.s32.totalorder %s9, 3
    %p148 = pnand %p146, %p147
    %p149 = pneg %p148
    // Predicated region
    $region9: #{temporal_sfno_forward.5} parent=5 // pred_check
      _
    $region10: #{temporal_sfno_forward.5} parent=5 // pred_check_branch
      %151 = sbr.rel (%p148) target = $region12
    $region11: #{temporal_sfno_forward.5} parent=5 // pred_region
      %s152 = ssub.s32 %s9, 1
      // Predicated region
      $region13: #{temporal_sfno_forward.5} parent=11 // pred_check
        %p153 = pneg %p84
      $region14: #{temporal_sfno_forward.5} parent=11 // pred_check_branch
        %155 = sbr.rel (%p153) target = $region16
      $region15: #{temporal_sfno_forward.5} parent=11 // pred_region
        %s156 = smul.u32 8, %s21
        %p157 = scmp.lt.s32.totalorder %s156, 7
        %s158 = scalar_select %p157, %s156, 7
        %p159 = scmp.lt.s32.totalorder %s20, 0
        %s160 = scalar_select %p159, %s20, 0
        %s161 = sadd.s32 %s160, %s158
        %s162 = smul.addr %s161, 8
        %s163 = scalar_lea.vmem %s1, %s162
        %s164 = smul.u32 8, %s21
      $region16: #{temporal_sfno_forward.5} parent=11 // pred_fallthru
        _
      // Predicated region
      $region17: #{temporal_sfno_forward.5} parent=11 // pred_check
        %p165 = pneg %p110
      $region18: #{temporal_sfno_forward.5} parent=11 // pred_check_branch
        %167 = sbr.rel (%p165) target = $region20
      $region19: #{temporal_sfno_forward.5} parent=11 // pred_region
        %p168 = scmp.lt.s32.totalorder %s20, 0
        %s169 = scalar_select %p168, %s20, 0
        %s170 = scalar_lea.vmem %s2, %s169
      $region20: #{temporal_sfno_forward.5} parent=11 // pred_fallthru
        _
    $region12: #{temporal_sfno_forward.5} parent=5 // pred_fallthru
      _
    %p171 = scmp.lt.s32.totalorder %s9, 2
    // Predicated region
    $region21: #{temporal_sfno_forward.5} parent=5 // pred_check
      %p172 = pneg %p171
    $region22: #{temporal_sfno_forward.5} parent=5 // pred_check_branch
      %174 = sbr.rel (%p172) target = $region24
    $region23: #{temporal_sfno_forward.5} parent=5 // pred_region
      // Predicated region
      $region25: #{temporal_sfno_forward.5} parent=23 // pred_check
        %p175 = pneg %p50
      $region26: #{temporal_sfno_forward.5} parent=23 // pred_check_branch
        %177 = sbr.rel (%p175) target = $region28
      $region27: #{temporal_sfno_forward.5} parent=23 // pred_region
        %s178 = smul.u32 3, %s16
        %p179 = scmp.lt.s32.totalorder %s178, 5
        %s180 = scalar_select %p179, %s178, 5
        %p181 = scmp.lt.s32.totalorder %s18, 0
        %s182 = scalar_select %p181, %s18, 0
        %s183 = sadd.s32 %s182, %s180
        %s184 = smul.addr %s183, 8
        %s185 = scalar_lea.vmem %s0, %s184
        %s186 = smul.u32 3, %s16
      $region28: #{temporal_sfno_forward.5} parent=23 // pred_fallthru
        _
    $region24: #{temporal_sfno_forward.5} parent=5 // pred_fallthru
      _
    %p187 = scmp.le.s32.totalorder 1, %s9
    %p188 = scmp.lt.s32.totalorder %s9, 3
    %p189 = pnand %p187, %p188
    %p190 = pneg %p189
    // Predicated region
    $region29: #{temporal_sfno_forward.5} parent=5 // pred_check
      _
    $region30: #{temporal_sfno_forward.5} parent=5 // pred_check_branch
      %192 = sbr.rel (%p189) target = $region32
    $region31: #{temporal_sfno_forward.5} parent=5 // pred_region
      %s193 = ssub.s32 %s9, 1
      %s194 = smul.u32 3, %s19
      %p195 = scmp.lt.s32.totalorder %s194, 5
      %s196 = scalar_select %p195, %s194, 5
      %p197 = scmp.lt.s32.totalorder %s21, 0
      %s198 = scalar_select %p197, %s21, 0
      %s199 = sadd.s32 %s198, %s196
      %s200 = smul.addr %s199, 8
      %s201 = scalar_lea.vmem %s0, %s200
      %p202 = pneg %p56
      %p203 = pneg %p53
      %s204 = smul.u32 8, %s21
      %p205 = scmp.lt.s32.totalorder %s204, 7
      %s206 = scalar_select %p205, %s204, 7
      %p207 = scmp.lt.s32.totalorder %s20, 0
      %s208 = scalar_select %p207, %s20, 0
      %s209 = sadd.s32 %s208, %s206
      %s210 = smul.addr %s209, 8
      %s211 = scalar_lea.vmem %s1, %s210
      %p212 = pneg %p84
      %p213 = pneg %p81
      %p214 = scmp.lt.s32.totalorder %s20, 0
      %s215 = scalar_select %p214, %s20, 0
      %s216 = scalar_lea.vmem %s2, %s215
      %p217 = pneg %p110
      %p218 = pneg %p107
      %p219 = pneg %p138
      %p220 = pneg %p135
      %s221 = smul.u32 3, %s19
      %p222 = scmp.lt.s32.totalorder %s221, 5
      %s223 = scalar_select %p222, %s221, 5
      %p224 = scmp.lt.s32.totalorder %s20, 0
      %s225 = scalar_select %p224, %s20, 0
      %s226 = sadd.s32 %s225, %s223
      %s227 = smul.addr %s226, 8
      %s228 = scalar_lea.vmem %s3, %s227
      %s229 = smul.u32 3, %s19
      %p230 = scmp.lt.s32.totalorder %s229, 5
      %s231 = scalar_select %p230, %s229, 5
      %p232 = scmp.lt.s32.totalorder %s21, 0
      %s233 = scalar_select %p232, %s21, 0
      %s234 = sadd.s32 %s233, %s231
      %s235 = smul.addr %s234, 8
      %s236 = scalar_lea.vmem %s0, %s235
      %s237 = smul.u32 3, %s19
      %s238 = smul.u32 8, %s21
      %p239 = scmp.lt.s32.totalorder %s238, 7
      %s240 = scalar_select %p239, %s238, 7
      %p241 = scmp.lt.s32.totalorder %s20, 0
      %s242 = scalar_select %p241, %s20, 0
      %s243 = sadd.s32 %s242, %s240
      %s244 = smul.addr %s243, 8
      %s245 = scalar_lea.vmem %s1, %s244
      %s246 = smul.u32 8, %s21
      %p247 = scmp.lt.s32.totalorder %s20, 0
      %s248 = scalar_select %p247, %s20, 0
      %s249 = scalar_lea.vmem %s2, %s248
      %s250 = smul.u32 3, %s19
      %p251 = scmp.lt.s32.totalorder %s250, 5
      %s252 = scalar_select %p251, %s250, 5
      %p253 = scmp.lt.s32.totalorder %s20, 0
      %s254 = scalar_select %p253, %s20, 0
      %s255 = sadd.s32 %s254, %s252
      %s256 = smul.addr %s255, 8
      %s257 = scalar_lea.vmem %s3, %s256
      %s258 = smul.u32 3, %s19
      %p259 = scmp.eq.s32.totalorder %s21, 0
      // Predicated region
      $region33: #{temporal_sfno_forward.5} parent=31 // pred_check
        %p260 = pneg %p259
      $region34: #{temporal_sfno_forward.5} parent=31 // pred_check_branch
        %262 = sbr.rel (%p260) target = $region36
      $region35: #{temporal_sfno_forward.5} parent=31 // pred_region
        %vm263 = vcmask 31744
        %264 = vst.msk [vmem:[#allocation2] sm:$0xff] %vm263, 0.0
        %265 = vst.msk [vmem:[#allocation2 + $0x8] sm:$0xff] %vm263, 0.0
        %266 = vst.msk [vmem:[#allocation2 + $0x10] sm:$0xff] %vm263, 0.0
      $region36: #{temporal_sfno_forward.5} parent=31 // pred_fallthru
        _
      %v267 = vld [vmem:[#allocation2] sm:$0xff]
      %v268 = vld [vmem:[#allocation2 + $0x8] sm:$0xff]
      %v269 = vld [vmem:[#allocation2 + $0x10] sm:$0xff]
      %v270 = vld [vmem:[%s236] sm:$0xff]
      %v271 = vld [vmem:[%s236 + $0x8] sm:$0xff]
      %v272 = vld [vmem:[%s236 + $0x10] sm:$0xff]
      %v273 = vld [vmem:[%s245] sm:$0xff]
      %v274 = vld [vmem:[%s245 + $0x8] sm:$0xff]
      %v275 = vld [vmem:[%s245 + $0x10] sm:$0xff]
      %v276 = vld [vmem:[%s245 + $0x18] sm:$0xff]
      %v277 = vld [vmem:[%s245 + $0x20] sm:$0xff]
      %v278 = vld [vmem:[%s245 + $0x28] sm:$0xff]
      %v279 = vld [vmem:[%s245 + $0x30] sm:$0xff]
      %v280 = vld [vmem:[%s245 + $0x38] sm:$0xff]
      %vm281 = vcmask 523264
      %v283 = vsel %vm281, %v270, 0
      %v286 = vsel %vm281, %v271, 0
      %v289 = vsel %vm281, %v272, 0
      %291 = vmatprep.subr.mxu0 0.0
      %292 = vmatpush1.msra.mxu0 %v273
      %293 = vmatprep.subr.mxu0 0.0
      %294 = vmatpush1.msra.mxu0 %v274
      %295 = vmatprep.subr.mxu0 0.0
      %296 = vmatpush1.msra.mxu0 %v275
      %297 = vmatprep.subr.mxu0 0.0
      %298 = vmatpush1.msra.mxu0 %v276
      %299 = vmatprep.subr.mxu0 0.0
      %300 = vmatpush1.msra.mxu0 %v277
      %301 = vmatprep.subr.mxu0 0.0
      %302 = vmatpush1.msra.mxu0 %v278
      %303 = vmatprep.subr.mxu0 0.0
      %304 = vmatpush1.msra.mxu0 %v279
      %305 = vmatprep.subr.mxu0 0.0
      %306 = vmatpush1.msra.mxu0 %v280
      %307 = vmatprep.subr.mxu0 0.0
      %308 = vmatpush1.msra.mxu0 0.0
      %309 = vmatprep.subr.mxu0 0.0
      %310 = vmatpush1.msra.mxu0 0.0
      %311 = vmatprep.subr.mxu0 0.0
      %312 = vmatpush1.msra.mxu0 0.0
      %313 = vmatprep.subr.mxu0 0.0
      %314 = vmatpush1.msra.mxu0 0.0
      %315 = vmatprep.subr.mxu0 0.0
      %316 = vmatpush1.msra.mxu0 0.0
      %317 = vmatprep.subr.mxu0 0.0
      %318 = vmatpush1.msra.mxu0 0.0
      %319 = vmatprep.subr.mxu0 0.0
      %320 = vmatpush1.msra.mxu0 0.0
      %321 = vmatprep.subr.mxu0 0.0
      %322 = vmatpush1.msra.mxu0 0.0
      %323 = vmatprep.subr.mxu0 0.0
      %324 = vmatpush1.msra.mxu0 0.0
      %325 = vmatprep.subr.mxu0 0.0
      %326 = vmatpush1.msra.mxu0 0.0
      %327 = vmatprep.subr.mxu0 0.0
      %328 = vmatpush1.msra.mxu0 0.0
      %329 = vmatprep.subr.mxu0 0.0
      %330 = vmatpush1.msra.mxu0 0.0
      %331 = vmatprep.subr.mxu0 0.0
      %332 = vmatpush1.msra.mxu0 0.0
      %333 = vmatprep.subr.mxu0 0.0
      %334 = vmatpush1.msra.mxu0 0.0
      %335 = vmatprep.subr.mxu0 0.0
      %336 = vmatpush1.msra.mxu0 0.0
      %337 = vmatprep.subr.mxu0 0.0
      %338 = vmatpush1.msra.mxu0 0.0
      %339 = vmatprep.subr.mxu0 0.0
      %340 = vmatpush1.msra.mxu0 0.0
      %341 = vmatprep.subr.mxu0 0.0
      %342 = vmatpush1.msra.mxu0 0.0
      %343 = vmatprep.subr.mxu0 0.0
      %344 = vmatpush1.msra.mxu0 0.0
      %345 = vmatprep.subr.mxu0 0.0
      %346 = vmatpush1.msra.mxu0 0.0
      %347 = vmatprep.subr.mxu0 0.0
      %348 = vmatpush1.msra.mxu0 0.0
      %349 = vmatprep.subr.mxu0 0.0
      %350 = vmatpush1.msra.mxu0 0.0
      %351 = vmatprep.subr.mxu0 0.0
      %352 = vmatpush1.msra.mxu0 0.0
      %353 = vmatprep.subr.mxu0 0.0
      %354 = vmatpush1.msra.mxu0 0.0
      %355 = vmatprep.mubr.f32.mxu0 0.0
      %356 = vmatmul.mubr.f32.gmra.mrb[0].mxu0 %v283
      %v357 = vpop.f32.mrb[0].mxu0
      %v358 = vadd.f32 0.0, %v357
      %v359 = vpop.f32.mrb[0].mxu0
      %360 = vmatprep.mubr.f32.mxu0 0.0
      %361 = vmatmul.mubr.f32.gmra.mrb[0].mxu0 %v286
      %v362 = vpop.f32.mrb[0].mxu0
      %v363 = vadd.f32 0.0, %v362
      %v364 = vpop.f32.mrb[0].mxu0
      %365 = vmatprep.mubr.f32.mxu0 0.0
      %366 = vmatmul.mubr.f32.gmra.mrb[0].mxu0 %v289
      %v367 = vpop.f32.mrb[0].mxu0
      %v368 = vadd.f32 0.0, %v367
      %v369 = vpop.f32.mrb[0].mxu0
      %370 = vdwg.mxu0
      %v371 = vadd.f32 %v267, %v358
      %v372 = vadd.f32 %v268, %v363
      %v373 = vadd.f32 %v269, %v368
      %vm374 = vcmask 31744
      %375 = vst.msk [vmem:[#allocation2] sm:$0xff] %vm374, %v371
      %376 = vst.msk [vmem:[#allocation2 + $0x8] sm:$0xff] %vm374, %v372
      %377 = vst.msk [vmem:[#allocation2 + $0x10] sm:$0xff] %vm374, %v373
      // Predicated region
      $region37: #{temporal_sfno_forward.5} parent=31 // pred_check
        %p378 = pneg %p259
      $region38: #{temporal_sfno_forward.5} parent=31 // pred_check_branch
        %380 = sbr.rel (%p378) target = $region40
      $region39: #{temporal_sfno_forward.5} parent=31 // pred_region
        %v381 = vld [vmem:[#allocation2] sm:$0xff]
        %v382 = vld [vmem:[#allocation2 + $0x8] sm:$0xff]
        %v383 = vld [vmem:[#allocation2 + $0x10] sm:$0xff]
        %v384 = vld [vmem:[%s249] sm:$0x1]
        %v386 = vlaneseq
        %v387 = vshrl.u32 %v386, 7
        %v388 = vsub.s32 0, %v387
        %v389 = vrot.slane %v384, %v388
        %v391 = vadd.f32 %v381, %v389
        %v392 = vadd.f32 %v382, %v389
        %v393 = vadd.f32 %v383, %v389
        %394 = vst.msk [vmem:[%s257] sm:$0xff] %vm374, %v391
        %395 = vst.msk [vmem:[%s257 + $0x8] sm:$0xff] %vm374, %v392
        %396 = vst.msk [vmem:[%s257 + $0x10] sm:$0xff] %vm374, %v393
      $region40: #{temporal_sfno_forward.5} parent=31 // pred_fallthru
        _
      %s397 = smul.u32 3, %s19
      %p398 = scmp.lt.s32.totalorder %s397, 5
      %s399 = scalar_select %p398, %s397, 5
      %p400 = scmp.lt.s32.totalorder %s20, 0
      %s401 = scalar_select %p400, %s20, 0
      %s402 = sadd.s32 %s401, %s399
      %s403 = smul.addr %s402, 8
      %s404 = scalar_lea.vmem %s3, %s403
      // Predicated region
      $region41: #{temporal_sfno_forward.5} parent=31 // pred_check
        %p405 = pneg %p135
      $region42: #{temporal_sfno_forward.5} parent=31 // pred_check_branch
        %407 = sbr.rel (%p405) target = $region44
      $region43: #{temporal_sfno_forward.5} parent=31 // pred_region
        %s408 = smul.u32 3, %s19
      $region44: #{temporal_sfno_forward.5} parent=31 // pred_fallthru
        _
    $region32: #{temporal_sfno_forward.5} parent=5 // pred_fallthru
      _
    %p409 = scmp.le.s32.totalorder 2, %s9
    // Predicated region
    $region45: #{temporal_sfno_forward.5} parent=5 // pred_check
      %p410 = pneg %p409
    $region46: #{temporal_sfno_forward.5} parent=5 // pred_check_branch
      %412 = sbr.rel (%p410) target = $region48
    $region47: #{temporal_sfno_forward.5} parent=5 // pred_region
      %s413 = ssub.s32 %s9, 2
      // Predicated region
      $region49: #{temporal_sfno_forward.5} parent=47 // pred_check
        %p414 = pneg %p141
      $region50: #{temporal_sfno_forward.5} parent=47 // pred_check_branch
        %416 = sbr.rel (%p414) target = $region52
      $region51: #{temporal_sfno_forward.5} parent=47 // pred_region
        %s417 = smul.u32 3, %s22
        %p418 = scmp.lt.s32.totalorder %s417, 5
        %s419 = scalar_select %p418, %s417, 5
        %p420 = scmp.lt.s32.totalorder %s23, 0
        %s421 = scalar_select %p420, %s23, 0
        %s422 = sadd.s32 %s421, %s419
        %s423 = smul.addr %s422, 8
        %s424 = scalar_lea.vmem %s3, %s423
      $region52: #{temporal_sfno_forward.5} parent=47 // pred_fallthru
        _
    $region48: #{temporal_sfno_forward.5} parent=5 // pred_fallthru
      _
  $region6: #{temporal_sfno_forward.5} parent=0 // loop_footer
    %s13 = sadd.s32 1, %s9
  $region7: #{temporal_sfno_forward.5} parent=0 // loop_footer_branch
    %8 = sbr.rel target = $region3
  $region8: #{temporal_sfno_forward.5} parent=0 // loop_exit
    _

// kernel: temporal_sfno_forward.7
$region0: #{temporal_sfno_forward.7}
  #allocation0 [shape = 'u32[]', space=smem, size = 0x4, offset = 0x4, fixed_abs, tag = 'smem constant byte address 0x4 - core index']
  #allocation1 [shape = 'u32[144,128]{1,0:T(1,128)}', space=vmem, size = 0x12000, scoped, tag = 'internal scratch']
  %s0 = inlined_call_operand.vmem [shape: f32[2,3,1,8], index: 0, kind: input, shape index: {}]
  %s1 = inlined_call_operand.vmem [shape: f32[8,32], index: 1, kind: input, shape index: {}]
  %s2 = inlined_call_operand.vmem [shape: f32[8,32], index: 2, kind: input, shape index: {}]
  %s3 = inlined_call_operand.vmem [shape: f32[1,32], index: 3, kind: input, shape index: {}]
  %s4 = inlined_call_operand.vmem [shape: f32[8,16], index: 4, kind: input, shape index: {}]
  %s5 = inlined_call_operand.vmem [shape: f32[1,16], index: 5, kind: input, shape index: {}]
  %s6 = inlined_call_operand.vmem [shape: f32[16,6], index: 6, kind: input, shape index: {}]
  %s7 = inlined_call_operand.vmem [shape: f32[1,6], index: 7, kind: input, shape index: {}]
  %s8 = inlined_call_operand.vmem [shape: f32[2,1,6], index: 8, kind: output, shape index: {}]
  %s9 = sld [smem:[#allocation0]]
  $region65: #{temporal_sfno_forward.7} parent=0
    _
  %s11 = ssub.s32 1, %s9
  %s12 = scalar_select 0, %s11, %s9
  loop: start=0, step=1, limit=4
  $region2: #{temporal_sfno_forward.7} parent=0 // loop_pre_header
    _
  $region3: #{temporal_sfno_forward.7} parent=0 // loop_header
    %s14 = sphi 0, %s18
    %p15 = scmp.ge.s32.totalorder %s14, 4
    %s24 = sphi 0, %s26
    %s27 = sphi 0, %s24
    %s28 = sphi 0, %s27
    %s44 = sphi 0, %s28
    %s48 = sphi 0, %s48
    %s50 = sphi 0, %s48
    %s51 = sphi 0, %s50
    %s65 = sphi 0, %s51
    %s69 = sphi 0, %s69
    %s71 = sphi 0, %s69
    %s72 = sphi 0, %s71
    %s86 = sphi 0, %s72
    %s90 = sphi 0, %s90
    %s92 = sphi 0, %s90
    %s93 = sphi 0, %s92
    %s107 = sphi 0, %s93
    %s111 = sphi 0, %s111
    %s113 = sphi 0, %s111
    %s114 = sphi 0, %s113
    %s128 = sphi 0, %s114
    %s132 = sphi 0, %s132
    %s134 = sphi 0, %s132
    %s135 = sphi 0, %s134
    %s149 = sphi 0, %s135
    %s153 = sphi 0, %s153
    %s155 = sphi 0, %s153
    %s156 = sphi 0, %s155
    %s170 = sphi 0, %s156
    %s174 = sphi 0, %s174
    %s176 = sphi 0, %s174
    %s177 = sphi 0, %s176
    %s191 = sphi 0, %s177
    %s197 = sphi 0, %s199
    %s200 = sphi 0, %s197
    %s201 = sphi 0, %s200
    %s217 = sphi 0, %s201
  $region4: #{temporal_sfno_forward.7} parent=0 // loop_header_branch
    %17 = sbr.rel (%p15) target = $region8
  $region5: #{temporal_sfno_forward.7} parent=0 // loop_body
    %s19 = ssub.s32 %s14, 1
    %s20 = ssub.s32 %s14, 2
    %s21 = sadd.s32 %s14, 1
    %s22 = ssub.s32 %s14, %s21
    %p23 = scmp.eq.s32.totalorder %s22, 0
    %s25 = sadd.s32 %s24, 1
    %s26 = scalar_select %p23, %s24, %s25
    %p29 = pneg %p23
    %p30 = scmp.eq.s32.totalorder %s14, 1
    %p31 = por %p29, %p30
    %p32 = scmp.ne.s32.totalorder %s24, %s27
    %p33 = scmp.eq.s32.totalorder %s14, 0
    %p34 = por %p32, %p33
    %p35 = scmp.ne.s32.totalorder %s24, %s27
    %p36 = scmp.eq.s32.totalorder %s19, 1
    %p37 = por %p35, %p36
    %p38 = scmp.ne.s32.totalorder %s27, %s28
    %p39 = scmp.eq.s32.totalorder %s19, 0
    %p40 = por %p38, %p39
    %p41 = scmp.ne.s32.totalorder %s27, %s28
    %p42 = scmp.eq.s32.totalorder %s20, 1
    %p43 = por %p41, %p42
    %p45 = scmp.ne.s32.totalorder %s28, %s44
    %p46 = scmp.eq.s32.totalorder %s20, 0
    %p47 = por %p45, %p46
    %s49 = sadd.s32 %s48, 1
    %p52 = scmp.eq.s32.totalorder %s14, 1
    %p53 = scmp.ne.s32.totalorder %s48, %s50
    %p54 = scmp.eq.s32.totalorder %s14, 0
    %p55 = por %p53, %p54
    %p56 = scmp.ne.s32.totalorder %s48, %s50
    %p57 = scmp.eq.s32.totalorder %s19, 1
    %p58 = por %p56, %p57
    %p59 = scmp.ne.s32.totalorder %s50, %s51
    %p60 = scmp.eq.s32.totalorder %s19, 0
    %p61 = por %p59, %p60
    %p62 = scmp.ne.s32.totalorder %s50, %s51
    %p63 = scmp.eq.s32.totalorder %s20, 1
    %p64 = por %p62, %p63
    %p66 = scmp.ne.s32.totalorder %s51, %s65
    %p67 = scmp.eq.s32.totalorder %s20, 0
    %p68 = por %p66, %p67
    %s70 = sadd.s32 %s69, 1
    %p73 = scmp.eq.s32.totalorder %s14, 1
    %p74 = scmp.ne.s32.totalorder %s69, %s71
    %p75 = scmp.eq.s32.totalorder %s14, 0
    %p76 = por %p74, %p75
    %p77 = scmp.ne.s32.totalorder %s69, %s71
    %p78 = scmp.eq.s32.totalorder %s19, 1
    %p79 = por %p77, %p78
    %p80 = scmp.ne.s32.totalorder %s71, %s72
    %p81 = scmp.eq.s32.totalorder %s19, 0
    %p82 = por %p80, %p81
    %p83 = scmp.ne.s32.totalorder %s71, %s72
    %p84 = scmp.eq.s32.totalorder %s20, 1
    %p85 = por %p83, %p84
    %p87 = scmp.ne.s32.totalorder %s72, %s86
    %p88 = scmp.eq.s32.totalorder %s20, 0
    %p89 = por %p87, %p88
    %s91 = sadd.s32 %s90, 1
    %p94 = scmp.eq.s32.totalorder %s14, 1
    %p95 = scmp.ne.s32.totalorder %s90, %s92
    %p96 = scmp.eq.s32.totalorder %s14, 0
    %p97 = por %p95, %p96
    %p98 = scmp.ne.s32.totalorder %s90, %s92
    %p99 = scmp.eq.s32.totalorder %s19, 1
    %p100 = por %p98, %p99
    %p101 = scmp.ne.s32.totalorder %s92, %s93
    %p102 = scmp.eq.s32.totalorder %s19, 0
    %p103 = por %p101, %p102
    %p104 = scmp.ne.s32.totalorder %s92, %s93
    %p105 = scmp.eq.s32.totalorder %s20, 1
    %p106 = por %p104, %p105
    %p108 = scmp.ne.s32.totalorder %s93, %s107
    %p109 = scmp.eq.s32.totalorder %s20, 0
    %p110 = por %p108, %p109
    %s112 = sadd.s32 %s111, 1
    %p115 = scmp.eq.s32.totalorder %s14, 1
    %p116 = scmp.ne.s32.totalorder %s111, %s113
    %p117 = scmp.eq.s32.totalorder %s14, 0
    %p118 = por %p116, %p117
    %p119 = scmp.ne.s32.totalorder %s111, %s113
    %p120 = scmp.eq.s32.totalorder %s19, 1
    %p121 = por %p119, %p120
    %p122 = scmp.ne.s32.totalorder %s113, %s114
    %p123 = scmp.eq.s32.totalorder %s19, 0
    %p124 = por %p122, %p123
    %p125 = scmp.ne.s32.totalorder %s113, %s114
    %p126 = scmp.eq.s32.totalorder %s20, 1
    %p127 = por %p125, %p126
    %p129 = scmp.ne.s32.totalorder %s114, %s128
    %p130 = scmp.eq.s32.totalorder %s20, 0
    %p131 = por %p129, %p130
    %s133 = sadd.s32 %s132, 1
    %p136 = scmp.eq.s32.totalorder %s14, 1
    %p137 = scmp.ne.s32.totalorder %s132, %s134
    %p138 = scmp.eq.s32.totalorder %s14, 0
    %p139 = por %p137, %p138
    %p140 = scmp.ne.s32.totalorder %s132, %s134
    %p141 = scmp.eq.s32.totalorder %s19, 1
    %p142 = por %p140, %p141
    %p143 = scmp.ne.s32.totalorder %s134, %s135
    %p144 = scmp.eq.s32.totalorder %s19, 0
    %p145 = por %p143, %p144
    %p146 = scmp.ne.s32.totalorder %s134, %s135
    %p147 = scmp.eq.s32.totalorder %s20, 1
    %p148 = por %p146, %p147
    %p150 = scmp.ne.s32.totalorder %s135, %s149
    %p151 = scmp.eq.s32.totalorder %s20, 0
    %p152 = por %p150, %p151
    %s154 = sadd.s32 %s153, 1
    %p157 = scmp.eq.s32.totalorder %s14, 1
    %p158 = scmp.ne.s32.totalorder %s153, %s155
    %p159 = scmp.eq.s32.totalorder %s14, 0
    %p160 = por %p158, %p159
    %p161 = scmp.ne.s32.totalorder %s153, %s155
    %p162 = scmp.eq.s32.totalorder %s19, 1
    %p163 = por %p161, %p162
    %p164 = scmp.ne.s32.totalorder %s155, %s156
    %p165 = scmp.eq.s32.totalorder %s19, 0
    %p166 = por %p164, %p165
    %p167 = scmp.ne.s32.totalorder %s155, %s156
    %p168 = scmp.eq.s32.totalorder %s20, 1
    %p169 = por %p167, %p168
    %p171 = scmp.ne.s32.totalorder %s156, %s170
    %p172 = scmp.eq.s32.totalorder %s20, 0
    %p173 = por %p171, %p172
    %s175 = sadd.s32 %s174, 1
    %p178 = scmp.eq.s32.totalorder %s14, 1
    %p179 = scmp.ne.s32.totalorder %s174, %s176
    %p180 = scmp.eq.s32.totalorder %s14, 0
    %p181 = por %p179, %p180
    %p182 = scmp.ne.s32.totalorder %s174, %s176
    %p183 = scmp.eq.s32.totalorder %s19, 1
    %p184 = por %p182, %p183
    %p185 = scmp.ne.s32.totalorder %s176, %s177
    %p186 = scmp.eq.s32.totalorder %s19, 0
    %p187 = por %p185, %p186
    %p188 = scmp.ne.s32.totalorder %s176, %s177
    %p189 = scmp.eq.s32.totalorder %s20, 1
    %p190 = por %p188, %p189
    %p192 = scmp.ne.s32.totalorder %s177, %s191
    %p193 = scmp.eq.s32.totalorder %s20, 0
    %p194 = por %p192, %p193
    %s195 = ssub.s32 %s14, %s21
    %p196 = scmp.eq.s32.totalorder %s195, 0
    %s198 = sadd.s32 %s197, 1
    %s199 = scalar_select %p196, %s197, %s198
    %p202 = pneg %p196
    %p203 = scmp.eq.s32.totalorder %s14, 1
    %p204 = por %p202, %p203
    %p205 = scmp.ne.s32.totalorder %s197, %s200
    %p206 = scmp.eq.s32.totalorder %s14, 0
    %p207 = por %p205, %p206
    %p208 = scmp.ne.s32.totalorder %s197, %s200
    %p209 = scmp.eq.s32.totalorder %s19, 1
    %p210 = por %p208, %p209
    %p211 = scmp.ne.s32.totalorder %s200, %s201
    %p212 = scmp.eq.s32.totalorder %s19, 0
    %p213 = por %p211, %p212
    %p214 = scmp.ne.s32.totalorder %s200, %s201
    %p215 = scmp.eq.s32.totalorder %s20, 1
    %p216 = por %p214, %p215
    %p218 = scmp.ne.s32.totalorder %s201, %s217
    %p219 = scmp.eq.s32.totalorder %s20, 0
    %p220 = por %p218, %p219
    %p221 = scmp.le.s32.totalorder 1, %s14
    %p222 = scmp.lt.s32.totalorder %s14, 3
    %p223 = pnand %p221, %p222
    %p224 = pneg %p223
    // Predicated region
    $region9: #{temporal_sfno_forward.7} parent=5 // pred_check
      _
    $region10: #{temporal_sfno_forward.7} parent=5 // pred_check_branch
      %226 = sbr.rel (%p223) target = $region12
    $region11: #{temporal_sfno_forward.7} parent=5 // pred_region
      %s227 = ssub.s32 %s14, 1
      // Predicated region
      $region13: #{temporal_sfno_forward.7} parent=11 // pred_check
        %p228 = pneg %p61
      $region14: #{temporal_sfno_forward.7} parent=11 // pred_check_branch
        %230 = sbr.rel (%p228) target = $region16
      $region15: #{temporal_sfno_forward.7} parent=11 // pred_region
        _
      $region16: #{temporal_sfno_forward.7} parent=11 // pred_fallthru
        _
      // Predicated region
      $region17: #{temporal_sfno_forward.7} parent=11 // pred_check
        %p231 = pneg %p82
      $region18: #{temporal_sfno_forward.7} parent=11 // pred_check_branch
        %233 = sbr.rel (%p231) target = $region20
      $region19: #{temporal_sfno_forward.7} parent=11 // pred_region
        _
      $region20: #{temporal_sfno_forward.7} parent=11 // pred_fallthru
        _
      // Predicated region
      $region21: #{temporal_sfno_forward.7} parent=11 // pred_check
        %p234 = pneg %p103
      $region22: #{temporal_sfno_forward.7} parent=11 // pred_check_branch
        %236 = sbr.rel (%p234) target = $region24
      $region23: #{temporal_sfno_forward.7} parent=11 // pred_region
        _
      $region24: #{temporal_sfno_forward.7} parent=11 // pred_fallthru
        _
      // Predicated region
      $region25: #{temporal_sfno_forward.7} parent=11 // pred_check
        %p237 = pneg %p124
      $region26: #{temporal_sfno_forward.7} parent=11 // pred_check_branch
        %239 = sbr.rel (%p237) target = $region28
      $region27: #{temporal_sfno_forward.7} parent=11 // pred_region
        _
      $region28: #{temporal_sfno_forward.7} parent=11 // pred_fallthru
        _
      // Predicated region
      $region29: #{temporal_sfno_forward.7} parent=11 // pred_check
        %p240 = pneg %p145
      $region30: #{temporal_sfno_forward.7} parent=11 // pred_check_branch
        %242 = sbr.rel (%p240) target = $region32
      $region31: #{temporal_sfno_forward.7} parent=11 // pred_region
        _
      $region32: #{temporal_sfno_forward.7} parent=11 // pred_fallthru
        _
      // Predicated region
      $region33: #{temporal_sfno_forward.7} parent=11 // pred_check
        %p243 = pneg %p166
      $region34: #{temporal_sfno_forward.7} parent=11 // pred_check_branch
        %245 = sbr.rel (%p243) target = $region36
      $region35: #{temporal_sfno_forward.7} parent=11 // pred_region
        _
      $region36: #{temporal_sfno_forward.7} parent=11 // pred_fallthru
        _
      // Predicated region
      $region37: #{temporal_sfno_forward.7} parent=11 // pred_check
        %p246 = pneg %p187
      $region38: #{temporal_sfno_forward.7} parent=11 // pred_check_branch
        %248 = sbr.rel (%p246) target = $region40
      $region39: #{temporal_sfno_forward.7} parent=11 // pred_region
        _
      $region40: #{temporal_sfno_forward.7} parent=11 // pred_fallthru
        _
    $region12: #{temporal_sfno_forward.7} parent=5 // pred_fallthru
      _
    %p249 = scmp.lt.s32.totalorder %s14, 2
    // Predicated region
    $region41: #{temporal_sfno_forward.7} parent=5 // pred_check
      %p250 = pneg %p249
    $region42: #{temporal_sfno_forward.7} parent=5 // pred_check_branch
      %252 = sbr.rel (%p250) target = $region44
    $region43: #{temporal_sfno_forward.7} parent=5 // pred_region
      // Predicated region
      $region45: #{temporal_sfno_forward.7} parent=43 // pred_check
        %p253 = pneg %p34
      $region46: #{temporal_sfno_forward.7} parent=43 // pred_check_branch
        %255 = sbr.rel (%p253) target = $region48
      $region47: #{temporal_sfno_forward.7} parent=43 // pred_region
        %p256 = scmp.lt.s32.totalorder %s14, 1
        %s257 = scalar_select %p256, %s14, 1
        %s258 = smul.addr %s257, 3
        %s259 = scalar_lea.vmem %s0, %s258
      $region48: #{temporal_sfno_forward.7} parent=43 // pred_fallthru
        _
    $region44: #{temporal_sfno_forward.7} parent=5 // pred_fallthru
      _
    %p260 = scmp.le.s32.totalorder 1, %s14
    %p261 = scmp.lt.s32.totalorder %s14, 3
    %p262 = pnand %p260, %p261
    %p263 = pneg %p262
    // Predicated region
    $region49: #{temporal_sfno_forward.7} parent=5 // pred_check
      _
    $region50: #{temporal_sfno_forward.7} parent=5 // pred_check_branch
      %265 = sbr.rel (%p262) target = $region52
    $region51: #{temporal_sfno_forward.7} parent=5 // pred_region
      %s266 = ssub.s32 %s14, 1
      %p267 = scmp.lt.s32.totalorder %s19, 1
      %s268 = scalar_select %p267, %s19, 1
      %s269 = smul.addr %s268, 3
      %s270 = scalar_lea.vmem %s0, %s269
      %p271 = pneg %p40
      %p272 = pneg %p37
      %p273 = pneg %p61
      %p274 = pneg %p58
      %p275 = pneg %p82
      %p276 = pneg %p79
      %p277 = pneg %p103
      %p278 = pneg %p100
      %p279 = pneg %p124
      %p280 = pneg %p121
      %p281 = pneg %p145
      %p282 = pneg %p142
      %p283 = pneg %p166
      %p284 = pneg %p163
      %p285 = pneg %p187
      %p286 = pneg %p184
      %p287 = pneg %p213
      %p288 = pneg %p210
      %p289 = scmp.lt.s32.totalorder %s19, 1
      %s290 = scalar_select %p289, %s19, 1
      %s291 = scalar_lea.vmem %s8, %s290
      %p292 = scmp.lt.s32.totalorder %s19, 1
      %s293 = scalar_select %p292, %s19, 1
      %s294 = smul.addr %s293, 3
      %s295 = scalar_lea.vmem %s0, %s294
      %p296 = scmp.lt.s32.totalorder %s19, 1
      %s297 = scalar_select %p296, %s19, 1
      %s298 = scalar_lea.vmem %s8, %s297
      %v299 = vld [vmem:[%s1] sm:$0xff]
      %v300 = vld [vmem:[%s2] sm:$0xff]
      %v301 = vld [vmem:[%s3] sm:$0x1]
      %v302 = vld [vmem:[%s295] sm:$0x1]
      %vm303 = vcmask 64512
      %v305 = vsel %vm303, 0.0, 0
      %307 = vmatprep.subr.mxu0 0.0
      %308 = vmatpush1.msra.mxu0 %v300
      %309 = vmatprep.subr.mxu0 0.0
      %310 = vmatpush1.msra.mxu0 0.0
      %311 = vmatprep.subr.mxu0 0.0
      %312 = vmatpush1.msra.mxu0 0.0
      %313 = vmatprep.subr.mxu0 0.0
      %314 = vmatpush1.msra.mxu0 0.0
      %315 = vmatprep.subr.mxu0 0.0
      %316 = vmatpush1.msra.mxu0 0.0
      %317 = vmatprep.subr.mxu0 0.0
      %318 = vmatpush1.msra.mxu0 0.0
      %319 = vmatprep.subr.mxu0 0.0
      %320 = vmatpush1.msra.mxu0 0.0
      %321 = vmatprep.subr.mxu0 0.0
      %322 = vmatpush1.msra.mxu0 0.0
      %323 = vmatprep.subr.mxu0 0.0
      %324 = vmatpush1.msra.mxu0 0.0
      %325 = vmatprep.subr.mxu0 0.0
      %326 = vmatpush1.msra.mxu0 0.0
      %327 = vmatprep.subr.mxu0 0.0
      %328 = vmatpush1.msra.mxu0 0.0
      %329 = vmatprep.subr.mxu0 0.0
      %330 = vmatpush1.msra.mxu0 0.0
      %331 = vmatprep.subr.mxu0 0.0
      %332 = vmatpush1.msra.mxu0 0.0
      %333 = vmatprep.subr.mxu0 0.0
      %334 = vmatpush1.msra.mxu0 0.0
      %335 = vmatprep.subr.mxu0 0.0
      %336 = vmatpush1.msra.mxu0 0.0
      %337 = vmatprep.subr.mxu0 0.0
      %338 = vmatpush1.msra.mxu0 0.0
      %339 = vmatprep.subr.mxu0 0.0
      %340 = vmatpush1.msra.mxu0 0.0
      %341 = vmatprep.subr.mxu0 0.0
      %342 = vmatpush1.msra.mxu0 0.0
      %343 = vmatprep.subr.mxu0 0.0
      %344 = vmatpush1.msra.mxu0 0.0
      %345 = vmatprep.subr.mxu0 0.0
      %346 = vmatpush1.msra.mxu0 0.0
      %347 = vmatprep.subr.mxu0 0.0
      %348 = vmatpush1.msra.mxu0 0.0
      %349 = vmatprep.subr.mxu0 0.0
      %350 = vmatpush1.msra.mxu0 0.0
      %351 = vmatprep.subr.mxu0 0.0
      %352 = vmatpush1.msra.mxu0 0.0
      %353 = vmatprep.subr.mxu0 0.0
      %354 = vmatpush1.msra.mxu0 0.0
      %355 = vmatprep.subr.mxu0 0.0
      %356 = vmatpush1.msra.mxu0 0.0
      %357 = vmatprep.subr.mxu0 0.0
      %358 = vmatpush1.msra.mxu0 0.0
      %359 = vmatprep.subr.mxu0 0.0
      %360 = vmatpush1.msra.mxu0 0.0
      %361 = vmatprep.subr.mxu0 0.0
      %362 = vmatpush1.msra.mxu0 0.0
      %363 = vmatprep.subr.mxu0 0.0
      %364 = vmatpush1.msra.mxu0 0.0
      %365 = vmatprep.subr.mxu0 0.0
      %366 = vmatpush1.msra.mxu0 0.0
      %367 = vmatprep.subr.mxu0 0.0
      %368 = vmatpush1.msra.mxu0 0.0
      %369 = vmatprep.subr.mxu0 0.0
      %370 = vmatpush1.msra.mxu0 0.0
      %371 = vmatprep.mubr.f32.mxu0 0.0
      %372 = vmatmul.mubr.f32.gmra.mrb[0].mxu0 %v305
      %v373 = vpop.f32.mrb[0].mxu0
      %v374 = vadd.f32 0.0, %v373
      %v375 = vpop.f32.mrb[0].mxu0
      %376 = vdwg.mxu0
      %v378 = vsel %vm303, %v302, 0
      %380 = vmatprep.subr.mxu0 0.0
      %381 = vmatpush1.msra.mxu0 %v299
      %382 = vmatprep.subr.mxu0 0.0
      %383 = vmatpush1.msra.mxu0 0.0
      %384 = vmatprep.subr.mxu0 0.0
      %385 = vmatpush1.msra.mxu0 0.0
      %386 = vmatprep.subr.mxu0 0.0
      %387 = vmatpush1.msra.mxu0 0.0
      %388 = vmatprep.subr.mxu0 0.0
      %389 = vmatpush1.msra.mxu0 0.0
      %390 = vmatprep.subr.mxu0 0.0
      %391 = vmatpush1.msra.mxu0 0.0
      %392 = vmatprep.subr.mxu0 0.0
      %393 = vmatpush1.msra.mxu0 0.0
      %394 = vmatprep.subr.mxu0 0.0
      %395 = vmatpush1.msra.mxu0 0.0
      %396 = vmatprep.subr.mxu0 0.0
      %397 = vmatpush1.msra.mxu0 0.0
      %398 = vmatprep.subr.mxu0 0.0
      %399 = vmatpush1.msra.mxu0 0.0
      %400 = vmatprep.subr.mxu0 0.0
      %401 = vmatpush1.msra.mxu0 0.0
      %402 = vmatprep.subr.mxu0 0.0
      %403 = vmatpush1.msra.mxu0 0.0
      %404 = vmatprep.subr.mxu0 0.0
      %405 = vmatpush1.msra.mxu0 0.0
      %406 = vmatprep.subr.mxu0 0.0
      %407 = vmatpush1.msra.mxu0 0.0
      %408 = vmatprep.subr.mxu0 0.0
      %409 = vmatpush1.msra.mxu0 0.0
      %410 = vmatprep.subr.mxu0 0.0
      %411 = vmatpush1.msra.mxu0 0.0
      %412 = vmatprep.subr.mxu0 0.0
      %413 = vmatpush1.msra.mxu0 0.0
      %414 = vmatprep.subr.mxu0 0.0
      %415 = vmatpush1.msra.mxu0 0.0
      %416 = vmatprep.subr.mxu0 0.0
      %417 = vmatpush1.msra.mxu0 0.0
      %418 = vmatprep.subr.mxu0 0.0
      %419 = vmatpush1.msra.mxu0 0.0
      %420 = vmatprep.subr.mxu0 0.0
      %421 = vmatpush1.msra.mxu0 0.0
      %422 = vmatprep.subr.mxu0 0.0
      %423 = vmatpush1.msra.mxu0 0.0
      %424 = vmatprep.subr.mxu0 0.0
      %425 = vmatpush1.msra.mxu0 0.0
      %426 = vmatprep.subr.mxu0 0.0
      %427 = vmatpush1.msra.mxu0 0.0
      %428 = vmatprep.subr.mxu0 0.0
      %429 = vmatpush1.msra.mxu0 0.0
      %430 = vmatprep.subr.mxu0 0.0
      %431 = vmatpush1.msra.mxu0 0.0
      %432 = vmatprep.subr.mxu0 0.0
      %433 = vmatpush1.msra.mxu0 0.0
      %434 = vmatprep.subr.mxu0 0.0
      %435 = vmatpush1.msra.mxu0 0.0
      %436 = vmatprep.subr.mxu0 0.0
      %437 = vmatpush1.msra.mxu0 0.0
      %438 = vmatprep.subr.mxu0 0.0
      %439 = vmatpush1.msra.mxu0 0.0
      %440 = vmatprep.subr.mxu0 0.0
      %441 = vmatpush1.msra.mxu0 0.0
      %442 = vmatprep.subr.mxu0 0.0
      %443 = vmatpush1.msra.mxu0 0.0
      %444 = vmatprep.mubr.f32.mxu0 0.0
      %445 = vmatmul.mubr.f32.gmra.mrb[0].mxu0 %v378
      %v446 = vpop.f32.mrb[0].mxu0
      %v447 = vadd.f32 %v374, %v446
      %v448 = vpop.f32.mrb[0].mxu0
      %449 = vdwg.mxu0
      %v450 = vadd.f32 %v447, %v301
      %v451 = vmul.f32 %v450, 0.5
      %v452 = vtanh.pop %v451
      %v453 = vadd.f32 %v452, 1.0
      %v454 = vmul.f32 %v453, 0.5
      %v455 = vtanh.pop %v450
      %v456 = vmul.f32 %v454, 0.0
      %458 = vrot.lane.b32.xlu0 %v455, 112
      %v459 = vpop.permute.xlu0 %458
      %v461 = vmul.f32 %v454, %v459
      %463 = vrot.lane.b32.xlu0 %v461, 8
      %v464 = vpop.permute.xlu0 %463
      %v466 = vadd.f32 %v456, %v464
      %v467 = vtanh.pop %v466
      %469 = vrot.lane.b32.xlu0 %v467, 16
      %v470 = vpop.permute.xlu0 %469
      %v472 = vmul.f32 %v454, %v470
      %s473 = scalar_lea.vmem %s295, 1
      %v474 = vld [vmem:[%s473] sm:$0x1]
      %476 = vrot.lane.b32.xlu0 %v472, 104
      %v477 = vpop.permute.xlu0 %476
      %v478 = vsel %vm303, %v477, 0
      %480 = vmatprep.subr.mxu0 0.0
      %481 = vmatpush1.msra.mxu0 %v300
      %482 = vmatprep.subr.mxu0 0.0
      %483 = vmatpush1.msra.mxu0 0.0
      %484 = vmatprep.subr.mxu0 0.0
      %485 = vmatpush1.msra.mxu0 0.0
      %486 = vmatprep.subr.mxu0 0.0
      %487 = vmatpush1.msra.mxu0 0.0
      %488 = vmatprep.subr.mxu0 0.0
      %489 = vmatpush1.msra.mxu0 0.0
      %490 = vmatprep.subr.mxu0 0.0
      %491 = vmatpush1.msra.mxu0 0.0
      %492 = vmatprep.subr.mxu0 0.0
      %493 = vmatpush1.msra.mxu0 0.0
      %494 = vmatprep.subr.mxu0 0.0
      %495 = vmatpush1.msra.mxu0 0.0
      %496 = vmatprep.subr.mxu0 0.0
      %497 = vmatpush1.msra.mxu0 0.0
      %498 = vmatprep.subr.mxu0 0.0
      %499 = vmatpush1.msra.mxu0 0.0
      %500 = vmatprep.subr.mxu0 0.0
      %501 = vmatpush1.msra.mxu0 0.0
      %502 = vmatprep.subr.mxu0 0.0
      %503 = vmatpush1.msra.mxu0 0.0
      %504 = vmatprep.subr.mxu0 0.0
      %505 = vmatpush1.msra.mxu0 0.0
      %506 = vmatprep.subr.mxu0 0.0
      %507 = vmatpush1.msra.mxu0 0.0
      %508 = vmatprep.subr.mxu0 0.0
      %509 = vmatpush1.msra.mxu0 0.0
      %510 = vmatprep.subr.mxu0 0.0
      %511 = vmatpush1.msra.mxu0 0.0
      %512 = vmatprep.subr.mxu0 0.0
      %513 = vmatpush1.msra.mxu0 0.0
      %514 = vmatprep.subr.mxu0 0.0
      %515 = vmatpush1.msra.mxu0 0.0
      %516 = vmatprep.subr.mxu0 0.0
      %517 = vmatpush1.msra.mxu0 0.0
      %518 = vmatprep.subr.mxu0 0.0
      %519 = vmatpush1.msra.mxu0 0.0
      %520 = vmatprep.subr.mxu0 0.0
      %521 = vmatpush1.msra.mxu0 0.0
      %522 = vmatprep.subr.mxu0 0.0
      %523 = vmatpush1.msra.mxu0 0.0
      %524 = vmatprep.subr.mxu0 0.0
      %525 = vmatpush1.msra.mxu0 0.0
      %526 = vmatprep.subr.mxu0 0.0
      %527 = vmatpush1.msra.mxu0 0.0
      %528 = vmatprep.subr.mxu0 0.0
      %529 = vmatpush1.msra.mxu0 0.0
      %530 = vmatprep.subr.mxu0 0.0
      %531 = vmatpush1.msra.mxu0 0.0
      %532 = vmatprep.subr.mxu0 0.0
      %533 = vmatpush1.msra.mxu0 0.0
      %534 = vmatprep.subr.mxu0 0.0
      %535 = vmatpush1.msra.mxu0 0.0
      %536 = vmatprep.subr.mxu0 0.0
      %537 = vmatpush1.msra.mxu0 0.0
      %538 = vmatprep.subr.mxu0 0.0
      %539 = vmatpush1.msra.mxu0 0.0
      %540 = vmatprep.subr.mxu0 0.0
      %541 = vmatpush1.msra.mxu0 0.0
      %542 = vmatprep.subr.mxu0 0.0
      %543 = vmatpush1.msra.mxu0 0.0
      %544 = vmatprep.mubr.f32.mxu0 0.0
      %545 = vmatmul.mubr.f32.gmra.mrb[0].mxu0 %v478
      %v546 = vpop.f32.mrb[0].mxu0
      %v547 = vadd.f32 0.0, %v546
      %v548 = vpop.f32.mrb[0].mxu0
      %549 = vdwg.mxu0
      %v551 = vsel %vm303, %v474, 0
      %553 = vmatprep.subr.mxu0 0.0
      %554 = vmatpush1.msra.mxu0 %v299
      %555 = vmatprep.subr.mxu0 0.0
      %556 = vmatpush1.msra.mxu0 0.0
      %557 = vmatprep.subr.mxu0 0.0
      %558 = vmatpush1.msra.mxu0 0.0
      %559 = vmatprep.subr.mxu0 0.0
      %560 = vmatpush1.msra.mxu0 0.0
      %561 = vmatprep.subr.mxu0 0.0
      %562 = vmatpush1.msra.mxu0 0.0
      %563 = vmatprep.subr.mxu0 0.0
      %564 = vmatpush1.msra.mxu0 0.0
      %565 = vmatprep.subr.mxu0 0.0
      %566 = vmatpush1.msra.mxu0 0.0
      %567 = vmatprep.subr.mxu0 0.0
      %568 = vmatpush1.msra.mxu0 0.0
      %569 = vmatprep.subr.mxu0 0.0
      %570 = vmatpush1.msra.mxu0 0.0
      %571 = vmatprep.subr.mxu0 0.0
      %572 = vmatpush1.msra.mxu0 0.0
      %573 = vmatprep.subr.mxu0 0.0
      %574 = vmatpush1.msra.mxu0 0.0
      %575 = vmatprep.subr.mxu0 0.0
      %576 = vmatpush1.msra.mxu0 0.0
      %577 = vmatprep.subr.mxu0 0.0
      %578 = vmatpush1.msra.mxu0 0.0
      %579 = vmatprep.subr.mxu0 0.0
      %580 = vmatpush1.msra.mxu0 0.0
      %581 = vmatprep.subr.mxu0 0.0
      %582 = vmatpush1.msra.mxu0 0.0
      %583 = vmatprep.subr.mxu0 0.0
      %584 = vmatpush1.msra.mxu0 0.0
      %585 = vmatprep.subr.mxu0 0.0
      %586 = vmatpush1.msra.mxu0 0.0
      %587 = vmatprep.subr.mxu0 0.0
      %588 = vmatpush1.msra.mxu0 0.0
      %589 = vmatprep.subr.mxu0 0.0
      %590 = vmatpush1.msra.mxu0 0.0
      %591 = vmatprep.subr.mxu0 0.0
      %592 = vmatpush1.msra.mxu0 0.0
      %593 = vmatprep.subr.mxu0 0.0
      %594 = vmatpush1.msra.mxu0 0.0
      %595 = vmatprep.subr.mxu0 0.0
      %596 = vmatpush1.msra.mxu0 0.0
      %597 = vmatprep.subr.mxu0 0.0
      %598 = vmatpush1.msra.mxu0 0.0
      %599 = vmatprep.subr.mxu0 0.0
      %600 = vmatpush1.msra.mxu0 0.0
      %601 = vmatprep.subr.mxu0 0.0
      %602 = vmatpush1.msra.mxu0 0.0
      %603 = vmatprep.subr.mxu0 0.0
      %604 = vmatpush1.msra.mxu0 0.0
      %605 = vmatprep.subr.mxu0 0.0
      %606 = vmatpush1.msra.mxu0 0.0
      %607 = vmatprep.subr.mxu0 0.0
      %608 = vmatpush1.msra.mxu0 0.0
      %609 = vmatprep.subr.mxu0 0.0
      %610 = vmatpush1.msra.mxu0 0.0
      %611 = vmatprep.subr.mxu0 0.0
      %612 = vmatpush1.msra.mxu0 0.0
      %613 = vmatprep.subr.mxu0 0.0
      %614 = vmatpush1.msra.mxu0 0.0
      %615 = vmatprep.subr.mxu0 0.0
      %616 = vmatpush1.msra.mxu0 0.0
      %617 = vmatprep.mubr.f32.mxu0 0.0
      %618 = vmatmul.mubr.f32.gmra.mrb[0].mxu0 %v551
      %v619 = vpop.f32.mrb[0].mxu0
      %v620 = vadd.f32 %v547, %v619
      %v621 = vpop.f32.mrb[0].mxu0
      %622 = vdwg.mxu0
      %v623 = vadd.f32 %v620, %v301
      %v624 = vmul.f32 %v623, 0.5
      %v625 = vtanh.pop %v624
      %v626 = vadd.f32 %v625, 1.0
      %v627 = vmul.f32 %v626, 0.5
      %v628 = vtanh.pop %v623
      %v629 = vmul.f32 %v627, %v466
      %631 = vrot.lane.b32.xlu0 %v628, 112
      %v632 = vpop.permute.xlu0 %631
      %v634 = vmul.f32 %v627, %v632
      %636 = vrot.lane.b32.xlu0 %v634, 8
      %v637 = vpop.permute.xlu0 %636
      %v639 = vadd.f32 %v629, %v637
      %v640 = vtanh.pop %v639
      %642 = vrot.lane.b32.xlu0 %v640, 16
      %v643 = vpop.permute.xlu0 %642
      %v645 = vmul.f32 %v627, %v643
      %s646 = scalar_lea.vmem %s295, 2
      %v647 = vld [vmem:[%s646] sm:$0x1]
      %649 = vrot.lane.b32.xlu0 %v645, 104
      %v650 = vpop.permute.xlu0 %649
      %v651 = vsel %vm303, %v650, 0
      %653 = vmatprep.subr.mxu0 0.0
      %654 = vmatpush1.msra.mxu0 %v300
      %655 = vmatprep.subr.mxu0 0.0
      %656 = vmatpush1.msra.mxu0 0.0
      %657 = vmatprep.subr.mxu0 0.0
      %658 = vmatpush1.msra.mxu0 0.0
      %659 = vmatprep.subr.mxu0 0.0
      %660 = vmatpush1.msra.mxu0 0.0
      %661 = vmatprep.subr.mxu0 0.0
      %662 = vmatpush1.msra.mxu0 0.0
      %663 = vmatprep.subr.mxu0 0.0
      %664 = vmatpush1.msra.mxu0 0.0
      %665 = vmatprep.subr.mxu0 0.0
      %666 = vmatpush1.msra.mxu0 0.0
      %667 = vmatprep.subr.mxu0 0.0
      %668 = vmatpush1.msra.mxu0 0.0
      %669 = vmatprep.subr.mxu0 0.0
      %670 = vmatpush1.msra.mxu0 0.0
      %671 = vmatprep.subr.mxu0 0.0
      %672 = vmatpush1.msra.mxu0 0.0
      %673 = vmatprep.subr.mxu0 0.0
      %674 = vmatpush1.msra.mxu0 0.0
      %675 = vmatprep.subr.mxu0 0.0
      %676 = vmatpush1.msra.mxu0 0.0
      %677 = vmatprep.subr.mxu0 0.0
      %678 = vmatpush1.msra.mxu0 0.0
      %679 = vmatprep.subr.mxu0 0.0
      %680 = vmatpush1.msra.mxu0 0.0
      %681 = vmatprep.subr.mxu0 0.0
      %682 = vmatpush1.msra.mxu0 0.0
      %683 = vmatprep.subr.mxu0 0.0
      %684 = vmatpush1.msra.mxu0 0.0
      %685 = vmatprep.subr.mxu0 0.0
      %686 = vmatpush1.msra.mxu0 0.0
      %687 = vmatprep.subr.mxu0 0.0
      %688 = vmatpush1.msra.mxu0 0.0
      %689 = vmatprep.subr.mxu0 0.0
      %690 = vmatpush1.msra.mxu0 0.0
      %691 = vmatprep.subr.mxu0 0.0
      %692 = vmatpush1.msra.mxu0 0.0
      %693 = vmatprep.subr.mxu0 0.0
      %694 = vmatpush1.msra.mxu0 0.0
      %695 = vmatprep.subr.mxu0 0.0
      %696 = vmatpush1.msra.mxu0 0.0
      %697 = vmatprep.subr.mxu0 0.0
      %698 = vmatpush1.msra.mxu0 0.0
      %699 = vmatprep.subr.mxu0 0.0
      %700 = vmatpush1.msra.mxu0 0.0
      %701 = vmatprep.subr.mxu0 0.0
      %702 = vmatpush1.msra.mxu0 0.0
      %703 = vmatprep.subr.mxu0 0.0
      %704 = vmatpush1.msra.mxu0 0.0
      %705 = vmatprep.subr.mxu0 0.0
      %706 = vmatpush1.msra.mxu0 0.0
      %707 = vmatprep.subr.mxu0 0.0
      %708 = vmatpush1.msra.mxu0 0.0
      %709 = vmatprep.subr.mxu0 0.0
      %710 = vmatpush1.msra.mxu0 0.0
      %711 = vmatprep.subr.mxu0 0.0
      %712 = vmatpush1.msra.mxu0 0.0
      %713 = vmatprep.subr.mxu0 0.0
      %714 = vmatpush1.msra.mxu0 0.0
      %715 = vmatprep.subr.mxu0 0.0
      %716 = vmatpush1.msra.mxu0 0.0
      %717 = vmatprep.mubr.f32.mxu0 0.0
      %718 = vmatmul.mubr.f32.gmra.mrb[0].mxu0 %v651
      %v719 = vpop.f32.mrb[0].mxu0
      %v720 = vadd.f32 0.0, %v719
      %v721 = vpop.f32.mrb[0].mxu0
      %722 = vdwg.mxu0
      %v724 = vsel %vm303, %v647, 0
      %726 = vmatprep.subr.mxu0 0.0
      %727 = vmatpush1.msra.mxu0 %v299
      %728 = vmatprep.subr.mxu0 0.0
      %729 = vmatpush1.msra.mxu0 0.0
      %730 = vmatprep.subr.mxu0 0.0
      %731 = vmatpush1.msra.mxu0 0.0
      %732 = vmatprep.subr.mxu0 0.0
      %733 = vmatpush1.msra.mxu0 0.0
      %734 = vmatprep.subr.mxu0 0.0
      %735 = vmatpush1.msra.mxu0 0.0
      %736 = vmatprep.subr.mxu0 0.0
      %737 = vmatpush1.msra.mxu0 0.0
      %738 = vmatprep.subr.mxu0 0.0
      %739 = vmatpush1.msra.mxu0 0.0
      %740 = vmatprep.subr.mxu0 0.0
      %741 = vmatpush1.msra.mxu0 0.0
      %742 = vmatprep.subr.mxu0 0.0
      %743 = vmatpush1.msra.mxu0 0.0
      %744 = vmatprep.subr.mxu0 0.0
      %745 = vmatpush1.msra.mxu0 0.0
      %746 = vmatprep.subr.mxu0 0.0
      %747 = vmatpush1.msra.mxu0 0.0
      %748 = vmatprep.subr.mxu0 0.0
      %749 = vmatpush1.msra.mxu0 0.0
      %750 = vmatprep.subr.mxu0 0.0
      %751 = vmatpush1.msra.mxu0 0.0
      %752 = vmatprep.subr.mxu0 0.0
      %753 = vmatpush1.msra.mxu0 0.0
      %754 = vmatprep.subr.mxu0 0.0
      %755 = vmatpush1.msra.mxu0 0.0
      %756 = vmatprep.subr.mxu0 0.0
      %757 = vmatpush1.msra.mxu0 0.0
      %758 = vmatprep.subr.mxu0 0.0
      %759 = vmatpush1.msra.mxu0 0.0
      %760 = vmatprep.subr.mxu0 0.0
      %761 = vmatpush1.msra.mxu0 0.0
      %762 = vmatprep.subr.mxu0 0.0
      %763 = vmatpush1.msra.mxu0 0.0
      %764 = vmatprep.subr.mxu0 0.0
      %765 = vmatpush1.msra.mxu0 0.0
      %766 = vmatprep.subr.mxu0 0.0
      %767 = vmatpush1.msra.mxu0 0.0
      %768 = vmatprep.subr.mxu0 0.0
      %769 = vmatpush1.msra.mxu0 0.0
      %770 = vmatprep.subr.mxu0 0.0
      %771 = vmatpush1.msra.mxu0 0.0
      %772 = vmatprep.subr.mxu0 0.0
      %773 = vmatpush1.msra.mxu0 0.0
      %774 = vmatprep.subr.mxu0 0.0
      %775 = vmatpush1.msra.mxu0 0.0
      %776 = vmatprep.subr.mxu0 0.0
      %777 = vmatpush1.msra.mxu0 0.0
      %778 = vmatprep.subr.mxu0 0.0
      %779 = vmatpush1.msra.mxu0 0.0
      %780 = vmatprep.subr.mxu0 0.0
      %781 = vmatpush1.msra.mxu0 0.0
      %782 = vmatprep.subr.mxu0 0.0
      %783 = vmatpush1.msra.mxu0 0.0
      %784 = vmatprep.subr.mxu0 0.0
      %785 = vmatpush1.msra.mxu0 0.0
      %786 = vmatprep.subr.mxu0 0.0
      %787 = vmatpush1.msra.mxu0 0.0
      %788 = vmatprep.subr.mxu0 0.0
      %789 = vmatpush1.msra.mxu0 0.0
      %790 = vmatprep.mubr.f32.mxu0 0.0
      %791 = vmatmul.mubr.f32.gmra.mrb[0].mxu0 %v724
      %v792 = vpop.f32.mrb[0].mxu0
      %v793 = vadd.f32 %v720, %v792
      %v794 = vpop.f32.mrb[0].mxu0
      %795 = vdwg.mxu0
      %v796 = vadd.f32 %v793, %v301
      %v797 = vmul.f32 %v796, 0.5
      %v798 = vtanh.pop %v797
      %v799 = vadd.f32 %v798, 1.0
      %v800 = vmul.f32 %v799, 0.5
      %v801 = vtanh.pop %v796
      %v802 = vmul.f32 %v800, %v639
      %804 = vrot.lane.b32.xlu0 %v801, 112
      %v805 = vpop.permute.xlu0 %804
      %v807 = vmul.f32 %v800, %v805
      %809 = vrot.lane.b32.xlu0 %v807, 8
      %v810 = vpop.permute.xlu0 %809
      %v812 = vadd.f32 %v802, %v810
      %v813 = vtanh.pop %v812
      %815 = vrot.lane.b32.xlu0 %v813, 16
      %v816 = vpop.permute.xlu0 %815
      %v818 = vmul.f32 %v800, %v816
      %v819 = vld [vmem:[%s4] sm:$0xff]
      %v820 = vld [vmem:[%s5] sm:$0x1]
      %822 = vrot.lane.b32.xlu0 %v818, 104
      %v823 = vpop.permute.xlu0 %822
      %v824 = vsel %vm303, %v823, 0
      %826 = vmatprep.subr.mxu0 0.0
      %827 = vmatpush1.msra.mxu0 %v819
      %828 = vmatprep.subr.mxu0 0.0
      %829 = vmatpush1.msra.mxu0 0.0
      %830 = vmatprep.subr.mxu0 0.0
      %831 = vmatpush1.msra.mxu0 0.0
      %832 = vmatprep.subr.mxu0 0.0
      %833 = vmatpush1.msra.mxu0 0.0
      %834 = vmatprep.subr.mxu0 0.0
      %835 = vmatpush1.msra.mxu0 0.0
      %836 = vmatprep.subr.mxu0 0.0
      %837 = vmatpush1.msra.mxu0 0.0
      %838 = vmatprep.subr.mxu0 0.0
      %839 = vmatpush1.msra.mxu0 0.0
      %840 = vmatprep.subr.mxu0 0.0
      %841 = vmatpush1.msra.mxu0 0.0
      %842 = vmatprep.subr.mxu0 0.0
      %843 = vmatpush1.msra.mxu0 0.0
      %844 = vmatprep.subr.mxu0 0.0
      %845 = vmatpush1.msra.mxu0 0.0
      %846 = vmatprep.subr.mxu0 0.0
      %847 = vmatpush1.msra.mxu0 0.0
      %848 = vmatprep.subr.mxu0 0.0
      %849 = vmatpush1.msra.mxu0 0.0
      %850 = vmatprep.subr.mxu0 0.0
      %851 = vmatpush1.msra.mxu0 0.0
      %852 = vmatprep.subr.mxu0 0.0
      %853 = vmatpush1.msra.mxu0 0.0
      %854 = vmatprep.subr.mxu0 0.0
      %855 = vmatpush1.msra.mxu0 0.0
      %856 = vmatprep.subr.mxu0 0.0
      %857 = vmatpush1.msra.mxu0 0.0
      %858 = vmatprep.subr.mxu0 0.0
      %859 = vmatpush1.msra.mxu0 0.0
      %860 = vmatprep.subr.mxu0 0.0
      %861 = vmatpush1.msra.mxu0 0.0
      %862 = vmatprep.subr.mxu0 0.0
      %863 = vmatpush1.msra.mxu0 0.0
      %864 = vmatprep.subr.mxu0 0.0
      %865 = vmatpush1.msra.mxu0 0.0
      %866 = vmatprep.subr.mxu0 0.0
      %867 = vmatpush1.msra.mxu0 0.0
      %868 = vmatprep.subr.mxu0 0.0
      %869 = vmatpush1.msra.mxu0 0.0
      %870 = vmatprep.subr.mxu0 0.0
      %871 = vmatpush1.msra.mxu0 0.0
      %872 = vmatprep.subr.mxu0 0.0
      %873 = vmatpush1.msra.mxu0 0.0
      %874 = vmatprep.subr.mxu0 0.0
      %875 = vmatpush1.msra.mxu0 0.0
      %876 = vmatprep.subr.mxu0 0.0
      %877 = vmatpush1.msra.mxu0 0.0
      %878 = vmatprep.subr.mxu0 0.0
      %879 = vmatpush1.msra.mxu0 0.0
      %880 = vmatprep.subr.mxu0 0.0
      %881 = vmatpush1.msra.mxu0 0.0
      %882 = vmatprep.subr.mxu0 0.0
      %883 = vmatpush1.msra.mxu0 0.0
      %884 = vmatprep.subr.mxu0 0.0
      %885 = vmatpush1.msra.mxu0 0.0
      %886 = vmatprep.subr.mxu0 0.0
      %887 = vmatpush1.msra.mxu0 0.0
      %888 = vmatprep.subr.mxu0 0.0
      %889 = vmatpush1.msra.mxu0 0.0
      %890 = vmatprep.mubr.f32.mxu0 0.0
      %891 = vmatmul.mubr.f32.gmra.mrb[0].mxu0 %v824
      %v892 = vpop.f32.mrb[0].mxu0
      %v893 = vadd.f32 %v820, %v892
      %v894 = vpop.f32.mrb[0].mxu0
      %895 = vdwg.mxu0
      %v896 = vmul.f32 %v893, 0.5
      %v897 = vmul.f32 %v893, 0.70710677
      %v898 = vand.u32 2147483647, %v897
      %v899 = vmul.f32 %v898, 0.5
      %v900 = vadd.f32 %v899, 1.0
      %v901 = vrcp.pop %v900
      %v902 = vmul.f32 1.0, %v901
      %v903 = vmul.f32 %v902, 0.17087276
      %v904 = vadd.f32 %v903, -0.82215226
      %v905 = vmul.f32 %v902, %v904
      %v906 = vadd.f32 %v905, 1.4885159
      %v907 = vmul.f32 %v902, %v906
      %v908 = vadd.f32 %v907, -1.135204
      %v909 = vmul.f32 %v902, %v908
      %v910 = vadd.f32 %v909, 0.27886808
      %v911 = vmul.f32 %v902, %v910
      %v912 = vadd.f32 %v911, -0.18628806
      %v913 = vmul.f32 %v902, %v912
      %v914 = vadd.f32 %v913, 0.09678418
      %v915 = vmul.f32 %v902, %v914
      %v916 = vadd.f32 %v915, 0.37409195
      %v917 = vmul.f32 %v902, %v916
      %v918 = vadd.f32 %v917, 1.0000237
      %v919 = vmul.f32 %v902, %v918
      %v920 = vadd.f32 %v919, -1.2655122
      %v921 = vsub.f32 0.0, %v898
      %v922 = vmul.f32 %v921, %v898
      %v923 = vadd.f32 %v922, %v920
      %v924 = vmul.f32 %v923, 1.442695
      %v925 = vpow.pop %v924
      %v926 = vmul.f32 %v902, %v925
      %vm927 = vcmp.ge.f32.partialorder %v897, 0.0
      %v928 = vsub.f32 1.0, %v926
      %v929 = vsub.f32 %v926, 1.0
      %v930 = vsel %vm927, %v928, %v929
      %v931 = vadd.f32 %v930, 1.0
      %v932 = vmul.f32 %v896, %v931
      %v933 = vld [vmem:[%s6] sm:$0xff]
      %v934 = vld [vmem:[%s6 + $0x8] sm:$0xff]
      %v935 = vld [vmem:[%s7] sm:$0x1]
      %vm936 = vcmask 130048
      %v938 = vsel %vm936, %v932, 0
      %940 = vmatprep.subr.mxu0 0.0
      %941 = vmatpush1.msra.mxu0 %v933
      %942 = vmatprep.subr.mxu0 0.0
      %943 = vmatpush1.msra.mxu0 %v934
      %944 = vmatprep.subr.mxu0 0.0
      %945 = vmatpush1.msra.mxu0 0.0
      %946 = vmatprep.subr.mxu0 0.0
      %947 = vmatpush1.msra.mxu0 0.0
      %948 = vmatprep.subr.mxu0 0.0
      %949 = vmatpush1.msra.mxu0 0.0
      %950 = vmatprep.subr.mxu0 0.0
      %951 = vmatpush1.msra.mxu0 0.0
      %952 = vmatprep.subr.mxu0 0.0
      %953 = vmatpush1.msra.mxu0 0.0
      %954 = vmatprep.subr.mxu0 0.0
      %955 = vmatpush1.msra.mxu0 0.0
      %956 = vmatprep.subr.mxu0 0.0
      %957 = vmatpush1.msra.mxu0 0.0
      %958 = vmatprep.subr.mxu0 0.0
      %959 = vmatpush1.msra.mxu0 0.0
      %960 = vmatprep.subr.mxu0 0.0
      %961 = vmatpush1.msra.mxu0 0.0
      %962 = vmatprep.subr.mxu0 0.0
      %963 = vmatpush1.msra.mxu0 0.0
      %964 = vmatprep.subr.mxu0 0.0
      %965 = vmatpush1.msra.mxu0 0.0
      %966 = vmatprep.subr.mxu0 0.0
      %967 = vmatpush1.msra.mxu0 0.0
      %968 = vmatprep.subr.mxu0 0.0
      %969 = vmatpush1.msra.mxu0 0.0
      %970 = vmatprep.subr.mxu0 0.0
      %971 = vmatpush1.msra.mxu0 0.0
      %972 = vmatprep.subr.mxu0 0.0
      %973 = vmatpush1.msra.mxu0 0.0
      %974 = vmatprep.subr.mxu0 0.0
      %975 = vmatpush1.msra.mxu0 0.0
      %976 = vmatprep.subr.mxu0 0.0
      %977 = vmatpush1.msra.mxu0 0.0
      %978 = vmatprep.subr.mxu0 0.0
      %979 = vmatpush1.msra.mxu0 0.0
      %980 = vmatprep.subr.mxu0 0.0
      %981 = vmatpush1.msra.mxu0 0.0
      %982 = vmatprep.subr.mxu0 0.0
      %983 = vmatpush1.msra.mxu0 0.0
      %984 = vmatprep.subr.mxu0 0.0
      %985 = vmatpush1.msra.mxu0 0.0
      %986 = vmatprep.subr.mxu0 0.0
      %987 = vmatpush1.msra.mxu0 0.0
      %988 = vmatprep.subr.mxu0 0.0
      %989 = vmatpush1.msra.mxu0 0.0
      %990 = vmatprep.subr.mxu0 0.0
      %991 = vmatpush1.msra.mxu0 0.0
      %992 = vmatprep.subr.mxu0 0.0
      %993 = vmatpush1.msra.mxu0 0.0
      %994 = vmatprep.subr.mxu0 0.0
      %995 = vmatpush1.msra.mxu0 0.0
      %996 = vmatprep.subr.mxu0 0.0
      %997 = vmatpush1.msra.mxu0 0.0
      %998 = vmatprep.subr.mxu0 0.0
      %999 = vmatpush1.msra.mxu0 0.0
      %1000 = vmatprep.subr.mxu0 0.0
      %1001 = vmatpush1.msra.mxu0 0.0
      %1002 = vmatprep.subr.mxu0 0.0
      %1003 = vmatpush1.msra.mxu0 0.0
      %1004 = vmatprep.mubr.f32.mxu0 0.0
      %1005 = vmatmul.mubr.f32.gmra.mrb[0].mxu0 %v938
      %v1006 = vpop.f32.mrb[0].mxu0
      %v1007 = vadd.f32 %v935, %v1006
      %v1008 = vpop.f32.mrb[0].mxu0
      %1009 = vdwg.mxu0
      %vm1010 = vcmask 40960
      %1011 = vst.msk [vmem:[%s298] sm:$0x1] %vm1010, %v1007
      %p1012 = scmp.lt.s32.totalorder %s19, 1
      %s1013 = scalar_select %p1012, %s19, 1
      %s1014 = scalar_lea.vmem %s8, %s1013
      // Predicated region
      $region53: #{temporal_sfno_forward.7} parent=51 // pred_check
        %p1015 = pneg %p210
      $region54: #{temporal_sfno_forward.7} parent=51 // pred_check_branch
        %1017 = sbr.rel (%p1015) target = $region56
      $region55: #{temporal_sfno_forward.7} parent=51 // pred_region
        _
      $region56: #{temporal_sfno_forward.7} parent=51 // pred_fallthru
        _
    $region52: #{temporal_sfno_forward.7} parent=5 // pred_fallthru
      _
    %p1018 = scmp.le.s32.totalorder 2, %s14
    // Predicated region
    $region57: #{temporal_sfno_forward.7} parent=5 // pred_check
      %p1019 = pneg %p1018
    $region58: #{temporal_sfno_forward.7} parent=5 // pred_check_branch
      %1021 = sbr.rel (%p1019) target = $region60
    $region59: #{temporal_sfno_forward.7} parent=5 // pred_region
      %s1022 = ssub.s32 %s14, 2
      // Predicated region
      $region61: #{temporal_sfno_forward.7} parent=59 // pred_check
        %p1023 = pneg %p216
      $region62: #{temporal_sfno_forward.7} parent=59 // pred_check_branch
        %1025 = sbr.rel (%p1023) target = $region64
      $region63: #{temporal_sfno_forward.7} parent=59 // pred_region
        %p1026 = scmp.lt.s32.totalorder %s20, 1
        %s1027 = scalar_select %p1026, %s20, 1
        %s1028 = scalar_lea.vmem %s8, %s1027
      $region64: #{temporal_sfno_forward.7} parent=59 // pred_fallthru
        _
    $region60: #{temporal_sfno_forward.7} parent=5 // pred_fallthru
      _
  $region6: #{temporal_sfno_forward.7} parent=0 // loop_footer
    %s18 = sadd.s32 1, %s14
  $region7: #{temporal_sfno_forward.7} parent=0 // loop_footer_branch
    %13 = sbr.rel target = $region3
  $region8: #{temporal_sfno_forward.7} parent=0 // loop_exit
    _

// kernel: temporal_sfno_forward.6
$region0: #{temporal_sfno_forward.6}
  #allocation0 [shape = 'u32[]', space=smem, size = 0x4, offset = 0x4, fixed_abs, tag = 'smem constant byte address 0x4 - core index']
  #allocation1 [shape = 'u32[144,128]{1,0:T(1,128)}', space=vmem, size = 0x12000, scoped, tag = 'internal scratch']
  #allocation2 [shape = 'f32[4,3,8]{2,1,0:T(4,128)}', space=vmem, size = 0x2000, scoped, tag = 'scratch operand']
  %s0 = inlined_call_operand.vmem [shape: f32[2,4,3,8], index: 0, kind: input, shape index: {}]
  %s1 = inlined_call_operand.vmem [shape: f32[2,4,8,8], index: 1, kind: input, shape index: {}]
  %s2 = inlined_call_operand.vmem [shape: f32[2,4,1,8], index: 2, kind: input, shape index: {}]
  %s3 = inlined_call_operand.vmem [shape: f32[2,12,8], index: 3, kind: input, shape index: {}]
  %s4 = inlined_call_operand.vmem [shape: f32[2,8,8], index: 4, kind: input, shape index: {}]
  %s5 = inlined_call_operand.vmem [shape: f32[2,1,8], index: 5, kind: input, shape index: {}]
  %s6 = inlined_call_operand.vmem [shape: f32[4,1,1], index: 6, kind: input, shape index: {}]
  %s7 = inlined_call_operand.vmem [shape: f32[1,12], index: 7, kind: input, shape index: {}]
  %s8 = inlined_call_operand.vmem [shape: f32[8,8], index: 8, kind: input, shape index: {}]
  %s9 = inlined_call_operand.vmem [shape: f32[1,8], index: 9, kind: input, shape index: {}]
  %s10 = inlined_call_operand.vmem [shape: f32[2,3,8], index: 10, kind: output, shape index: {}]
  %s11 = sld [smem:[#allocation0]]
  $region81: #{temporal_sfno_forward.6} parent=0
    _
  %s13 = ssub.s32 1, %s11
  %s14 = scalar_select 0, %s13, %s11
  loop: start=0, step=1, limit=6
  $region2: #{temporal_sfno_forward.6} parent=0 // loop_pre_header
    _
  $region3: #{temporal_sfno_forward.6} parent=0 // loop_header
    %s16 = sphi 0, %s20
    %p17 = scmp.ge.s32.totalorder %s16, 6
    %s23 = sphi 0, %s35
    %s24 = sphi 0, %s31
    %s25 = sphi 0, %s23
    %s26 = sphi 0, %s24
    %s27 = sphi 0, %s25
    %s28 = sphi 0, %s26
    %s38 = sphi 0, %s40
    %s41 = sphi 0, %s38
    %s42 = sphi 0, %s41
    %s58 = sphi 0, %s42
    %s64 = sphi 0, %s66
    %s67 = sphi 0, %s64
    %s68 = sphi 0, %s67
    %s84 = sphi 0, %s68
    %s90 = sphi 0, %s92
    %s93 = sphi 0, %s90
    %s94 = sphi 0, %s93
    %s110 = sphi 0, %s94
    %s116 = sphi 0, %s118
    %s119 = sphi 0, %s116
    %s120 = sphi 0, %s119
    %s136 = sphi 0, %s120
    %s142 = sphi 0, %s144
    %s145 = sphi 0, %s142
    %s146 = sphi 0, %s145
    %s162 = sphi 0, %s146
    %s168 = sphi 0, %s170
    %s171 = sphi 0, %s168
    %s172 = sphi 0, %s171
    %s188 = sphi 0, %s172
    %s192 = sphi 0, %s192
    %s194 = sphi 0, %s192
    %s195 = sphi 0, %s194
    %s209 = sphi 0, %s195
    %s213 = sphi 0, %s213
    %s215 = sphi 0, %s213
    %s216 = sphi 0, %s215
    %s230 = sphi 0, %s216
    %s234 = sphi 0, %s234
    %s236 = sphi 0, %s234
    %s237 = sphi 0, %s236
    %s251 = sphi 0, %s237
    %s255 = sphi 0, %s255
    %s257 = sphi 0, %s255
    %s258 = sphi 0, %s257
    %s272 = sphi 0, %s258
    %s278 = sphi 0, %s280
    %s281 = sphi 0, %s278
    %s282 = sphi 0, %s281
    %s298 = sphi 0, %s282
  $region4: #{temporal_sfno_forward.6} parent=0 // loop_header_branch
    %19 = sbr.rel (%p17) target = $region8
  $region5: #{temporal_sfno_forward.6} parent=0 // loop_body
    %s21 = ssub.s32 %s16, 1
    %s22 = ssub.s32 %s16, 2
    %s29 = sadd.s32 1, %s24
    %p30 = scmp.ge.s32.totalorder %s29, 2
    %s31 = scalar_select %p30, 0, %s29
    %s32 = sadd.s32 1, %s23
    %s33 = scalar_select %p30, %s32, %s23
    %p34 = scmp.ge.s32.totalorder %s33, 2
    %s35 = scalar_select %p34, 0, %s33
    %s36 = ssub.s32 %s23, %s35
    %p37 = scmp.eq.s32.totalorder %s36, 0
    %s39 = sadd.s32 %s38, 1
    %s40 = scalar_select %p37, %s38, %s39
    %p43 = pneg %p37
    %p44 = scmp.eq.s32.totalorder %s16, 3
    %p45 = por %p43, %p44
    %p46 = scmp.ne.s32.totalorder %s38, %s41
    %p47 = scmp.eq.s32.totalorder %s16, 0
    %p48 = por %p46, %p47
    %p49 = scmp.ne.s32.totalorder %s38, %s41
    %p50 = scmp.eq.s32.totalorder %s21, 3
    %p51 = por %p49, %p50
    %p52 = scmp.ne.s32.totalorder %s41, %s42
    %p53 = scmp.eq.s32.totalorder %s21, 0
    %p54 = por %p52, %p53
    %p55 = scmp.ne.s32.totalorder %s41, %s42
    %p56 = scmp.eq.s32.totalorder %s22, 3
    %p57 = por %p55, %p56
    %p59 = scmp.ne.s32.totalorder %s42, %s58
    %p60 = scmp.eq.s32.totalorder %s22, 0
    %p61 = por %p59, %p60
    %s62 = ssub.s32 %s24, %s31
    %p63 = scmp.eq.s32.totalorder %s62, 0
    %s65 = sadd.s32 %s64, 1
    %s66 = scalar_select %p63, %s64, %s65
    %p69 = pneg %p63
    %p70 = scmp.eq.s32.totalorder %s16, 3
    %p71 = por %p69, %p70
    %p72 = scmp.ne.s32.totalorder %s64, %s67
    %p73 = scmp.eq.s32.totalorder %s16, 0
    %p74 = por %p72, %p73
    %p75 = scmp.ne.s32.totalorder %s64, %s67
    %p76 = scmp.eq.s32.totalorder %s21, 3
    %p77 = por %p75, %p76
    %p78 = scmp.ne.s32.totalorder %s67, %s68
    %p79 = scmp.eq.s32.totalorder %s21, 0
    %p80 = por %p78, %p79
    %p81 = scmp.ne.s32.totalorder %s67, %s68
    %p82 = scmp.eq.s32.totalorder %s22, 3
    %p83 = por %p81, %p82
    %p85 = scmp.ne.s32.totalorder %s68, %s84
    %p86 = scmp.eq.s32.totalorder %s22, 0
    %p87 = por %p85, %p86
    %s88 = ssub.s32 %s24, %s31
    %p89 = scmp.eq.s32.totalorder %s88, 0
    %s91 = sadd.s32 %s90, 1
    %s92 = scalar_select %p89, %s90, %s91
    %p95 = pneg %p89
    %p96 = scmp.eq.s32.totalorder %s16, 3
    %p97 = por %p95, %p96
    %p98 = scmp.ne.s32.totalorder %s90, %s93
    %p99 = scmp.eq.s32.totalorder %s16, 0
    %p100 = por %p98, %p99
    %p101 = scmp.ne.s32.totalorder %s90, %s93
    %p102 = scmp.eq.s32.totalorder %s21, 3
    %p103 = por %p101, %p102
    %p104 = scmp.ne.s32.totalorder %s93, %s94
    %p105 = scmp.eq.s32.totalorder %s21, 0
    %p106 = por %p104, %p105
    %p107 = scmp.ne.s32.totalorder %s93, %s94
    %p108 = scmp.eq.s32.totalorder %s22, 3
    %p109 = por %p107, %p108
    %p111 = scmp.ne.s32.totalorder %s94, %s110
    %p112 = scmp.eq.s32.totalorder %s22, 0
    %p113 = por %p111, %p112
    %s114 = ssub.s32 %s24, %s31
    %p115 = scmp.eq.s32.totalorder %s114, 0
    %s117 = sadd.s32 %s116, 1
    %s118 = scalar_select %p115, %s116, %s117
    %p121 = pneg %p115
    %p122 = scmp.eq.s32.totalorder %s16, 3
    %p123 = por %p121, %p122
    %p124 = scmp.ne.s32.totalorder %s116, %s119
    %p125 = scmp.eq.s32.totalorder %s16, 0
    %p126 = por %p124, %p125
    %p127 = scmp.ne.s32.totalorder %s116, %s119
    %p128 = scmp.eq.s32.totalorder %s21, 3
    %p129 = por %p127, %p128
    %p130 = scmp.ne.s32.totalorder %s119, %s120
    %p131 = scmp.eq.s32.totalorder %s21, 0
    %p132 = por %p130, %p131
    %p133 = scmp.ne.s32.totalorder %s119, %s120
    %p134 = scmp.eq.s32.totalorder %s22, 3
    %p135 = por %p133, %p134
    %p137 = scmp.ne.s32.totalorder %s120, %s136
    %p138 = scmp.eq.s32.totalorder %s22, 0
    %p139 = por %p137, %p138
    %s140 = ssub.s32 %s24, %s31
    %p141 = scmp.eq.s32.totalorder %s140, 0
    %s143 = sadd.s32 %s142, 1
    %s144 = scalar_select %p141, %s142, %s143
    %p147 = pneg %p141
    %p148 = scmp.eq.s32.totalorder %s16, 3
    %p149 = por %p147, %p148
    %p150 = scmp.ne.s32.totalorder %s142, %s145
    %p151 = scmp.eq.s32.totalorder %s16, 0
    %p152 = por %p150, %p151
    %p153 = scmp.ne.s32.totalorder %s142, %s145
    %p154 = scmp.eq.s32.totalorder %s21, 3
    %p155 = por %p153, %p154
    %p156 = scmp.ne.s32.totalorder %s145, %s146
    %p157 = scmp.eq.s32.totalorder %s21, 0
    %p158 = por %p156, %p157
    %p159 = scmp.ne.s32.totalorder %s145, %s146
    %p160 = scmp.eq.s32.totalorder %s22, 3
    %p161 = por %p159, %p160
    %p163 = scmp.ne.s32.totalorder %s146, %s162
    %p164 = scmp.eq.s32.totalorder %s22, 0
    %p165 = por %p163, %p164
    %s166 = ssub.s32 %s24, %s31
    %p167 = scmp.eq.s32.totalorder %s166, 0
    %s169 = sadd.s32 %s168, 1
    %s170 = scalar_select %p167, %s168, %s169
    %p173 = pneg %p167
    %p174 = scmp.eq.s32.totalorder %s16, 3
    %p175 = por %p173, %p174
    %p176 = scmp.ne.s32.totalorder %s168, %s171
    %p177 = scmp.eq.s32.totalorder %s16, 0
    %p178 = por %p176, %p177
    %p179 = scmp.ne.s32.totalorder %s168, %s171
    %p180 = scmp.eq.s32.totalorder %s21, 3
    %p181 = por %p179, %p180
    %p182 = scmp.ne.s32.totalorder %s171, %s172
    %p183 = scmp.eq.s32.totalorder %s21, 0
    %p184 = por %p182, %p183
    %p185 = scmp.ne.s32.totalorder %s171, %s172
    %p186 = scmp.eq.s32.totalorder %s22, 3
    %p187 = por %p185, %p186
    %p189 = scmp.ne.s32.totalorder %s172, %s188
    %p190 = scmp.eq.s32.totalorder %s22, 0
    %p191 = por %p189, %p190
    %s193 = sadd.s32 %s192, 1
    %p196 = scmp.eq.s32.totalorder %s16, 3
    %p197 = scmp.ne.s32.totalorder %s192, %s194
    %p198 = scmp.eq.s32.totalorder %s16, 0
    %p199 = por %p197, %p198
    %p200 = scmp.ne.s32.totalorder %s192, %s194
    %p201 = scmp.eq.s32.totalorder %s21, 3
    %p202 = por %p200, %p201
    %p203 = scmp.ne.s32.totalorder %s194, %s195
    %p204 = scmp.eq.s32.totalorder %s21, 0
    %p205 = por %p203, %p204
    %p206 = scmp.ne.s32.totalorder %s194, %s195
    %p207 = scmp.eq.s32.totalorder %s22, 3
    %p208 = por %p206, %p207
    %p210 = scmp.ne.s32.totalorder %s195, %s209
    %p211 = scmp.eq.s32.totalorder %s22, 0
    %p212 = por %p210, %p211
    %s214 = sadd.s32 %s213, 1
    %p217 = scmp.eq.s32.totalorder %s16, 3
    %p218 = scmp.ne.s32.totalorder %s213, %s215
    %p219 = scmp.eq.s32.totalorder %s16, 0
    %p220 = por %p218, %p219
    %p221 = scmp.ne.s32.totalorder %s213, %s215
    %p222 = scmp.eq.s32.totalorder %s21, 3
    %p223 = por %p221, %p222
    %p224 = scmp.ne.s32.totalorder %s215, %s216
    %p225 = scmp.eq.s32.totalorder %s21, 0
    %p226 = por %p224, %p225
    %p227 = scmp.ne.s32.totalorder %s215, %s216
    %p228 = scmp.eq.s32.totalorder %s22, 3
    %p229 = por %p227, %p228
    %p231 = scmp.ne.s32.totalorder %s216, %s230
    %p232 = scmp.eq.s32.totalorder %s22, 0
    %p233 = por %p231, %p232
    %s235 = sadd.s32 %s234, 1
    %p238 = scmp.eq.s32.totalorder %s16, 3
    %p239 = scmp.ne.s32.totalorder %s234, %s236
    %p240 = scmp.eq.s32.totalorder %s16, 0
    %p241 = por %p239, %p240
    %p242 = scmp.ne.s32.totalorder %s234, %s236
    %p243 = scmp.eq.s32.totalorder %s21, 3
    %p244 = por %p242, %p243
    %p245 = scmp.ne.s32.totalorder %s236, %s237
    %p246 = scmp.eq.s32.totalorder %s21, 0
    %p247 = por %p245, %p246
    %p248 = scmp.ne.s32.totalorder %s236, %s237
    %p249 = scmp.eq.s32.totalorder %s22, 3
    %p250 = por %p248, %p249
    %p252 = scmp.ne.s32.totalorder %s237, %s251
    %p253 = scmp.eq.s32.totalorder %s22, 0
    %p254 = por %p252, %p253
    %s256 = sadd.s32 %s255, 1
    %p259 = scmp.eq.s32.totalorder %s16, 3
    %p260 = scmp.ne.s32.totalorder %s255, %s257
    %p261 = scmp.eq.s32.totalorder %s16, 0
    %p262 = por %p260, %p261
    %p263 = scmp.ne.s32.totalorder %s255, %s257
    %p264 = scmp.eq.s32.totalorder %s21, 3
    %p265 = por %p263, %p264
    %p266 = scmp.ne.s32.totalorder %s257, %s258
    %p267 = scmp.eq.s32.totalorder %s21, 0
    %p268 = por %p266, %p267
    %p269 = scmp.ne.s32.totalorder %s257, %s258
    %p270 = scmp.eq.s32.totalorder %s22, 3
    %p271 = por %p269, %p270
    %p273 = scmp.ne.s32.totalorder %s258, %s272
    %p274 = scmp.eq.s32.totalorder %s22, 0
    %p275 = por %p273, %p274
    %s276 = ssub.s32 %s23, %s35
    %p277 = scmp.eq.s32.totalorder %s276, 0
    %s279 = sadd.s32 %s278, 1
    %s280 = scalar_select %p277, %s278, %s279
    %p283 = pneg %p277
    %p284 = scmp.eq.s32.totalorder %s16, 3
    %p285 = por %p283, %p284
    %p286 = scmp.ne.s32.totalorder %s278, %s281
    %p287 = scmp.eq.s32.totalorder %s16, 0
    %p288 = por %p286, %p287
    %p289 = scmp.ne.s32.totalorder %s278, %s281
    %p290 = scmp.eq.s32.totalorder %s21, 3
    %p291 = por %p289, %p290
    %p292 = scmp.ne.s32.totalorder %s281, %s282
    %p293 = scmp.eq.s32.totalorder %s21, 0
    %p294 = por %p292, %p293
    %p295 = scmp.ne.s32.totalorder %s281, %s282
    %p296 = scmp.eq.s32.totalorder %s22, 3
    %p297 = por %p295, %p296
    %p299 = scmp.ne.s32.totalorder %s282, %s298
    %p300 = scmp.eq.s32.totalorder %s22, 0
    %p301 = por %p299, %p300
    %p302 = scmp.le.s32.totalorder 1, %s16
    %p303 = scmp.lt.s32.totalorder %s16, 5
    %p304 = pnand %p302, %p303
    %p305 = pneg %p304
    // Predicated region
    $region9: #{temporal_sfno_forward.6} parent=5 // pred_check
      _
    $region10: #{temporal_sfno_forward.6} parent=5 // pred_check_branch
      %307 = sbr.rel (%p304) target = $region12
    $region11: #{temporal_sfno_forward.6} parent=5 // pred_region
      %s308 = ssub.s32 %s16, 1
      // Predicated region
      $region13: #{temporal_sfno_forward.6} parent=11 // pred_check
        %p309 = pneg %p205
      $region14: #{temporal_sfno_forward.6} parent=11 // pred_check_branch
        %311 = sbr.rel (%p309) target = $region16
      $region15: #{temporal_sfno_forward.6} parent=11 // pred_region
        _
      $region16: #{temporal_sfno_forward.6} parent=11 // pred_fallthru
        _
      // Predicated region
      $region17: #{temporal_sfno_forward.6} parent=11 // pred_check
        %p312 = pneg %p226
      $region18: #{temporal_sfno_forward.6} parent=11 // pred_check_branch
        %314 = sbr.rel (%p312) target = $region20
      $region19: #{temporal_sfno_forward.6} parent=11 // pred_region
        _
      $region20: #{temporal_sfno_forward.6} parent=11 // pred_fallthru
        _
      // Predicated region
      $region21: #{temporal_sfno_forward.6} parent=11 // pred_check
        %p315 = pneg %p247
      $region22: #{temporal_sfno_forward.6} parent=11 // pred_check_branch
        %317 = sbr.rel (%p315) target = $region24
      $region23: #{temporal_sfno_forward.6} parent=11 // pred_region
        _
      $region24: #{temporal_sfno_forward.6} parent=11 // pred_fallthru
        _
      // Predicated region
      $region25: #{temporal_sfno_forward.6} parent=11 // pred_check
        %p318 = pneg %p268
      $region26: #{temporal_sfno_forward.6} parent=11 // pred_check_branch
        %320 = sbr.rel (%p318) target = $region28
      $region27: #{temporal_sfno_forward.6} parent=11 // pred_region
        _
      $region28: #{temporal_sfno_forward.6} parent=11 // pred_fallthru
        _
    $region12: #{temporal_sfno_forward.6} parent=5 // pred_fallthru
      _
    %p321 = scmp.lt.s32.totalorder %s16, 4
    // Predicated region
    $region29: #{temporal_sfno_forward.6} parent=5 // pred_check
      %p322 = pneg %p321
    $region30: #{temporal_sfno_forward.6} parent=5 // pred_check_branch
      %324 = sbr.rel (%p322) target = $region32
    $region31: #{temporal_sfno_forward.6} parent=5 // pred_region
      // Predicated region
      $region33: #{temporal_sfno_forward.6} parent=31 // pred_check
        %p325 = pneg %p48
      $region34: #{temporal_sfno_forward.6} parent=31 // pred_check_branch
        %327 = sbr.rel (%p325) target = $region36
      $region35: #{temporal_sfno_forward.6} parent=31 // pred_region
        %p328 = scmp.lt.s32.totalorder %s23, 1
        %s329 = scalar_select %p328, %s23, 1
        %s330 = smul.addr %s329, 4
        %s331 = smul.addr %s330, 4
        %s332 = scalar_lea.vmem %s0, %s331
      $region36: #{temporal_sfno_forward.6} parent=31 // pred_fallthru
        _
      // Predicated region
      $region37: #{temporal_sfno_forward.6} parent=31 // pred_check
        %p333 = pneg %p74
      $region38: #{temporal_sfno_forward.6} parent=31 // pred_check_branch
        %335 = sbr.rel (%p333) target = $region40
      $region39: #{temporal_sfno_forward.6} parent=31 // pred_region
        %p336 = scmp.lt.s32.totalorder %s24, 1
        %s337 = scalar_select %p336, %s24, 1
        %s338 = smul.addr %s337, 4
        %s339 = smul.addr %s338, 8
        %s340 = scalar_lea.vmem %s1, %s339
      $region40: #{temporal_sfno_forward.6} parent=31 // pred_fallthru
        _
      // Predicated region
      $region41: #{temporal_sfno_forward.6} parent=31 // pred_check
        %p341 = pneg %p100
      $region42: #{temporal_sfno_forward.6} parent=31 // pred_check_branch
        %343 = sbr.rel (%p341) target = $region44
      $region43: #{temporal_sfno_forward.6} parent=31 // pred_region
        %p344 = scmp.lt.s32.totalorder %s24, 1
        %s345 = scalar_select %p344, %s24, 1
        %s346 = smul.addr %s345, 4
        %s347 = scalar_lea.vmem %s2, %s346
      $region44: #{temporal_sfno_forward.6} parent=31 // pred_fallthru
        _
      // Predicated region
      $region45: #{temporal_sfno_forward.6} parent=31 // pred_check
        %p348 = pneg %p126
      $region46: #{temporal_sfno_forward.6} parent=31 // pred_check_branch
        %350 = sbr.rel (%p348) target = $region48
      $region47: #{temporal_sfno_forward.6} parent=31 // pred_region
        %p351 = scmp.lt.s32.totalorder %s24, 1
        %s352 = scalar_select %p351, %s24, 1
        %s353 = smul.addr %s352, 2
        %s354 = smul.addr %s353, 8
        %s355 = scalar_lea.vmem %s3, %s354
      $region48: #{temporal_sfno_forward.6} parent=31 // pred_fallthru
        _
      // Predicated region
      $region49: #{temporal_sfno_forward.6} parent=31 // pred_check
        %p356 = pneg %p152
      $region50: #{temporal_sfno_forward.6} parent=31 // pred_check_branch
        %358 = sbr.rel (%p356) target = $region52
      $region51: #{temporal_sfno_forward.6} parent=31 // pred_region
        %p359 = scmp.lt.s32.totalorder %s24, 1
        %s360 = scalar_select %p359, %s24, 1
        %s361 = smul.addr %s360, 8
        %s362 = scalar_lea.vmem %s4, %s361
      $region52: #{temporal_sfno_forward.6} parent=31 // pred_fallthru
        _
      // Predicated region
      $region53: #{temporal_sfno_forward.6} parent=31 // pred_check
        %p363 = pneg %p178
      $region54: #{temporal_sfno_forward.6} parent=31 // pred_check_branch
        %365 = sbr.rel (%p363) target = $region56
      $region55: #{temporal_sfno_forward.6} parent=31 // pred_region
        %p366 = scmp.lt.s32.totalorder %s24, 1
        %s367 = scalar_select %p366, %s24, 1
        %s368 = scalar_lea.vmem %s5, %s367
      $region56: #{temporal_sfno_forward.6} parent=31 // pred_fallthru
        _
    $region32: #{temporal_sfno_forward.6} parent=5 // pred_fallthru
      _
    %p369 = scmp.le.s32.totalorder 1, %s16
    %p370 = scmp.lt.s32.totalorder %s16, 5
    %p371 = pnand %p369, %p370
    %p372 = pneg %p371
    // Predicated region
    $region57: #{temporal_sfno_forward.6} parent=5 // pred_check
      _
    $region58: #{temporal_sfno_forward.6} parent=5 // pred_check_branch
      %374 = sbr.rel (%p371) target = $region60
    $region59: #{temporal_sfno_forward.6} parent=5 // pred_region
      %s375 = ssub.s32 %s16, 1
      %p376 = scmp.lt.s32.totalorder %s25, 1
      %s377 = scalar_select %p376, %s25, 1
      %s378 = smul.addr %s377, 4
      %s379 = smul.addr %s378, 4
      %s380 = scalar_lea.vmem %s0, %s379
      %p381 = pneg %p54
      %p382 = pneg %p51
      %p383 = scmp.lt.s32.totalorder %s26, 1
      %s384 = scalar_select %p383, %s26, 1
      %s385 = smul.addr %s384, 4
      %s386 = smul.addr %s385, 8
      %s387 = scalar_lea.vmem %s1, %s386
      %p388 = pneg %p80
      %p389 = pneg %p77
      %p390 = scmp.lt.s32.totalorder %s26, 1
      %s391 = scalar_select %p390, %s26, 1
      %s392 = smul.addr %s391, 4
      %s393 = scalar_lea.vmem %s2, %s392
      %p394 = pneg %p106
      %p395 = pneg %p103
      %p396 = scmp.lt.s32.totalorder %s26, 1
      %s397 = scalar_select %p396, %s26, 1
      %s398 = smul.addr %s397, 2
      %s399 = smul.addr %s398, 8
      %s400 = scalar_lea.vmem %s3, %s399
      %p401 = pneg %p132
      %p402 = pneg %p129
      %p403 = scmp.lt.s32.totalorder %s26, 1
      %s404 = scalar_select %p403, %s26, 1
      %s405 = smul.addr %s404, 8
      %s406 = scalar_lea.vmem %s4, %s405
      %p407 = pneg %p158
      %p408 = pneg %p155
      %p409 = scmp.lt.s32.totalorder %s26, 1
      %s410 = scalar_select %p409, %s26, 1
      %s411 = scalar_lea.vmem %s5, %s410
      %p412 = pneg %p184
      %p413 = pneg %p181
      %p414 = pneg %p205
      %p415 = pneg %p202
      %p416 = pneg %p226
      %p417 = pneg %p223
      %p418 = pneg %p247
      %p419 = pneg %p244
      %p420 = pneg %p268
      %p421 = pneg %p265
      %p422 = pneg %p294
      %p423 = pneg %p291
      %p424 = scmp.lt.s32.totalorder %s25, 1
      %s425 = scalar_select %p424, %s25, 1
      %s426 = smul.addr %s425, 4
      %s427 = scalar_lea.vmem %s10, %s426
      %p428 = scmp.lt.s32.totalorder %s25, 1
      %s429 = scalar_select %p428, %s25, 1
      %s430 = smul.addr %s429, 4
      %s431 = smul.addr %s430, 4
      %s432 = scalar_lea.vmem %s0, %s431
      %p433 = scmp.lt.s32.totalorder %s26, 1
      %s434 = scalar_select %p433, %s26, 1
      %s435 = smul.addr %s434, 4
      %s436 = smul.addr %s435, 8
      %s437 = scalar_lea.vmem %s1, %s436
      %p438 = scmp.lt.s32.totalorder %s26, 1
      %s439 = scalar_select %p438, %s26, 1
      %s440 = smul.addr %s439, 4
      %s441 = scalar_lea.vmem %s2, %s440
      %p442 = scmp.lt.s32.totalorder %s26, 1
      %s443 = scalar_select %p442, %s26, 1
      %s444 = smul.addr %s443, 2
      %s445 = smul.addr %s444, 8
      %s446 = scalar_lea.vmem %s3, %s445
      %p447 = scmp.lt.s32.totalorder %s26, 1
      %s448 = scalar_select %p447, %s26, 1
      %s449 = smul.addr %s448, 8
      %s450 = scalar_lea.vmem %s4, %s449
      %p451 = scmp.lt.s32.totalorder %s26, 1
      %s452 = scalar_select %p451, %s26, 1
      %s453 = scalar_lea.vmem %s5, %s452
      %p454 = scmp.lt.s32.totalorder %s25, 1
      %s455 = scalar_select %p454, %s25, 1
      %s456 = smul.addr %s455, 4
      %s457 = scalar_lea.vmem %s10, %s456
      %p458 = scmp.eq.s32.totalorder %s26, 0
      // Predicated region
      $region61: #{temporal_sfno_forward.6} parent=59 // pred_check
        %p459 = pneg %p458
      $region62: #{temporal_sfno_forward.6} parent=59 // pred_check_branch
        %461 = sbr.rel (%p459) target = $region64
      $region63: #{temporal_sfno_forward.6} parent=59 // pred_region
        %v462 = vld [vmem:[%s432] sm:$0x7]
        %v463 = vld [vmem:[%s432 + $0x4] sm:$0x7]
        %v464 = vld [vmem:[%s432 + $0x8] sm:$0x7]
        %v465 = vld [vmem:[%s432 + $0xc] sm:$0x7]
        %vm466 = vcmask 59392
        %467 = vst.msk [vmem:[#allocation2] sm:$0x7] %vm466, %v462
        %468 = vst.msk [vmem:[#allocation2 + $0x4] sm:$0x7] %vm466, %v463
        %469 = vst.msk [vmem:[#allocation2 + $0x8] sm:$0x7] %vm466, %v464
        %470 = vst.msk [vmem:[#allocation2 + $0xc] sm:$0x7] %vm466, %v465
      $region64: #{temporal_sfno_forward.6} parent=59 // pred_fallthru
        _
      %v471 = vld [vmem:[%s437] sm:$0xff]
      %v472 = vld [vmem:[%s437 + $0x8] sm:$0xff]
      %v473 = vld [vmem:[%s437 + $0x10] sm:$0xff]
      %v474 = vld [vmem:[%s437 + $0x18] sm:$0xff]
      %v475 = vld [vmem:[%s450] sm:$0xff]
      %v476 = vld [vmem:[%s453] sm:$0x1]
      %v477 = vld [vmem:[#allocation2] sm:$0x7]
      %v478 = vld [vmem:[#allocation2 + $0x4] sm:$0x7]
      %v479 = vld [vmem:[#allocation2 + $0x8] sm:$0x7]
      %v480 = vld [vmem:[#allocation2 + $0xc] sm:$0x7]
      %v481 = vld [vmem:[%s441] sm:$0x1]
      %v482 = vld [vmem:[%s441 + $0x1] sm:$0x1]
      %v483 = vld [vmem:[%s441 + $0x2] sm:$0x1]
      %v484 = vld [vmem:[%s441 + $0x3] sm:$0x1]
      %v489 = vlaneseq
      %v490 = vshrl.u32 %v489, 7
      %v491 = vsub.s32 0, %v490
      %v492 = vrot.slane %v481, %v491
      %v493 = vlaneseq
      %v494 = vshrl.u32 %v493, 7
      %v495 = vsub.s32 0, %v494
      %v496 = vrot.slane %v482, %v495
      %v497 = vlaneseq
      %v498 = vshrl.u32 %v497, 7
      %v499 = vsub.s32 0, %v498
      %v500 = vrot.slane %v483, %v499
      %v501 = vlaneseq
      %v502 = vshrl.u32 %v501, 7
      %v503 = vsub.s32 0, %v502
      %v504 = vrot.slane %v484, %v503
      %vm509 = vcmask 64512
      %v511 = vsel %vm509, %v477, 0
      %513 = vmatprep.subr.mxu0 0.0
      %514 = vmatpush1.msra.mxu0 %v471
      %515 = vmatprep.subr.mxu0 0.0
      %516 = vmatpush1.msra.mxu0 0.0
      %517 = vmatprep.subr.mxu0 0.0
      %518 = vmatpush1.msra.mxu0 0.0
      %519 = vmatprep.subr.mxu0 0.0
      %520 = vmatpush1.msra.mxu0 0.0
      %521 = vmatprep.subr.mxu0 0.0
      %522 = vmatpush1.msra.mxu0 0.0
      %523 = vmatprep.subr.mxu0 0.0
      %524 = vmatpush1.msra.mxu0 0.0
      %525 = vmatprep.subr.mxu0 0.0
      %526 = vmatpush1.msra.mxu0 0.0
      %527 = vmatprep.subr.mxu0 0.0
      %528 = vmatpush1.msra.mxu0 0.0
      %529 = vmatprep.subr.mxu0 0.0
      %530 = vmatpush1.msra.mxu0 0.0
      %531 = vmatprep.subr.mxu0 0.0
      %532 = vmatpush1.msra.mxu0 0.0
      %533 = vmatprep.subr.mxu0 0.0
      %534 = vmatpush1.msra.mxu0 0.0
      %535 = vmatprep.subr.mxu0 0.0
      %536 = vmatpush1.msra.mxu0 0.0
      %537 = vmatprep.subr.mxu0 0.0
      %538 = vmatpush1.msra.mxu0 0.0
      %539 = vmatprep.subr.mxu0 0.0
      %540 = vmatpush1.msra.mxu0 0.0
      %541 = vmatprep.subr.mxu0 0.0
      %542 = vmatpush1.msra.mxu0 0.0
      %543 = vmatprep.subr.mxu0 0.0
      %544 = vmatpush1.msra.mxu0 0.0
      %545 = vmatprep.subr.mxu0 0.0
      %546 = vmatpush1.msra.mxu0 0.0
      %547 = vmatprep.subr.mxu0 0.0
      %548 = vmatpush1.msra.mxu0 0.0
      %549 = vmatprep.subr.mxu0 0.0
      %550 = vmatpush1.msra.mxu0 0.0
      %551 = vmatprep.subr.mxu0 0.0
      %552 = vmatpush1.msra.mxu0 0.0
      %553 = vmatprep.subr.mxu0 0.0
      %554 = vmatpush1.msra.mxu0 0.0
      %555 = vmatprep.subr.mxu0 0.0
      %556 = vmatpush1.msra.mxu0 0.0
      %557 = vmatprep.subr.mxu0 0.0
      %558 = vmatpush1.msra.mxu0 0.0
      %559 = vmatprep.subr.mxu0 0.0
      %560 = vmatpush1.msra.mxu0 0.0
      %561 = vmatprep.subr.mxu0 0.0
      %562 = vmatpush1.msra.mxu0 0.0
      %563 = vmatprep.subr.mxu0 0.0
      %564 = vmatpush1.msra.mxu0 0.0
      %565 = vmatprep.subr.mxu0 0.0
      %566 = vmatpush1.msra.mxu0 0.0
      %567 = vmatprep.subr.mxu0 0.0
      %568 = vmatpush1.msra.mxu0 0.0
      %569 = vmatprep.subr.mxu0 0.0
      %570 = vmatpush1.msra.mxu0 0.0
      %571 = vmatprep.subr.mxu0 0.0
      %572 = vmatpush1.msra.mxu0 0.0
      %573 = vmatprep.subr.mxu0 0.0
      %574 = vmatpush1.msra.mxu0 0.0
      %575 = vmatprep.subr.mxu0 0.0
      %576 = vmatpush1.msra.mxu0 0.0
      %577 = vmatprep.mubr.f32.mxu0 0.0
      %578 = vmatmul.mubr.f32.gmra.mrb[0].mxu0 %v511
      %v579 = vpop.f32.mrb[0].mxu0
      %v580 = vadd.f32 %v492, %v579
      %v581 = vpop.f32.mrb[0].mxu0
      %582 = vdwg.mxu0
      %v584 = vsel %vm509, %v478, 0
      %586 = vmatprep.subr.mxu0 0.0
      %587 = vmatpush1.msra.mxu0 %v472
      %588 = vmatprep.subr.mxu0 0.0
      %589 = vmatpush1.msra.mxu0 0.0
      %590 = vmatprep.subr.mxu0 0.0
      %591 = vmatpush1.msra.mxu0 0.0
      %592 = vmatprep.subr.mxu0 0.0
      %593 = vmatpush1.msra.mxu0 0.0
      %594 = vmatprep.subr.mxu0 0.0
      %595 = vmatpush1.msra.mxu0 0.0
      %596 = vmatprep.subr.mxu0 0.0
      %597 = vmatpush1.msra.mxu0 0.0
      %598 = vmatprep.subr.mxu0 0.0
      %599 = vmatpush1.msra.mxu0 0.0
      %600 = vmatprep.subr.mxu0 0.0
      %601 = vmatpush1.msra.mxu0 0.0
      %602 = vmatprep.subr.mxu0 0.0
      %603 = vmatpush1.msra.mxu0 0.0
      %604 = vmatprep.subr.mxu0 0.0
      %605 = vmatpush1.msra.mxu0 0.0
      %606 = vmatprep.subr.mxu0 0.0
      %607 = vmatpush1.msra.mxu0 0.0
      %608 = vmatprep.subr.mxu0 0.0
      %609 = vmatpush1.msra.mxu0 0.0
      %610 = vmatprep.subr.mxu0 0.0
      %611 = vmatpush1.msra.mxu0 0.0
      %612 = vmatprep.subr.mxu0 0.0
      %613 = vmatpush1.msra.mxu0 0.0
      %614 = vmatprep.subr.mxu0 0.0
      %615 = vmatpush1.msra.mxu0 0.0
      %616 = vmatprep.subr.mxu0 0.0
      %617 = vmatpush1.msra.mxu0 0.0
      %618 = vmatprep.subr.mxu0 0.0
      %619 = vmatpush1.msra.mxu0 0.0
      %620 = vmatprep.subr.mxu0 0.0
      %621 = vmatpush1.msra.mxu0 0.0
      %622 = vmatprep.subr.mxu0 0.0
      %623 = vmatpush1.msra.mxu0 0.0
      %624 = vmatprep.subr.mxu0 0.0
      %625 = vmatpush1.msra.mxu0 0.0
      %626 = vmatprep.subr.mxu0 0.0
      %627 = vmatpush1.msra.mxu0 0.0
      %628 = vmatprep.subr.mxu0 0.0
      %629 = vmatpush1.msra.mxu0 0.0
      %630 = vmatprep.subr.mxu0 0.0
      %631 = vmatpush1.msra.mxu0 0.0
      %632 = vmatprep.subr.mxu0 0.0
      %633 = vmatpush1.msra.mxu0 0.0
      %634 = vmatprep.subr.mxu0 0.0
      %635 = vmatpush1.msra.mxu0 0.0
      %636 = vmatprep.subr.mxu0 0.0
      %637 = vmatpush1.msra.mxu0 0.0
      %638 = vmatprep.subr.mxu0 0.0
      %639 = vmatpush1.msra.mxu0 0.0
      %640 = vmatprep.subr.mxu0 0.0
      %641 = vmatpush1.msra.mxu0 0.0
      %642 = vmatprep.subr.mxu0 0.0
      %643 = vmatpush1.msra.mxu0 0.0
      %644 = vmatprep.subr.mxu0 0.0
      %645 = vmatpush1.msra.mxu0 0.0
      %646 = vmatprep.subr.mxu0 0.0
      %647 = vmatpush1.msra.mxu0 0.0
      %648 = vmatprep.subr.mxu0 0.0
      %649 = vmatpush1.msra.mxu0 0.0
      %650 = vmatprep.mubr.f32.mxu0 0.0
      %651 = vmatmul.mubr.f32.gmra.mrb[0].mxu0 %v584
      %v652 = vpop.f32.mrb[0].mxu0
      %v653 = vadd.f32 %v496, %v652
      %v654 = vpop.f32.mrb[0].mxu0
      %655 = vdwg.mxu0
      %v657 = vsel %vm509, %v479, 0
      %659 = vmatprep.subr.mxu0 0.0
      %660 = vmatpush1.msra.mxu0 %v473
      %661 = vmatprep.subr.mxu0 0.0
      %662 = vmatpush1.msra.mxu0 0.0
      %663 = vmatprep.subr.mxu0 0.0
      %664 = vmatpush1.msra.mxu0 0.0
      %665 = vmatprep.subr.mxu0 0.0
      %666 = vmatpush1.msra.mxu0 0.0
      %667 = vmatprep.subr.mxu0 0.0
      %668 = vmatpush1.msra.mxu0 0.0
      %669 = vmatprep.subr.mxu0 0.0
      %670 = vmatpush1.msra.mxu0 0.0
      %671 = vmatprep.subr.mxu0 0.0
      %672 = vmatpush1.msra.mxu0 0.0
      %673 = vmatprep.subr.mxu0 0.0
      %674 = vmatpush1.msra.mxu0 0.0
      %675 = vmatprep.subr.mxu0 0.0
      %676 = vmatpush1.msra.mxu0 0.0
      %677 = vmatprep.subr.mxu0 0.0
      %678 = vmatpush1.msra.mxu0 0.0
      %679 = vmatprep.subr.mxu0 0.0
      %680 = vmatpush1.msra.mxu0 0.0
      %681 = vmatprep.subr.mxu0 0.0
      %682 = vmatpush1.msra.mxu0 0.0
      %683 = vmatprep.subr.mxu0 0.0
      %684 = vmatpush1.msra.mxu0 0.0
      %685 = vmatprep.subr.mxu0 0.0
      %686 = vmatpush1.msra.mxu0 0.0
      %687 = vmatprep.subr.mxu0 0.0
      %688 = vmatpush1.msra.mxu0 0.0
      %689 = vmatprep.subr.mxu0 0.0
      %690 = vmatpush1.msra.mxu0 0.0
      %691 = vmatprep.subr.mxu0 0.0
      %692 = vmatpush1.msra.mxu0 0.0
      %693 = vmatprep.subr.mxu0 0.0
      %694 = vmatpush1.msra.mxu0 0.0
      %695 = vmatprep.subr.mxu0 0.0
      %696 = vmatpush1.msra.mxu0 0.0
      %697 = vmatprep.subr.mxu0 0.0
      %698 = vmatpush1.msra.mxu0 0.0
      %699 = vmatprep.subr.mxu0 0.0
      %700 = vmatpush1.msra.mxu0 0.0
      %701 = vmatprep.subr.mxu0 0.0
      %702 = vmatpush1.msra.mxu0 0.0
      %703 = vmatprep.subr.mxu0 0.0
      %704 = vmatpush1.msra.mxu0 0.0
      %705 = vmatprep.subr.mxu0 0.0
      %706 = vmatpush1.msra.mxu0 0.0
      %707 = vmatprep.subr.mxu0 0.0
      %708 = vmatpush1.msra.mxu0 0.0
      %709 = vmatprep.subr.mxu0 0.0
      %710 = vmatpush1.msra.mxu0 0.0
      %711 = vmatprep.subr.mxu0 0.0
      %712 = vmatpush1.msra.mxu0 0.0
      %713 = vmatprep.subr.mxu0 0.0
      %714 = vmatpush1.msra.mxu0 0.0
      %715 = vmatprep.subr.mxu0 0.0
      %716 = vmatpush1.msra.mxu0 0.0
      %717 = vmatprep.subr.mxu0 0.0
      %718 = vmatpush1.msra.mxu0 0.0
      %719 = vmatprep.subr.mxu0 0.0
      %720 = vmatpush1.msra.mxu0 0.0
      %721 = vmatprep.subr.mxu0 0.0
      %722 = vmatpush1.msra.mxu0 0.0
      %723 = vmatprep.mubr.f32.mxu0 0.0
      %724 = vmatmul.mubr.f32.gmra.mrb[0].mxu0 %v657
      %v725 = vpop.f32.mrb[0].mxu0
      %v726 = vadd.f32 %v500, %v725
      %v727 = vpop.f32.mrb[0].mxu0
      %728 = vdwg.mxu0
      %v730 = vsel %vm509, %v480, 0
      %732 = vmatprep.subr.mxu0 0.0
      %733 = vmatpush1.msra.mxu0 %v474
      %734 = vmatprep.subr.mxu0 0.0
      %735 = vmatpush1.msra.mxu0 0.0
      %736 = vmatprep.subr.mxu0 0.0
      %737 = vmatpush1.msra.mxu0 0.0
      %738 = vmatprep.subr.mxu0 0.0
      %739 = vmatpush1.msra.mxu0 0.0
      %740 = vmatprep.subr.mxu0 0.0
      %741 = vmatpush1.msra.mxu0 0.0
      %742 = vmatprep.subr.mxu0 0.0
      %743 = vmatpush1.msra.mxu0 0.0
      %744 = vmatprep.subr.mxu0 0.0
      %745 = vmatpush1.msra.mxu0 0.0
      %746 = vmatprep.subr.mxu0 0.0
      %747 = vmatpush1.msra.mxu0 0.0
      %748 = vmatprep.subr.mxu0 0.0
      %749 = vmatpush1.msra.mxu0 0.0
      %750 = vmatprep.subr.mxu0 0.0
      %751 = vmatpush1.msra.mxu0 0.0
      %752 = vmatprep.subr.mxu0 0.0
      %753 = vmatpush1.msra.mxu0 0.0
      %754 = vmatprep.subr.mxu0 0.0
      %755 = vmatpush1.msra.mxu0 0.0
      %756 = vmatprep.subr.mxu0 0.0
      %757 = vmatpush1.msra.mxu0 0.0
      %758 = vmatprep.subr.mxu0 0.0
      %759 = vmatpush1.msra.mxu0 0.0
      %760 = vmatprep.subr.mxu0 0.0
      %761 = vmatpush1.msra.mxu0 0.0
      %762 = vmatprep.subr.mxu0 0.0
      %763 = vmatpush1.msra.mxu0 0.0
      %764 = vmatprep.subr.mxu0 0.0
      %765 = vmatpush1.msra.mxu0 0.0
      %766 = vmatprep.subr.mxu0 0.0
      %767 = vmatpush1.msra.mxu0 0.0
      %768 = vmatprep.subr.mxu0 0.0
      %769 = vmatpush1.msra.mxu0 0.0
      %770 = vmatprep.subr.mxu0 0.0
      %771 = vmatpush1.msra.mxu0 0.0
      %772 = vmatprep.subr.mxu0 0.0
      %773 = vmatpush1.msra.mxu0 0.0
      %774 = vmatprep.subr.mxu0 0.0
      %775 = vmatpush1.msra.mxu0 0.0
      %776 = vmatprep.subr.mxu0 0.0
      %777 = vmatpush1.msra.mxu0 0.0
      %778 = vmatprep.subr.mxu0 0.0
      %779 = vmatpush1.msra.mxu0 0.0
      %780 = vmatprep.subr.mxu0 0.0
      %781 = vmatpush1.msra.mxu0 0.0
      %782 = vmatprep.subr.mxu0 0.0
      %783 = vmatpush1.msra.mxu0 0.0
      %784 = vmatprep.subr.mxu0 0.0
      %785 = vmatpush1.msra.mxu0 0.0
      %786 = vmatprep.subr.mxu0 0.0
      %787 = vmatpush1.msra.mxu0 0.0
      %788 = vmatprep.subr.mxu0 0.0
      %789 = vmatpush1.msra.mxu0 0.0
      %790 = vmatprep.subr.mxu0 0.0
      %791 = vmatpush1.msra.mxu0 0.0
      %792 = vmatprep.subr.mxu0 0.0
      %793 = vmatpush1.msra.mxu0 0.0
      %794 = vmatprep.subr.mxu0 0.0
      %795 = vmatpush1.msra.mxu0 0.0
      %796 = vmatprep.mubr.f32.mxu0 0.0
      %797 = vmatmul.mubr.f32.gmra.mrb[0].mxu0 %v730
      %v798 = vpop.f32.mrb[0].mxu0
      %v799 = vadd.f32 %v504, %v798
      %v800 = vpop.f32.mrb[0].mxu0
      %801 = vdwg.mxu0
      %v807 = vunpack.c.l.s4 1966171168
      %v808 = vunpack.c.0.s8 %v807
      %v809 = vlaneseq
      %v810 = vshrl.u32 %v809, 7
      %v811 = vsub.s32 %v808, %v810
      %v812 = vrot.slane %v580, %v811
      %v813 = vcombine.high %v812, %v812
      %v815 = vunpack.c.l.s4 1966171168
      %v816 = vunpack.c.0.s8 %v815
      %v817 = vlaneseq
      %v818 = vshrl.u32 %v817, 7
      %v819 = vsub.s32 %v816, %v818
      %v820 = vrot.slane %v812, %v819
      %v822 = vunpack.c.l.s4 1966171168
      %v823 = vunpack.c.0.s8 %v822
      %v824 = vlaneseq
      %v825 = vshrl.u32 %v824, 7
      %v826 = vsub.s32 %v823, %v825
      %v827 = vrot.slane %v813, %v826
      %v828 = vcombine.high %v820, %v820
      %v830 = vunpack.c.l.s4 1966171168
      %v831 = vunpack.c.0.s8 %v830
      %v832 = vlaneseq
      %v833 = vshrl.u32 %v832, 7
      %v834 = vsub.s32 %v831, %v833
      %v835 = vrot.slane %v653, %v834
      %v836 = vcombine.high %v835, %v835
      %v838 = vunpack.c.l.s4 1966171168
      %v839 = vunpack.c.0.s8 %v838
      %v840 = vlaneseq
      %v841 = vshrl.u32 %v840, 7
      %v842 = vsub.s32 %v839, %v841
      %v843 = vrot.slane %v835, %v842
      %v845 = vunpack.c.l.s4 1966171168
      %v846 = vunpack.c.0.s8 %v845
      %v847 = vlaneseq
      %v848 = vshrl.u32 %v847, 7
      %v849 = vsub.s32 %v846, %v848
      %v850 = vrot.slane %v836, %v849
      %v851 = vcombine.high %v843, %v843
      %v853 = vunpack.c.l.s4 1966171168
      %v854 = vunpack.c.0.s8 %v853
      %v855 = vlaneseq
      %v856 = vshrl.u32 %v855, 7
      %v857 = vsub.s32 %v854, %v856
      %v858 = vrot.slane %v726, %v857
      %v859 = vcombine.high %v858, %v858
      %v861 = vunpack.c.l.s4 1966171168
      %v862 = vunpack.c.0.s8 %v861
      %v863 = vlaneseq
      %v864 = vshrl.u32 %v863, 7
      %v865 = vsub.s32 %v862, %v864
      %v866 = vrot.slane %v858, %v865
      %v868 = vunpack.c.l.s4 1966171168
      %v869 = vunpack.c.0.s8 %v868
      %v870 = vlaneseq
      %v871 = vshrl.u32 %v870, 7
      %v872 = vsub.s32 %v869, %v871
      %v873 = vrot.slane %v859, %v872
      %v874 = vcombine.high %v866, %v866
      %v876 = vunpack.c.l.s4 1966171168
      %v877 = vunpack.c.0.s8 %v876
      %v878 = vlaneseq
      %v879 = vshrl.u32 %v878, 7
      %v880 = vsub.s32 %v877, %v879
      %v881 = vrot.slane %v799, %v880
      %v882 = vcombine.high %v881, %v881
      %v884 = vunpack.c.l.s4 1966171168
      %v885 = vunpack.c.0.s8 %v884
      %v886 = vlaneseq
      %v887 = vshrl.u32 %v886, 7
      %v888 = vsub.s32 %v885, %v887
      %v889 = vrot.slane %v881, %v888
      %v891 = vunpack.c.l.s4 1966171168
      %v892 = vunpack.c.0.s8 %v891
      %v893 = vlaneseq
      %v894 = vshrl.u32 %v893, 7
      %v895 = vsub.s32 %v892, %v894
      %v896 = vrot.slane %v882, %v895
      %v897 = vcombine.high %v889, %v889
      %v899 = vlaneseq
      %v900 = vshrl.u32 %v899, 7
      %v901 = vsub.s32 0, %v900
      %v902 = vrot.slane %v476, %v901
      %v904 = vcombine.low %v820, %v827
      %v905 = vcombine.low %v828, %v843
      %v906 = vcombine.low %v850, %v851
      %v907 = vcombine.low %v866, %v873
      %v909 = vunpack.c.l.s4 1966171168
      %v910 = vunpack.c.0.s8 %v909
      %v911 = vlaneseq
      %v912 = vshrl.u32 %v911, 7
      %v913 = vsub.s32 %v910, %v912
      %v914 = vrot.slane %v904, %v913
      %v916 = vunpack.c.l.s4 1966171168
      %v917 = vunpack.c.0.s8 %v916
      %v918 = vlaneseq
      %v919 = vshrl.u32 %v918, 7
      %v920 = vsub.s32 %v917, %v919
      %v921 = vrot.slane %v905, %v920
      %v923 = vunpack.c.l.s4 1966171168
      %v924 = vunpack.c.0.s8 %v923
      %v925 = vlaneseq
      %v926 = vshrl.u32 %v925, 7
      %v927 = vsub.s32 %v924, %v926
      %v928 = vrot.slane %v906, %v927
      %v930 = vunpack.c.l.s4 1966171168
      %v931 = vunpack.c.0.s8 %v930
      %v932 = vlaneseq
      %v933 = vshrl.u32 %v932, 7
      %v934 = vsub.s32 %v931, %v933
      %v935 = vrot.slane %v907, %v934
      %v936 = vcombine.low %v914, %v921
      %v937 = vcombine.low %v928, %v935
      %v939 = vunpack.c.l.s4 1966171168
      %v940 = vunpack.c.0.s8 %v939
      %v941 = vlaneseq
      %v942 = vshrl.u32 %v941, 7
      %v943 = vsub.s32 %v940, %v942
      %v944 = vrot.slane %v936, %v943
      %v946 = vunpack.c.l.s4 1966171168
      %v947 = vunpack.c.0.s8 %v946
      %v948 = vlaneseq
      %v949 = vshrl.u32 %v948, 7
      %v950 = vsub.s32 %v947, %v949
      %v951 = vrot.slane %v937, %v950
      %v952 = vcombine.low %v944, %v951
      %v953 = vcombine.low %v874, %v889
      %v954 = vcombine.low %v896, %v897
      %v956 = vunpack.c.l.s4 1966171168
      %v957 = vunpack.c.0.s8 %v956
      %v958 = vlaneseq
      %v959 = vshrl.u32 %v958, 7
      %v960 = vsub.s32 %v957, %v959
      %v961 = vrot.slane %v953, %v960
      %v963 = vunpack.c.l.s4 1966171168
      %v964 = vunpack.c.0.s8 %v963
      %v965 = vlaneseq
      %v966 = vshrl.u32 %v965, 7
      %v967 = vsub.s32 %v964, %v966
      %v968 = vrot.slane %v954, %v967
      %v969 = vcombine.low %v961, %v968
      %v971 = vunpack.c.l.s4 1966171168
      %v972 = vunpack.c.0.s8 %v971
      %v973 = vlaneseq
      %v974 = vshrl.u32 %v973, 7
      %v975 = vsub.s32 %v972, %v974
      %v976 = vrot.slane %v969, %v975
      %v977 = vsel %vm509, %v952, 0
      %v979 = vsel %vm509, %v976, 0
      %v982 = vsel %vm509, %v475, 0
      %984 = vmatprep.subr.mxu0 0.0
      %985 = vmatpush1.xpose.msra.mxu0 %v982
      %986 = vmatprep.subr.mxu0 0.0
      %987 = vmatpush1.xpose.msra.mxu0 0.0
      %988 = vmatprep.subr.mxu0 0.0
      %989 = vmatpush1.xpose.msra.mxu0 0.0
      %990 = vmatprep.subr.mxu0 0.0
      %991 = vmatpush1.xpose.msra.mxu0 0.0
      %992 = vmatprep.subr.mxu0 0.0
      %993 = vmatpush1.xpose.msra.mxu0 0.0
      %994 = vmatprep.subr.mxu0 0.0
      %995 = vmatpush1.xpose.msra.mxu0 0.0
      %996 = vmatprep.subr.mxu0 0.0
      %997 = vmatpush1.xpose.msra.mxu0 0.0
      %998 = vmatprep.subr.mxu0 0.0
      %999 = vmatpush1.xpose.msra.mxu0 0.0
      %1000 = vmatprep.subr.mxu0 0.0
      %1001 = vmatpush1.xpose.msra.mxu0 0.0
      %1002 = vmatprep.subr.mxu0 0.0
      %1003 = vmatpush1.xpose.msra.mxu0 0.0
      %1004 = vmatprep.subr.mxu0 0.0
      %1005 = vmatpush1.xpose.msra.mxu0 0.0
      %1006 = vmatprep.subr.mxu0 0.0
      %1007 = vmatpush1.xpose.msra.mxu0 0.0
      %1008 = vmatprep.subr.mxu0 0.0
      %1009 = vmatpush1.xpose.msra.mxu0 0.0
      %1010 = vmatprep.subr.mxu0 0.0
      %1011 = vmatpush1.xpose.msra.mxu0 0.0
      %1012 = vmatprep.subr.mxu0 0.0
      %1013 = vmatpush1.xpose.msra.mxu0 0.0
      %1014 = vmatprep.subr.mxu0 0.0
      %1015 = vmatpush1.xpose.msra.mxu0 0.0
      %1016 = vmatprep.subr.mxu0 0.0
      %1017 = vmatpush1.xpose.msra.mxu0 0.0
      %1018 = vmatprep.subr.mxu0 0.0
      %1019 = vmatpush1.xpose.msra.mxu0 0.0
      %1020 = vmatprep.subr.mxu0 0.0
      %1021 = vmatpush1.xpose.msra.mxu0 0.0
      %1022 = vmatprep.subr.mxu0 0.0
      %1023 = vmatpush1.xpose.msra.mxu0 0.0
      %1024 = vmatprep.subr.mxu0 0.0
      %1025 = vmatpush1.xpose.msra.mxu0 0.0
      %1026 = vmatprep.subr.mxu0 0.0
      %1027 = vmatpush1.xpose.msra.mxu0 0.0
      %1028 = vmatprep.subr.mxu0 0.0
      %1029 = vmatpush1.xpose.msra.mxu0 0.0
      %1030 = vmatprep.subr.mxu0 0.0
      %1031 = vmatpush1.xpose.msra.mxu0 0.0
      %1032 = vmatprep.subr.mxu0 0.0
      %1033 = vmatpush1.xpose.msra.mxu0 0.0
      %1034 = vmatprep.subr.mxu0 0.0
      %1035 = vmatpush1.xpose.msra.mxu0 0.0
      %1036 = vmatprep.subr.mxu0 0.0
      %1037 = vmatpush1.xpose.msra.mxu0 0.0
      %1038 = vmatprep.subr.mxu0 0.0
      %1039 = vmatpush1.xpose.msra.mxu0 0.0
      %1040 = vmatprep.subr.mxu0 0.0
      %1041 = vmatpush1.xpose.msra.mxu0 0.0
      %1042 = vmatprep.subr.mxu0 0.0
      %1043 = vmatpush1.xpose.msra.mxu0 0.0
      %1044 = vmatprep.subr.mxu0 0.0
      %1045 = vmatpush1.xpose.msra.mxu0 0.0
      %1046 = vmatprep.subr.mxu0 0.0
      %1047 = vmatpush1.xpose.msra.mxu0 0.0
      %1048 = vmatprep.mubr.f32.mxu0 0.0
      %1049 = vmatmul.mubr.f32.gmra.mrb[0].mxu0 %v977
      %v1050 = vpop.f32.mrb[0].mxu0
      %v1051 = vadd.f32 %v902, %v1050
      %v1052 = vpop.f32.mrb[0].mxu0
      %1053 = vmatprep.mubr.f32.mxu0 0.0
      %1054 = vmatmul.mubr.f32.gmra.mrb[0].mxu0 %v979
      %v1055 = vpop.f32.mrb[0].mxu0
      %v1056 = vadd.f32 %v902, %v1055
      %v1057 = vpop.f32.mrb[0].mxu0
      %1058 = vdwg.mxu0
      %v1059 = vmul.f32 %v1051, 0.5
      %v1060 = vmul.f32 %v1056, 0.5
      %v1061 = vmul.f32 %v1051, 0.70710677
      %v1062 = vmul.f32 %v1056, 0.70710677
      %v1063 = vand.u32 2147483647, %v1061
      %v1064 = vand.u32 2147483647, %v1062
      %v1065 = vmul.f32 %v1063, 0.5
      %v1066 = vmul.f32 %v1064, 0.5
      %v1067 = vadd.f32 %v1065, 1.0
      %v1068 = vadd.f32 %v1066, 1.0
      %v1069 = vrcp.pop %v1067
      %v1070 = vmul.f32 1.0, %v1069
      %v1071 = vrcp.pop %v1068
      %v1072 = vmul.f32 1.0, %v1071
      %v1073 = vmul.f32 %v1070, 0.17087276
      %v1074 = vmul.f32 %v1072, 0.17087276
      %v1075 = vadd.f32 %v1073, -0.82215226
      %v1076 = vadd.f32 %v1074, -0.82215226
      %v1077 = vmul.f32 %v1070, %v1075
      %v1078 = vmul.f32 %v1072, %v1076
      %v1079 = vadd.f32 %v1077, 1.4885159
      %v1080 = vadd.f32 %v1078, 1.4885159
      %v1081 = vmul.f32 %v1070, %v1079
      %v1082 = vmul.f32 %v1072, %v1080
      %v1083 = vadd.f32 %v1081, -1.135204
      %v1084 = vadd.f32 %v1082, -1.135204
      %v1085 = vmul.f32 %v1070, %v1083
      %v1086 = vmul.f32 %v1072, %v1084
      %v1087 = vadd.f32 %v1085, 0.27886808
      %v1088 = vadd.f32 %v1086, 0.27886808
      %v1089 = vmul.f32 %v1070, %v1087
      %v1090 = vmul.f32 %v1072, %v1088
      %v1091 = vadd.f32 %v1089, -0.18628806
      %v1092 = vadd.f32 %v1090, -0.18628806
      %v1093 = vmul.f32 %v1070, %v1091
      %v1094 = vmul.f32 %v1072, %v1092
      %v1095 = vadd.f32 %v1093, 0.09678418
      %v1096 = vadd.f32 %v1094, 0.09678418
      %v1097 = vmul.f32 %v1070, %v1095
      %v1098 = vmul.f32 %v1072, %v1096
      %v1099 = vadd.f32 %v1097, 0.37409195
      %v1100 = vadd.f32 %v1098, 0.37409195
      %v1101 = vmul.f32 %v1070, %v1099
      %v1102 = vmul.f32 %v1072, %v1100
      %v1103 = vadd.f32 %v1101, 1.0000237
      %v1104 = vadd.f32 %v1102, 1.0000237
      %v1105 = vmul.f32 %v1070, %v1103
      %v1106 = vmul.f32 %v1072, %v1104
      %v1107 = vadd.f32 %v1105, -1.2655122
      %v1108 = vadd.f32 %v1106, -1.2655122
      %v1109 = vsub.f32 0.0, %v1063
      %v1110 = vsub.f32 0.0, %v1064
      %v1111 = vmul.f32 %v1109, %v1063
      %v1112 = vmul.f32 %v1110, %v1064
      %v1113 = vadd.f32 %v1111, %v1107
      %v1114 = vadd.f32 %v1112, %v1108
      %v1115 = vmul.f32 %v1113, 1.442695
      %v1116 = vpow.pop %v1115
      %v1117 = vmul.f32 %v1114, 1.442695
      %v1118 = vpow.pop %v1117
      %v1119 = vmul.f32 %v1070, %v1116
      %v1120 = vmul.f32 %v1072, %v1118
      %vm1121 = vcmp.ge.f32.partialorder %v1061, 0.0
      %vm1122 = vcmp.ge.f32.partialorder %v1062, 0.0
      %v1123 = vsub.f32 1.0, %v1119
      %v1124 = vsub.f32 1.0, %v1120
      %v1125 = vsub.f32 %v1119, 1.0
      %v1126 = vsub.f32 %v1120, 1.0
      %v1127 = vsel %vm1121, %v1123, %v1125
      %v1128 = vsel %vm1122, %v1124, %v1126
      %v1129 = vadd.f32 %v1127, 1.0
      %v1130 = vadd.f32 %v1128, 1.0
      %v1131 = vmul.f32 %v1059, %v1129
      %v1132 = vmul.f32 %v1060, %v1130
      %v1135 = vcombine.high %v1131, %v1131
      %v1137 = vunpack.c.l.s4 1966171168
      %v1138 = vunpack.c.0.s8 %v1137
      %v1139 = vlaneseq
      %v1140 = vshrl.u32 %v1139, 7
      %v1141 = vsub.s32 %v1138, %v1140
      %v1142 = vrot.slane %v1131, %v1141
      %v1144 = vunpack.c.l.s4 1966171168
      %v1145 = vunpack.c.0.s8 %v1144
      %v1146 = vlaneseq
      %v1147 = vshrl.u32 %v1146, 7
      %v1148 = vsub.s32 %v1145, %v1147
      %v1149 = vrot.slane %v1135, %v1148
      %v1150 = vcombine.high %v1142, %v1142
      %v1151 = vcombine.high %v1149, %v1149
      %v1153 = vunpack.c.l.s4 1966171168
      %v1154 = vunpack.c.0.s8 %v1153
      %v1155 = vlaneseq
      %v1156 = vshrl.u32 %v1155, 7
      %v1157 = vsub.s32 %v1154, %v1156
      %v1158 = vrot.slane %v1142, %v1157
      %v1160 = vunpack.c.l.s4 1966171168
      %v1161 = vunpack.c.0.s8 %v1160
      %v1162 = vlaneseq
      %v1163 = vshrl.u32 %v1162, 7
      %v1164 = vsub.s32 %v1161, %v1163
      %v1165 = vrot.slane %v1149, %v1164
      %v1167 = vunpack.c.l.s4 1966171168
      %v1168 = vunpack.c.0.s8 %v1167
      %v1169 = vlaneseq
      %v1170 = vshrl.u32 %v1169, 7
      %v1171 = vsub.s32 %v1168, %v1170
      %v1172 = vrot.slane %v1150, %v1171
      %v1174 = vunpack.c.l.s4 1966171168
      %v1175 = vunpack.c.0.s8 %v1174
      %v1176 = vlaneseq
      %v1177 = vshrl.u32 %v1176, 7
      %v1178 = vsub.s32 %v1175, %v1177
      %v1179 = vrot.slane %v1151, %v1178
      %v1180 = vcombine.high %v1158, %v1158
      %v1181 = vcombine.high %v1165, %v1165
      %v1182 = vcombine.high %v1172, %v1172
      %v1183 = vcombine.high %v1179, %v1179
      %v1185 = vunpack.c.l.s4 1966171168
      %v1186 = vunpack.c.0.s8 %v1185
      %v1187 = vlaneseq
      %v1188 = vshrl.u32 %v1187, 7
      %v1189 = vsub.s32 %v1186, %v1188
      %v1190 = vrot.slane %v1132, %v1189
      %v1191 = vcombine.high %v1190, %v1190
      %v1193 = vunpack.c.l.s4 1966171168
      %v1194 = vunpack.c.0.s8 %v1193
      %v1195 = vlaneseq
      %v1196 = vshrl.u32 %v1195, 7
      %v1197 = vsub.s32 %v1194, %v1196
      %v1198 = vrot.slane %v1190, %v1197
      %v1200 = vunpack.c.l.s4 1966171168
      %v1201 = vunpack.c.0.s8 %v1200
      %v1202 = vlaneseq
      %v1203 = vshrl.u32 %v1202, 7
      %v1204 = vsub.s32 %v1201, %v1203
      %v1205 = vrot.slane %v1191, %v1204
      %v1206 = vcombine.high %v1198, %v1198
      %v1207 = vcombine.high %v1205, %v1205
      %v1220 = vcombine.low %v1158, %v1172
      %v1222 = vunpack.c.l.s4 1966171168
      %v1223 = vunpack.c.0.s8 %v1222
      %v1224 = vlaneseq
      %v1225 = vshrl.u32 %v1224, 7
      %v1226 = vsub.s32 %v1223, %v1225
      %v1227 = vrot.slane %v1220, %v1226
      %v1229 = vunpack.c.l.s4 1966171168
      %v1230 = vunpack.c.0.s8 %v1229
      %v1231 = vlaneseq
      %v1232 = vshrl.u32 %v1231, 7
      %v1233 = vsub.s32 %v1230, %v1232
      %v1234 = vrot.slane %v1180, %v1233
      %v1235 = vcombine.low %v1227, %v1234
      %v1237 = vunpack.c.l.s4 1966171168
      %v1238 = vunpack.c.0.s8 %v1237
      %v1239 = vlaneseq
      %v1240 = vshrl.u32 %v1239, 7
      %v1241 = vsub.s32 %v1238, %v1240
      %v1242 = vrot.slane %v1235, %v1241
      %v1243 = vcombine.low %v1182, %v1165
      %v1245 = vunpack.c.l.s4 1966171168
      %v1246 = vunpack.c.0.s8 %v1245
      %v1247 = vlaneseq
      %v1248 = vshrl.u32 %v1247, 7
      %v1249 = vsub.s32 %v1246, %v1248
      %v1250 = vrot.slane %v1243, %v1249
      %v1252 = vunpack.c.l.s4 1966171168
      %v1253 = vunpack.c.0.s8 %v1252
      %v1254 = vlaneseq
      %v1255 = vshrl.u32 %v1254, 7
      %v1256 = vsub.s32 %v1253, %v1255
      %v1257 = vrot.slane %v1179, %v1256
      %v1258 = vcombine.low %v1250, %v1257
      %v1260 = vunpack.c.l.s4 1966171168
      %v1261 = vunpack.c.0.s8 %v1260
      %v1262 = vlaneseq
      %v1263 = vshrl.u32 %v1262, 7
      %v1264 = vsub.s32 %v1261, %v1263
      %v1265 = vrot.slane %v1258, %v1264
      %v1266 = vcombine.low %v1181, %v1183
      %v1268 = vunpack.c.l.s4 1966171168
      %v1269 = vunpack.c.0.s8 %v1268
      %v1270 = vlaneseq
      %v1271 = vshrl.u32 %v1270, 7
      %v1272 = vsub.s32 %v1269, %v1271
      %v1273 = vrot.slane %v1266, %v1272
      %v1275 = vunpack.c.l.s4 1966171168
      %v1276 = vunpack.c.0.s8 %v1275
      %v1277 = vlaneseq
      %v1278 = vshrl.u32 %v1277, 7
      %v1279 = vsub.s32 %v1276, %v1278
      %v1280 = vrot.slane %v1198, %v1279
      %v1281 = vcombine.low %v1273, %v1280
      %v1283 = vunpack.c.l.s4 1966171168
      %v1284 = vunpack.c.0.s8 %v1283
      %v1285 = vlaneseq
      %v1286 = vshrl.u32 %v1285, 7
      %v1287 = vsub.s32 %v1284, %v1286
      %v1288 = vrot.slane %v1281, %v1287
      %v1289 = vcombine.low %v1205, %v1206
      %v1291 = vunpack.c.l.s4 1966171168
      %v1292 = vunpack.c.0.s8 %v1291
      %v1293 = vlaneseq
      %v1294 = vshrl.u32 %v1293, 7
      %v1295 = vsub.s32 %v1292, %v1294
      %v1296 = vrot.slane %v1289, %v1295
      %v1298 = vunpack.c.l.s4 1966171168
      %v1299 = vunpack.c.0.s8 %v1298
      %v1300 = vlaneseq
      %v1301 = vshrl.u32 %v1300, 7
      %v1302 = vsub.s32 %v1299, %v1301
      %v1303 = vrot.slane %v1207, %v1302
      %v1304 = vcombine.low %v1296, %v1303
      %v1306 = vunpack.c.l.s4 1966171168
      %v1307 = vunpack.c.0.s8 %v1306
      %v1308 = vlaneseq
      %v1309 = vshrl.u32 %v1308, 7
      %v1310 = vsub.s32 %v1307, %v1309
      %v1311 = vrot.slane %v1304, %v1310
      %vm1316 = vcmask 59392
      %1317 = vst.msk [vmem:[#allocation2] sm:$0x7] %vm1316, %v1242
      %1318 = vst.msk [vmem:[#allocation2 + $0x4] sm:$0x7] %vm1316, %v1265
      %1319 = vst.msk [vmem:[#allocation2 + $0x8] sm:$0x7] %vm1316, %v1288
      %1320 = vst.msk [vmem:[#allocation2 + $0xc] sm:$0x7] %vm1316, %v1311
      %p1321 = scmp.eq.s32.totalorder %s26, 1
      // Predicated region
      $region65: #{temporal_sfno_forward.6} parent=59 // pred_check
        %p1322 = pneg %p1321
      $region66: #{temporal_sfno_forward.6} parent=59 // pred_check_branch
        %1324 = sbr.rel (%p1322) target = $region68
      $region67: #{temporal_sfno_forward.6} parent=59 // pred_region
        %v1325 = vld [vmem:[%s6] sm:$0x1]
        %v1326 = vld [vmem:[%s6 + $0x1] sm:$0x1]
        %v1327 = vld [vmem:[%s6 + $0x2] sm:$0x1]
        %v1328 = vld [vmem:[%s6 + $0x3] sm:$0x1]
        %v1333 = vlaneseq
        %v1334 = vshrl.u32 %v1333, 7
        %v1335 = vsub.s32 0, %v1334
        %v1336 = vrot.slane %v1325, %v1335
        %v1337 = vlaneseq
        %v1338 = vshrl.u32 %v1337, 7
        %v1339 = vsub.s32 0, %v1338
        %v1340 = vrot.slane %v1326, %v1339
        %v1341 = vlaneseq
        %v1342 = vshrl.u32 %v1341, 7
        %v1343 = vsub.s32 0, %v1342
        %v1344 = vrot.slane %v1327, %v1343
        %v1345 = vlaneseq
        %v1346 = vshrl.u32 %v1345, 7
        %v1347 = vsub.s32 0, %v1346
        %v1348 = vrot.slane %v1328, %v1347
        %1349 = vset.pattern.permute.xlu0 0
        %1350 = vperm.xlu0 %1349, %v1336
        %v1351 = vpop.permute.xlu0 %1350
        %1353 = vset.pattern.permute.xlu0 0
        %1354 = vperm.xlu0 %1353, %v1340
        %v1355 = vpop.permute.xlu0 %1354
        %1357 = vset.pattern.permute.xlu0 0
        %1358 = vperm.xlu0 %1357, %v1344
        %v1359 = vpop.permute.xlu0 %1358
        %1361 = vset.pattern.permute.xlu0 0
        %1362 = vperm.xlu0 %1361, %v1348
        %v1363 = vpop.permute.xlu0 %1362
        %v1365 = vmul.f32 %v1158, %v1351
        %v1366 = vmul.f32 %v1172, %v1351
        %v1367 = vmul.f32 %v1180, %v1351
        %v1368 = vmul.f32 %v1182, %v1355
        %v1369 = vmul.f32 %v1165, %v1355
        %v1370 = vmul.f32 %v1179, %v1355
        %v1371 = vmul.f32 %v1181, %v1359
        %v1372 = vmul.f32 %v1183, %v1359
        %v1373 = vmul.f32 %v1198, %v1359
        %v1374 = vmul.f32 %v1205, %v1363
        %v1375 = vmul.f32 %v1206, %v1363
        %v1376 = vmul.f32 %v1207, %v1363
        %v1389 = vcombine.low %v1365, %v1366
        %v1391 = vunpack.c.l.s4 1966171168
        %v1392 = vunpack.c.0.s8 %v1391
        %v1393 = vlaneseq
        %v1394 = vshrl.u32 %v1393, 7
        %v1395 = vsub.s32 %v1392, %v1394
        %v1396 = vrot.slane %v1389, %v1395
        %v1398 = vunpack.c.l.s4 1966171168
        %v1399 = vunpack.c.0.s8 %v1398
        %v1400 = vlaneseq
        %v1401 = vshrl.u32 %v1400, 7
        %v1402 = vsub.s32 %v1399, %v1401
        %v1403 = vrot.slane %v1367, %v1402
        %v1404 = vcombine.low %v1396, %v1403
        %v1406 = vunpack.c.l.s4 1966171168
        %v1407 = vunpack.c.0.s8 %v1406
        %v1408 = vlaneseq
        %v1409 = vshrl.u32 %v1408, 7
        %v1410 = vsub.s32 %v1407, %v1409
        %v1411 = vrot.slane %v1404, %v1410
        %v1412 = vcombine.low %v1368, %v1369
        %v1414 = vunpack.c.l.s4 1966171168
        %v1415 = vunpack.c.0.s8 %v1414
        %v1416 = vlaneseq
        %v1417 = vshrl.u32 %v1416, 7
        %v1418 = vsub.s32 %v1415, %v1417
        %v1419 = vrot.slane %v1412, %v1418
        %v1421 = vunpack.c.l.s4 1966171168
        %v1422 = vunpack.c.0.s8 %v1421
        %v1423 = vlaneseq
        %v1424 = vshrl.u32 %v1423, 7
        %v1425 = vsub.s32 %v1422, %v1424
        %v1426 = vrot.slane %v1370, %v1425
        %v1427 = vcombine.low %v1419, %v1426
        %v1429 = vunpack.c.l.s4 1966171168
        %v1430 = vunpack.c.0.s8 %v1429
        %v1431 = vlaneseq
        %v1432 = vshrl.u32 %v1431, 7
        %v1433 = vsub.s32 %v1430, %v1432
        %v1434 = vrot.slane %v1427, %v1433
        %v1435 = vcombine.low %v1371, %v1372
        %v1437 = vunpack.c.l.s4 1966171168
        %v1438 = vunpack.c.0.s8 %v1437
        %v1439 = vlaneseq
        %v1440 = vshrl.u32 %v1439, 7
        %v1441 = vsub.s32 %v1438, %v1440
        %v1442 = vrot.slane %v1435, %v1441
        %v1444 = vunpack.c.l.s4 1966171168
        %v1445 = vunpack.c.0.s8 %v1444
        %v1446 = vlaneseq
        %v1447 = vshrl.u32 %v1446, 7
        %v1448 = vsub.s32 %v1445, %v1447
        %v1449 = vrot.slane %v1373, %v1448
        %v1450 = vcombine.low %v1442, %v1449
        %v1452 = vunpack.c.l.s4 1966171168
        %v1453 = vunpack.c.0.s8 %v1452
        %v1454 = vlaneseq
        %v1455 = vshrl.u32 %v1454, 7
        %v1456 = vsub.s32 %v1453, %v1455
        %v1457 = vrot.slane %v1450, %v1456
        %v1458 = vcombine.low %v1374, %v1375
        %v1460 = vunpack.c.l.s4 1966171168
        %v1461 = vunpack.c.0.s8 %v1460
        %v1462 = vlaneseq
        %v1463 = vshrl.u32 %v1462, 7
        %v1464 = vsub.s32 %v1461, %v1463
        %v1465 = vrot.slane %v1458, %v1464
        %v1467 = vunpack.c.l.s4 1966171168
        %v1468 = vunpack.c.0.s8 %v1467
        %v1469 = vlaneseq
        %v1470 = vshrl.u32 %v1469, 7
        %v1471 = vsub.s32 %v1468, %v1470
        %v1472 = vrot.slane %v1376, %v1471
        %v1473 = vcombine.low %v1465, %v1472
        %v1475 = vunpack.c.l.s4 1966171168
        %v1476 = vunpack.c.0.s8 %v1475
        %v1477 = vlaneseq
        %v1478 = vshrl.u32 %v1477, 7
        %v1479 = vsub.s32 %v1476, %v1478
        %v1480 = vrot.slane %v1473, %v1479
        %v1485 = vsel %vm1316, %v1411, 0.0
        %v1486 = vsel %vm1316, %v1434, 0.0
        %v1487 = vadd.f32 %v1485, %v1486
        %v1488 = vsel %vm1316, %v1457, 0.0
        %v1489 = vadd.f32 %v1487, %v1488
        %v1490 = vsel %vm1316, %v1480, 0.0
        %v1491 = vadd.f32 %v1489, %v1490
        %v1492 = vld [vmem:[%s446] sm:$0xff]
        %v1493 = vld [vmem:[%s446 + $0x8] sm:$0xf]
        %v1495 = vsel %vm509, %v1492, 0
        %v1498 = vsel %vm509, %v1493, 0
        %1500 = vmatprep.subr.mxu0 0.0
        %1501 = vmatpush1.xpose.msra.mxu0 %v982
        %1502 = vmatprep.subr.mxu0 0.0
        %1503 = vmatpush1.xpose.msra.mxu0 0.0
        %1504 = vmatprep.subr.mxu0 0.0
        %1505 = vmatpush1.xpose.msra.mxu0 0.0
        %1506 = vmatprep.subr.mxu0 0.0
        %1507 = vmatpush1.xpose.msra.mxu0 0.0
        %1508 = vmatprep.subr.mxu0 0.0
        %1509 = vmatpush1.xpose.msra.mxu0 0.0
        %1510 = vmatprep.subr.mxu0 0.0
        %1511 = vmatpush1.xpose.msra.mxu0 0.0
        %1512 = vmatprep.subr.mxu0 0.0
        %1513 = vmatpush1.xpose.msra.mxu0 0.0
        %1514 = vmatprep.subr.mxu0 0.0
        %1515 = vmatpush1.xpose.msra.mxu0 0.0
        %1516 = vmatprep.subr.mxu0 0.0
        %1517 = vmatpush1.xpose.msra.mxu0 0.0
        %1518 = vmatprep.subr.mxu0 0.0
        %1519 = vmatpush1.xpose.msra.mxu0 0.0
        %1520 = vmatprep.subr.mxu0 0.0
        %1521 = vmatpush1.xpose.msra.mxu0 0.0
        %1522 = vmatprep.subr.mxu0 0.0
        %1523 = vmatpush1.xpose.msra.mxu0 0.0
        %1524 = vmatprep.subr.mxu0 0.0
        %1525 = vmatpush1.xpose.msra.mxu0 0.0
        %1526 = vmatprep.subr.mxu0 0.0
        %1527 = vmatpush1.xpose.msra.mxu0 0.0
        %1528 = vmatprep.subr.mxu0 0.0
        %1529 = vmatpush1.xpose.msra.mxu0 0.0
        %1530 = vmatprep.subr.mxu0 0.0
        %1531 = vmatpush1.xpose.msra.mxu0 0.0
        %1532 = vmatprep.subr.mxu0 0.0
        %1533 = vmatpush1.xpose.msra.mxu0 0.0
        %1534 = vmatprep.subr.mxu0 0.0
        %1535 = vmatpush1.xpose.msra.mxu0 0.0
        %1536 = vmatprep.subr.mxu0 0.0
        %1537 = vmatpush1.xpose.msra.mxu0 0.0
        %1538 = vmatprep.subr.mxu0 0.0
        %1539 = vmatpush1.xpose.msra.mxu0 0.0
        %1540 = vmatprep.subr.mxu0 0.0
        %1541 = vmatpush1.xpose.msra.mxu0 0.0
        %1542 = vmatprep.subr.mxu0 0.0
        %1543 = vmatpush1.xpose.msra.mxu0 0.0
        %1544 = vmatprep.subr.mxu0 0.0
        %1545 = vmatpush1.xpose.msra.mxu0 0.0
        %1546 = vmatprep.subr.mxu0 0.0
        %1547 = vmatpush1.xpose.msra.mxu0 0.0
        %1548 = vmatprep.subr.mxu0 0.0
        %1549 = vmatpush1.xpose.msra.mxu0 0.0
        %1550 = vmatprep.subr.mxu0 0.0
        %1551 = vmatpush1.xpose.msra.mxu0 0.0
        %1552 = vmatprep.subr.mxu0 0.0
        %1553 = vmatpush1.xpose.msra.mxu0 0.0
        %1554 = vmatprep.subr.mxu0 0.0
        %1555 = vmatpush1.xpose.msra.mxu0 0.0
        %1556 = vmatprep.subr.mxu0 0.0
        %1557 = vmatpush1.xpose.msra.mxu0 0.0
        %1558 = vmatprep.subr.mxu0 0.0
        %1559 = vmatpush1.xpose.msra.mxu0 0.0
        %1560 = vmatprep.subr.mxu0 0.0
        %1561 = vmatpush1.xpose.msra.mxu0 0.0
        %1562 = vmatprep.subr.mxu0 0.0
        %1563 = vmatpush1.xpose.msra.mxu0 0.0
        %1564 = vmatprep.mubr.f32.mxu0 0.0
        %1565 = vmatmul.mubr.f32.gmra.mrb[0].mxu0 %v1495
        %v1566 = vpop.f32.mrb[0].mxu0
        %v1567 = vadd.f32 %v902, %v1566
        %v1568 = vpop.f32.mrb[0].mxu0
        %1569 = vmatprep.mubr.f32.mxu0 0.0
        %1570 = vmatmul.mubr.f32.gmra.mrb[0].mxu0 %v1498
        %v1571 = vpop.f32.mrb[0].mxu0
        %v1572 = vadd.f32 %v902, %v1571
        %v1573 = vpop.f32.mrb[0].mxu0
        %1574 = vdwg.mxu0
        %v1575 = vmul.f32 %v1567, 0.5
        %v1576 = vmul.f32 %v1572, 0.5
        %v1577 = vmul.f32 %v1567, 0.70710677
        %v1578 = vmul.f32 %v1572, 0.70710677
        %v1579 = vand.u32 2147483647, %v1577
        %v1580 = vand.u32 2147483647, %v1578
        %v1581 = vmul.f32 %v1579, 0.5
        %v1582 = vmul.f32 %v1580, 0.5
        %v1583 = vadd.f32 %v1581, 1.0
        %v1584 = vadd.f32 %v1582, 1.0
        %v1585 = vrcp.pop %v1583
        %v1586 = vmul.f32 1.0, %v1585
        %v1587 = vrcp.pop %v1584
        %v1588 = vmul.f32 1.0, %v1587
        %v1589 = vmul.f32 %v1586, 0.17087276
        %v1590 = vmul.f32 %v1588, 0.17087276
        %v1591 = vadd.f32 %v1589, -0.82215226
        %v1592 = vadd.f32 %v1590, -0.82215226
        %v1593 = vmul.f32 %v1586, %v1591
        %v1594 = vmul.f32 %v1588, %v1592
        %v1595 = vadd.f32 %v1593, 1.4885159
        %v1596 = vadd.f32 %v1594, 1.4885159
        %v1597 = vmul.f32 %v1586, %v1595
        %v1598 = vmul.f32 %v1588, %v1596
        %v1599 = vadd.f32 %v1597, -1.135204
        %v1600 = vadd.f32 %v1598, -1.135204
        %v1601 = vmul.f32 %v1586, %v1599
        %v1602 = vmul.f32 %v1588, %v1600
        %v1603 = vadd.f32 %v1601, 0.27886808
        %v1604 = vadd.f32 %v1602, 0.27886808
        %v1605 = vmul.f32 %v1586, %v1603
        %v1606 = vmul.f32 %v1588, %v1604
        %v1607 = vadd.f32 %v1605, -0.18628806
        %v1608 = vadd.f32 %v1606, -0.18628806
        %v1609 = vmul.f32 %v1586, %v1607
        %v1610 = vmul.f32 %v1588, %v1608
        %v1611 = vadd.f32 %v1609, 0.09678418
        %v1612 = vadd.f32 %v1610, 0.09678418
        %v1613 = vmul.f32 %v1586, %v1611
        %v1614 = vmul.f32 %v1588, %v1612
        %v1615 = vadd.f32 %v1613, 0.37409195
        %v1616 = vadd.f32 %v1614, 0.37409195
        %v1617 = vmul.f32 %v1586, %v1615
        %v1618 = vmul.f32 %v1588, %v1616
        %v1619 = vadd.f32 %v1617, 1.0000237
        %v1620 = vadd.f32 %v1618, 1.0000237
        %v1621 = vmul.f32 %v1586, %v1619
        %v1622 = vmul.f32 %v1588, %v1620
        %v1623 = vadd.f32 %v1621, -1.2655122
        %v1624 = vadd.f32 %v1622, -1.2655122
        %v1625 = vsub.f32 0.0, %v1579
        %v1626 = vsub.f32 0.0, %v1580
        %v1627 = vmul.f32 %v1625, %v1579
        %v1628 = vmul.f32 %v1626, %v1580
        %v1629 = vadd.f32 %v1627, %v1623
        %v1630 = vadd.f32 %v1628, %v1624
        %v1631 = vmul.f32 %v1629, 1.442695
        %v1632 = vpow.pop %v1631
        %v1633 = vmul.f32 %v1630, 1.442695
        %v1634 = vpow.pop %v1633
        %v1635 = vmul.f32 %v1586, %v1632
        %v1636 = vmul.f32 %v1588, %v1634
        %vm1637 = vcmp.ge.f32.partialorder %v1577, 0.0
        %vm1638 = vcmp.ge.f32.partialorder %v1578, 0.0
        %v1639 = vsub.f32 1.0, %v1635
        %v1640 = vsub.f32 1.0, %v1636
        %v1641 = vsub.f32 %v1635, 1.0
        %v1642 = vsub.f32 %v1636, 1.0
        %v1643 = vsel %vm1637, %v1639, %v1641
        %v1644 = vsel %vm1638, %v1640, %v1642
        %v1645 = vadd.f32 %v1643, 1.0
        %v1646 = vadd.f32 %v1644, 1.0
        %v1647 = vmul.f32 %v1575, %v1645
        %v1648 = vmul.f32 %v1576, %v1646
        %v1649 = vld [vmem:[%s7] sm:$0x1]
        %vm1650 = vcmask 97280
        %v1652 = vsel %vm1650, %v1649, 0
        %vm1654 = vcmask 1043456
        %v1656 = vsel %vm1654, %v1648, 0
        %1658 = vmatprep.subr.mxu0 0.0
        %1659 = vmatpush1.msra.mxu0 %v1647
        %1660 = vmatprep.subr.mxu0 0.0
        %1661 = vmatpush1.msra.mxu0 %v1656
        %1662 = vmatprep.subr.mxu0 0.0
        %1663 = vmatpush1.msra.mxu0 0.0
        %1664 = vmatprep.subr.mxu0 0.0
        %1665 = vmatpush1.msra.mxu0 0.0
        %1666 = vmatprep.subr.mxu0 0.0
        %1667 = vmatpush1.msra.mxu0 0.0
        %1668 = vmatprep.subr.mxu0 0.0
        %1669 = vmatpush1.msra.mxu0 0.0
        %1670 = vmatprep.subr.mxu0 0.0
        %1671 = vmatpush1.msra.mxu0 0.0
        %1672 = vmatprep.subr.mxu0 0.0
        %1673 = vmatpush1.msra.mxu0 0.0
        %1674 = vmatprep.subr.mxu0 0.0
        %1675 = vmatpush1.msra.mxu0 0.0
        %1676 = vmatprep.subr.mxu0 0.0
        %1677 = vmatpush1.msra.mxu0 0.0
        %1678 = vmatprep.subr.mxu0 0.0
        %1679 = vmatpush1.msra.mxu0 0.0
        %1680 = vmatprep.subr.mxu0 0.0
        %1681 = vmatpush1.msra.mxu0 0.0
        %1682 = vmatprep.subr.mxu0 0.0
        %1683 = vmatpush1.msra.mxu0 0.0
        %1684 = vmatprep.subr.mxu0 0.0
        %1685 = vmatpush1.msra.mxu0 0.0
        %1686 = vmatprep.subr.mxu0 0.0
        %1687 = vmatpush1.msra.mxu0 0.0
        %1688 = vmatprep.subr.mxu0 0.0
        %1689 = vmatpush1.msra.mxu0 0.0
        %1690 = vmatprep.subr.mxu0 0.0
        %1691 = vmatpush1.msra.mxu0 0.0
        %1692 = vmatprep.subr.mxu0 0.0
        %1693 = vmatpush1.msra.mxu0 0.0
        %1694 = vmatprep.subr.mxu0 0.0
        %1695 = vmatpush1.msra.mxu0 0.0
        %1696 = vmatprep.subr.mxu0 0.0
        %1697 = vmatpush1.msra.mxu0 0.0
        %1698 = vmatprep.subr.mxu0 0.0
        %1699 = vmatpush1.msra.mxu0 0.0
        %1700 = vmatprep.subr.mxu0 0.0
        %1701 = vmatpush1.msra.mxu0 0.0
        %1702 = vmatprep.subr.mxu0 0.0
        %1703 = vmatpush1.msra.mxu0 0.0
        %1704 = vmatprep.subr.mxu0 0.0
        %1705 = vmatpush1.msra.mxu0 0.0
        %1706 = vmatprep.subr.mxu0 0.0
        %1707 = vmatpush1.msra.mxu0 0.0
        %1708 = vmatprep.subr.mxu0 0.0
        %1709 = vmatpush1.msra.mxu0 0.0
        %1710 = vmatprep.subr.mxu0 0.0
        %1711 = vmatpush1.msra.mxu0 0.0
        %1712 = vmatprep.subr.mxu0 0.0
        %1713 = vmatpush1.msra.mxu0 0.0
        %1714 = vmatprep.subr.mxu0 0.0
        %1715 = vmatpush1.msra.mxu0 0.0
        %1716 = vmatprep.subr.mxu0 0.0
        %1717 = vmatpush1.msra.mxu0 0.0
        %1718 = vmatprep.subr.mxu0 0.0
        %1719 = vmatpush1.msra.mxu0 0.0
        %1720 = vmatprep.subr.mxu0 0.0
        %1721 = vmatpush1.msra.mxu0 0.0
        %1722 = vmatprep.mubr.f32.mxu0 0.0
        %1723 = vmatmul.mubr.f32.gmra.mrb[0].mxu0 %v1652
        %v1724 = vpop.f32.mrb[0].mxu0
        %v1725 = vadd.f32 0.0, %v1724
        %v1726 = vpop.f32.mrb[0].mxu0
        %1727 = vdwg.mxu0
        %v1728 = vlaneseq
        %v1729 = vshrl.u32 %v1728, 7
        %v1730 = vsub.s32 0, %v1729
        %v1731 = vrot.slane %v1725, %v1730
        %v1732 = vadd.f32 %v1491, %v1731
        %v1733 = vld [vmem:[%s8] sm:$0xff]
        %v1734 = vld [vmem:[%s9] sm:$0x1]
        %v1736 = vlaneseq
        %v1737 = vshrl.u32 %v1736, 7
        %v1738 = vsub.s32 0, %v1737
        %v1739 = vrot.slane %v1734, %v1738
        %v1742 = vsel %vm509, %v1732, 0
        %v1745 = vsel %vm509, %v1733, 0
        %1747 = vmatprep.subr.mxu0 0.0
        %1748 = vmatpush1.xpose.msra.mxu0 %v1745
        %1749 = vmatprep.subr.mxu0 0.0
        %1750 = vmatpush1.xpose.msra.mxu0 0.0
        %1751 = vmatprep.subr.mxu0 0.0
        %1752 = vmatpush1.xpose.msra.mxu0 0.0
        %1753 = vmatprep.subr.mxu0 0.0
        %1754 = vmatpush1.xpose.msra.mxu0 0.0
        %1755 = vmatprep.subr.mxu0 0.0
        %1756 = vmatpush1.xpose.msra.mxu0 0.0
        %1757 = vmatprep.subr.mxu0 0.0
        %1758 = vmatpush1.xpose.msra.mxu0 0.0
        %1759 = vmatprep.subr.mxu0 0.0
        %1760 = vmatpush1.xpose.msra.mxu0 0.0
        %1761 = vmatprep.subr.mxu0 0.0
        %1762 = vmatpush1.xpose.msra.mxu0 0.0
        %1763 = vmatprep.subr.mxu0 0.0
        %1764 = vmatpush1.xpose.msra.mxu0 0.0
        %1765 = vmatprep.subr.mxu0 0.0
        %1766 = vmatpush1.xpose.msra.mxu0 0.0
        %1767 = vmatprep.subr.mxu0 0.0
        %1768 = vmatpush1.xpose.msra.mxu0 0.0
        %1769 = vmatprep.subr.mxu0 0.0
        %1770 = vmatpush1.xpose.msra.mxu0 0.0
        %1771 = vmatprep.subr.mxu0 0.0
        %1772 = vmatpush1.xpose.msra.mxu0 0.0
        %1773 = vmatprep.subr.mxu0 0.0
        %1774 = vmatpush1.xpose.msra.mxu0 0.0
        %1775 = vmatprep.subr.mxu0 0.0
        %1776 = vmatpush1.xpose.msra.mxu0 0.0
        %1777 = vmatprep.subr.mxu0 0.0
        %1778 = vmatpush1.xpose.msra.mxu0 0.0
        %1779 = vmatprep.subr.mxu0 0.0
        %1780 = vmatpush1.xpose.msra.mxu0 0.0
        %1781 = vmatprep.subr.mxu0 0.0
        %1782 = vmatpush1.xpose.msra.mxu0 0.0
        %1783 = vmatprep.subr.mxu0 0.0
        %1784 = vmatpush1.xpose.msra.mxu0 0.0
        %1785 = vmatprep.subr.mxu0 0.0
        %1786 = vmatpush1.xpose.msra.mxu0 0.0
        %1787 = vmatprep.subr.mxu0 0.0
        %1788 = vmatpush1.xpose.msra.mxu0 0.0
        %1789 = vmatprep.subr.mxu0 0.0
        %1790 = vmatpush1.xpose.msra.mxu0 0.0
        %1791 = vmatprep.subr.mxu0 0.0
        %1792 = vmatpush1.xpose.msra.mxu0 0.0
        %1793 = vmatprep.subr.mxu0 0.0
        %1794 = vmatpush1.xpose.msra.mxu0 0.0
        %1795 = vmatprep.subr.mxu0 0.0
        %1796 = vmatpush1.xpose.msra.mxu0 0.0
        %1797 = vmatprep.subr.mxu0 0.0
        %1798 = vmatpush1.xpose.msra.mxu0 0.0
        %1799 = vmatprep.subr.mxu0 0.0
        %1800 = vmatpush1.xpose.msra.mxu0 0.0
        %1801 = vmatprep.subr.mxu0 0.0
        %1802 = vmatpush1.xpose.msra.mxu0 0.0
        %1803 = vmatprep.subr.mxu0 0.0
        %1804 = vmatpush1.xpose.msra.mxu0 0.0
        %1805 = vmatprep.subr.mxu0 0.0
        %1806 = vmatpush1.xpose.msra.mxu0 0.0
        %1807 = vmatprep.subr.mxu0 0.0
        %1808 = vmatpush1.xpose.msra.mxu0 0.0
        %1809 = vmatprep.subr.mxu0 0.0
        %1810 = vmatpush1.xpose.msra.mxu0 0.0
        %1811 = vmatprep.mubr.f32.mxu0 0.0
        %1812 = vmatmul.mubr.f32.gmra.mrb[0].mxu0 %v1742
        %v1813 = vpop.f32.mrb[0].mxu0
        %v1814 = vadd.f32 %v1739, %v1813
        %v1815 = vpop.f32.mrb[0].mxu0
        %1816 = vdwg.mxu0
        %1817 = vst.msk [vmem:[%s457] sm:$0x7] %vm1316, %v1814
      $region68: #{temporal_sfno_forward.6} parent=59 // pred_fallthru
        _
      %p1818 = scmp.lt.s32.totalorder %s25, 1
      %s1819 = scalar_select %p1818, %s25, 1
      %s1820 = smul.addr %s1819, 4
      %s1821 = scalar_lea.vmem %s10, %s1820
      // Predicated region
      $region69: #{temporal_sfno_forward.6} parent=59 // pred_check
        %p1822 = pneg %p291
      $region70: #{temporal_sfno_forward.6} parent=59 // pred_check_branch
        %1824 = sbr.rel (%p1822) target = $region72
      $region71: #{temporal_sfno_forward.6} parent=59 // pred_region
        _
      $region72: #{temporal_sfno_forward.6} parent=59 // pred_fallthru
        _
    $region60: #{temporal_sfno_forward.6} parent=5 // pred_fallthru
      _
    %p1825 = scmp.le.s32.totalorder 2, %s16
    // Predicated region
    $region73: #{temporal_sfno_forward.6} parent=5 // pred_check
      %p1826 = pneg %p1825
    $region74: #{temporal_sfno_forward.6} parent=5 // pred_check_branch
      %1828 = sbr.rel (%p1826) target = $region76
    $region75: #{temporal_sfno_forward.6} parent=5 // pred_region
      %s1829 = ssub.s32 %s16, 2
      // Predicated region
      $region77: #{temporal_sfno_forward.6} parent=75 // pred_check
        %p1830 = pneg %p297
      $region78: #{temporal_sfno_forward.6} parent=75 // pred_check_branch
        %1832 = sbr.rel (%p1830) target = $region80
      $region79: #{temporal_sfno_forward.6} parent=75 // pred_region
        %p1833 = scmp.lt.s32.totalorder %s27, 1
        %s1834 = scalar_select %p1833, %s27, 1
        %s1835 = smul.addr %s1834, 4
        %s1836 = scalar_lea.vmem %s10, %s1835
      $region80: #{temporal_sfno_forward.6} parent=75 // pred_fallthru
        _
    $region76: #{temporal_sfno_forward.6} parent=5 // pred_fallthru
      _
  $region6: #{temporal_sfno_forward.6} parent=0 // loop_footer
    %s20 = sadd.s32 1, %s16
  $region7: #{temporal_sfno_forward.6} parent=0 // loop_footer_branch
    %15 = sbr.rel target = $region3
  $region8: #{temporal_sfno_forward.6} parent=0 // loop_exit
    _

</llo_original>
